<compile_context>
chip_gen: v5e
topology: v5e:2x2
jax: 0.10.0
libtpu: 0.0.40
codegen_flags: <defaults>
</compile_context>

<pallas_src>
import functools

import jax
import jax.numpy as jnp
from jax.experimental import pallas as pl
from jax.experimental.pallas import tpu as pltpu

K_IN = 28 * 28     # 784 flattened input features
K_PAD = 896        # 7 * 128: clean MXU K tiling with minimal padding waste
H = 512            # hidden width (already 128/256 aligned)
N_OUT = 10         # logits
N_PAD = 128        # pad logits to one lane group (lane-dense, unmasked stores)


def _round_up(x, m):
    return ((x + m - 1) // m) * m


def _default_max_block_b():
    """Generation-dependent batch-tile cap (v5e: 256, v6e/v7x: 512)."""
    try:
        kind = jax.devices()[0].device_kind.lower()
    except Exception:
        kind = ""
    return 256 if "v5" in kind else 512


def _choose_tile(batch, max_block_b):
    b16 = _round_up(batch, 16)          # bf16 sublane packing granularity
    tm = min(max_block_b, b16)
    # Guarantee >= 2 grid steps when the batch allows it so the "parallel"
    # batch axis can shard across v7x's two TensorCores (near-neutral on
    # single-TC v5e/v6e).
    if b16 >= 32:
        while _round_up(batch, tm) // tm < 2 and tm > 16:
            tm = _round_up(tm // 2, 16)
    return tm


def mlp_kernel(x_ref, w1_ref, b1_ref, w2_ref, b2_ref, w3_ref, b3_ref, o_ref):
    # bf16 operands into the MXU, f32 accumulate; bias + ReLU in f32 on the VPU.
    x = x_ref[...]                                                   # (TM, K_PAD) bf16
    h1 = jnp.dot(x, w1_ref[...], preferred_element_type=jnp.float32)
    h1 = jnp.maximum(h1 + b1_ref[...], 0.0)                          # (TM, H) f32
    h2 = jnp.dot(h1.astype(jnp.bfloat16), w2_ref[...],
                 preferred_element_type=jnp.float32)
    h2 = jnp.maximum(h2 + b2_ref[...], 0.0)                          # (TM, H) f32
    logits = jnp.dot(h2.astype(jnp.bfloat16), w3_ref[...],
                     preferred_element_type=jnp.float32)
    o_ref[...] = (logits + b3_ref[...]).astype(o_ref.dtype)          # (TM, N_PAD) f32


def prepare_params(params):
    """f32 (in, out) params -> padded bf16 weights + f32 biases for the kernel."""
    w1, b1, w2, b2, w3, b3 = params
    w1p = jnp.zeros((K_PAD, H), jnp.float32).at[:K_IN, :].set(w1).astype(jnp.bfloat16)
    w2p = w2.astype(jnp.bfloat16)
    w3p = jnp.zeros((H, N_PAD), jnp.float32).at[:, :N_OUT].set(w3).astype(jnp.bfloat16)
    b3p = jnp.zeros((1, N_PAD), jnp.float32).at[:, :N_OUT].set(b3)
    return (w1p, b1.astype(jnp.float32), w2p, b2.astype(jnp.float32), w3p, b3p)


def neural_network_forward(x_nchw, params, *, max_block_b=None,
                           single_buffer_weights=True):
    """x_nchw: (B, 1, 28, 28) float32 -> logits (B, 10) float32."""
    if max_block_b is None:
        max_block_b = _default_max_block_b()
    w1p, b1, w2p, b2, w3p, b3p = prepare_params(params)

    B = x_nchw.shape[0]
    tm = _choose_tile(B, max_block_b)
    B_pad = _round_up(B, tm)
    grid = (B_pad // tm,)

    # nn.Flatten + bf16 cast + pad fused in one expression (single HBM pass
    # over x when this wrapper is jitted).
    x_p = (jnp.zeros((B_pad, K_PAD), jnp.bfloat16)
           .at[:B, :K_IN].set(x_nchw.reshape(B, K_IN).astype(jnp.bfloat16)))

    flops = 2 * B_pad * (K_PAD * H + H * H + H * N_PAD)
    bytes_accessed = (x_p.size * 2 + w1p.size * 2 + w2p.size * 2 + w3p.size * 2
                      + b1.size * 4 + b2.size * 4 + b3p.size * 4
                      + B_pad * N_PAD * 4)
    cost = pl.CostEstimate(flops=flops, transcendentals=0,
                           bytes_accessed=bytes_accessed)

    if single_buffer_weights:
        # Weights/biases never change across the batch grid: keep them VMEM
        # resident with a single buffer instead of the default double-buffer.
        resident = functools.partial(pl.BlockSpec, pipeline_mode=pl.Buffered(1))
    else:
        resident = pl.BlockSpec

    out = pl.pallas_call(
        mlp_kernel,
        out_shape=jax.ShapeDtypeStruct((B_pad, N_PAD), jnp.float32),
        grid=grid,
        in_specs=[
            pl.BlockSpec((tm, K_PAD), lambda i: (i, 0)),   # x: tiled over batch
            resident((K_PAD, H), lambda i: (0, 0)),        # w1: VMEM-resident
            resident((1, H), lambda i: (0, 0)),            # b1
            resident((H, H), lambda i: (0, 0)),            # w2
            resident((1, H), lambda i: (0, 0)),            # b2
            resident((H, N_PAD), lambda i: (0, 0)),        # w3 (padded to 128 out)
            resident((1, N_PAD), lambda i: (0, 0)),        # b3 (padded)
        ],
        out_specs=pl.BlockSpec((tm, N_PAD), lambda i: (i, 0)),
        compiler_params=pltpu.CompilerParams(
            dimension_semantics=("parallel",),
            vmem_limit_bytes=32 << 20,
        ),
        cost_estimate=cost,
    )(x_p, w1p, b1, w2p, b2, w3p, b3p)

    return out[:B, :N_OUT]


def init_params(key):
    """Deterministic init mimicking torch.nn.Linear default (uniform +/- 1/sqrt(fan_in))."""
    def linear(key, fan_in, fan_out):
        kw, kb = jax.random.split(key)
        bound = 1.0 / jnp.sqrt(fan_in)
        # Stored as (in, out) so the kernel computes x @ W directly.
        w = jax.random.uniform(kw, (fan_in, fan_out), jnp.float32, -bound, bound)
        b = jax.random.uniform(kb, (1, fan_out), jnp.float32, -bound, bound)
        return w, b

    k1, k2, k3 = jax.random.split(key, 3)
    w1, b1 = linear(k1, K_IN, H)
    w2, b2 = linear(k2, H, H)
    w3, b3 = linear(k3, H, N_OUT)
    return (w1, b1, w2, b2, w3, b3)


def reference_forward(x_nchw, params):
    """Precision-matched reference: bf16 matmul inputs, f32 accumulate/bias/ReLU."""
    w1, b1, w2, b2, w3, b3 = params
    x = x_nchw.reshape(x_nchw.shape[0], -1).astype(jnp.bfloat16)
    w1b, w2b, w3b = (w.astype(jnp.bfloat16) for w in (w1, w2, w3))
    h1 = jnp.maximum(jnp.dot(x, w1b, preferred_element_type=jnp.float32) + b1, 0.0)
    h2 = jnp.maximum(jnp.dot(h1.astype(jnp.bfloat16), w2b,
                             preferred_element_type=jnp.float32) + b2, 0.0)
    return jnp.dot(h2.astype(jnp.bfloat16), w3b,
                   preferred_element_type=jnp.float32) + b3


if __name__ == "__main__":
    key = jax.random.PRNGKey(0)
    k_x, k_p = jax.random.split(key)

    B = 2
    x = jax.random.normal(k_x, (B, 1, 28, 28), jnp.float32)  # NCHW like PyTorch
    params = init_params(k_p)

    try:
        fwd = jax.jit(lambda xx: neural_network_forward(xx, params))
        logits = jax.block_until_ready(fwd(x))
    except Exception:
        # Fallback if this JAX build rejects single-buffered resident operands.
        fwd = jax.jit(lambda xx: neural_network_forward(
            xx, params, single_buffer_weights=False))
        logits = jax.block_until_ready(fwd(x))

    ref = reference_forward(x, params)
    assert logits.shape == (B, 10)
    assert jnp.allclose(logits, ref, atol=1e-2, rtol=1e-2), "mismatch vs reference"
    print("KERNEL_OK")
</pallas_src>

<mosaic_0001>
module attributes {stable_mosaic.version = 11 : i64} {
  func.func @mlp_kernel(%arg0: i32, %arg1: memref<16x896xbf16, #tpu.memory_space<vmem>>, %arg2: memref<896x512xbf16, #tpu.memory_space<vmem>>, %arg3: memref<1x512xf32, #tpu.memory_space<vmem>>, %arg4: memref<512x512xbf16, #tpu.memory_space<vmem>>, %arg5: memref<1x512xf32, #tpu.memory_space<vmem>>, %arg6: memref<512x128xbf16, #tpu.memory_space<vmem>>, %arg7: memref<1x128xf32, #tpu.memory_space<vmem>>, %arg8: memref<16x128xf32, #tpu.memory_space<vmem>>) attributes {dimension_semantics = [#tpu.dimension_semantics<parallel>], iteration_bounds = array<i64: 1>, scalar_prefetch = 0 : i64, scratch_operands = 0 : i64, tpu.core_type = #tpu.core_type<tc>, window_params = [{transform_indices = @transform_0, window_bounds = array<i64: 16, 896>}, {pipeline_mode = #tpu.pipeline_mode<synchronous>, transform_indices = @transform_1, window_bounds = array<i64: 896, 512>}, {pipeline_mode = #tpu.pipeline_mode<synchronous>, transform_indices = @transform_2, window_bounds = array<i64: 1, 512>}, {pipeline_mode = #tpu.pipeline_mode<synchronous>, transform_indices = @transform_3, window_bounds = array<i64: 512, 512>}, {pipeline_mode = #tpu.pipeline_mode<synchronous>, transform_indices = @transform_4, window_bounds = array<i64: 1, 512>}, {pipeline_mode = #tpu.pipeline_mode<synchronous>, transform_indices = @transform_5, window_bounds = array<i64: 512, 128>}, {pipeline_mode = #tpu.pipeline_mode<synchronous>, transform_indices = @transform_6, window_bounds = array<i64: 1, 128>}, {transform_indices = @transform_7, window_bounds = array<i64: 16, 128>}]} {
    %c0 = arith.constant 0 : index
    %c0_0 = arith.constant 0 : index
    %0 = vector.load %arg1[%c0, %c0_0] : memref<16x896xbf16, #tpu.memory_space<vmem>>, vector<16x896xbf16>
    %c0_1 = arith.constant 0 : index
    %c0_2 = arith.constant 0 : index
    %1 = vector.load %arg2[%c0_1, %c0_2] : memref<896x512xbf16, #tpu.memory_space<vmem>>, vector<896x512xbf16>
    %cst = arith.constant dense<0.000000e+00> : vector<16x512xf32>
    %2 = tpu.matmul %0, %1, %cst {dimension_numbers = #tpu.dot_dimension_numbers<[1], [0], [0], [1], [0, 0, 1, 1], [], []>} : vector<16x896xbf16>, vector<896x512xbf16>, vector<16x512xf32> -> vector<16x512xf32>
    %c0_3 = arith.constant 0 : index
    %c0_4 = arith.constant 0 : index
    %3 = vector.load %arg3[%c0_3, %c0_4] : memref<1x512xf32, #tpu.memory_space<vmem>>, vector<1x512xf32>
    %4 = vector.broadcast %3 : vector<1x512xf32> to vector<16x512xf32>
    %5 = arith.addf %2, %4 : vector<16x512xf32>
    %cst_5 = arith.constant 0.000000e+00 : f32
    %6 = vector.broadcast %cst_5 : f32 to vector<16x512xf32>
    %7 = arith.maximumf %5, %6 : vector<16x512xf32>
    %8 = arith.truncf %7 : vector<16x512xf32> to vector<16x512xbf16>
    %c0_6 = arith.constant 0 : index
    %c0_7 = arith.constant 0 : index
    %9 = vector.load %arg4[%c0_6, %c0_7] : memref<512x512xbf16, #tpu.memory_space<vmem>>, vector<512x512xbf16>
    %cst_8 = arith.constant dense<0.000000e+00> : vector<16x512xf32>
    %10 = tpu.matmul %8, %9, %cst_8 {dimension_numbers = #tpu.dot_dimension_numbers<[1], [0], [0], [1], [0, 0, 1, 1], [], []>} : vector<16x512xbf16>, vector<512x512xbf16>, vector<16x512xf32> -> vector<16x512xf32>
    %c0_9 = arith.constant 0 : index
    %c0_10 = arith.constant 0 : index
    %11 = vector.load %arg5[%c0_9, %c0_10] : memref<1x512xf32, #tpu.memory_space<vmem>>, vector<1x512xf32>
    %12 = vector.broadcast %11 : vector<1x512xf32> to vector<16x512xf32>
    %13 = arith.addf %10, %12 : vector<16x512xf32>
    %cst_11 = arith.constant 0.000000e+00 : f32
    %14 = vector.broadcast %cst_11 : f32 to vector<16x512xf32>
    %15 = arith.maximumf %13, %14 : vector<16x512xf32>
    %16 = arith.truncf %15 : vector<16x512xf32> to vector<16x512xbf16>
    %c0_12 = arith.constant 0 : index
    %c0_13 = arith.constant 0 : index
    %17 = vector.load %arg6[%c0_12, %c0_13] : memref<512x128xbf16, #tpu.memory_space<vmem>>, vector<512x128xbf16>
    %cst_14 = arith.constant dense<0.000000e+00> : vector<16x128xf32>
    %18 = tpu.matmul %16, %17, %cst_14 {dimension_numbers = #tpu.dot_dimension_numbers<[1], [0], [0], [1], [0, 0, 1, 1], [], []>} : vector<16x512xbf16>, vector<512x128xbf16>, vector<16x128xf32> -> vector<16x128xf32>
    %c0_15 = arith.constant 0 : index
    %c0_16 = arith.constant 0 : index
    %19 = vector.load %arg7[%c0_15, %c0_16] : memref<1x128xf32, #tpu.memory_space<vmem>>, vector<1x128xf32>
    %20 = vector.broadcast %19 : vector<1x128xf32> to vector<16x128xf32>
    %21 = arith.addf %18, %20 : vector<16x128xf32>
    %c0_17 = arith.constant 0 : index
    %c0_18 = arith.constant 0 : index
    %22 = vector.load %arg8[%c0_17, %c0_18] : memref<16x128xf32, #tpu.memory_space<vmem>>, vector<16x128xf32>
    tpu.vector_store %arg8[%c0_17, %c0_18], %21 {strides = array<i32>} : memref<16x128xf32, #tpu.memory_space<vmem>>, vector<16x128xf32>,
    return
  }
  func.func @transform_0(%arg0: i32) -> (i32, i32) {
    %c0_i32 = arith.constant 0 : i32
    %c0_i32_0 = arith.constant 0 : i32
    return %arg0, %c0_i32 : i32, i32
  }
  func.func @transform_1(%arg0: i32) -> (i32, i32) {
    %c0_i32 = arith.constant 0 : i32
    %c0_i32_0 = arith.constant 0 : i32
    %c0_i32_1 = arith.constant 0 : i32
    return %c0_i32, %c0_i32_0 : i32, i32
  }
  func.func @transform_2(%arg0: i32) -> (i32, i32) {
    %c0_i32 = arith.constant 0 : i32
    %c0_i32_0 = arith.constant 0 : i32
    %c0_i32_1 = arith.constant 0 : i32
    return %c0_i32, %c0_i32_0 : i32, i32
  }
  func.func @transform_3(%arg0: i32) -> (i32, i32) {
    %c0_i32 = arith.constant 0 : i32
    %c0_i32_0 = arith.constant 0 : i32
    %c0_i32_1 = arith.constant 0 : i32
    return %c0_i32, %c0_i32_0 : i32, i32
  }
  func.func @transform_4(%arg0: i32) -> (i32, i32) {
    %c0_i32 = arith.constant 0 : i32
    %c0_i32_0 = arith.constant 0 : i32
    %c0_i32_1 = arith.constant 0 : i32
    return %c0_i32, %c0_i32_0 : i32, i32
  }
  func.func @transform_5(%arg0: i32) -> (i32, i32) {
    %c0_i32 = arith.constant 0 : i32
    %c0_i32_0 = arith.constant 0 : i32
    %c0_i32_1 = arith.constant 0 : i32
    return %c0_i32, %c0_i32_0 : i32, i32
  }
  func.func @transform_6(%arg0: i32) -> (i32, i32) {
    %c0_i32 = arith.constant 0 : i32
    %c0_i32_0 = arith.constant 0 : i32
    %c0_i32_1 = arith.constant 0 : i32
    return %c0_i32, %c0_i32_0 : i32, i32
  }
  func.func @transform_7(%arg0: i32) -> (i32, i32) {
    %c0_i32 = arith.constant 0 : i32
    %c0_i32_0 = arith.constant 0 : i32
    return %arg0, %c0_i32 : i32, i32
  }
}

module attributes {stable_mosaic.version = 11 : i64} {
  func.func @mlp_kernel(%arg0: i32, %arg1: memref<16x896xbf16, #tpu.memory_space<vmem>>, %arg2: memref<896x512xbf16, #tpu.memory_space<vmem>>, %arg3: memref<1x512xf32, #tpu.memory_space<vmem>>, %arg4: memref<512x512xbf16, #tpu.memory_space<vmem>>, %arg5: memref<1x512xf32, #tpu.memory_space<vmem>>, %arg6: memref<512x128xbf16, #tpu.memory_space<vmem>>, %arg7: memref<1x128xf32, #tpu.memory_space<vmem>>, %arg8: memref<16x128xf32, #tpu.memory_space<vmem>>) attributes {dimension_semantics = [#tpu.dimension_semantics<parallel>], iteration_bounds = array<i64: 1>, scalar_prefetch = 0 : i64, scratch_operands = 0 : i64, tpu.core_type = #tpu.core_type<tc>, window_params = [{transform_indices = @transform_0, window_bounds = array<i64: 16, 896>}, {pipeline_mode = #tpu.pipeline_mode<synchronous>, transform_indices = @transform_1, window_bounds = array<i64: 896, 512>}, {pipeline_mode = #tpu.pipeline_mode<synchronous>, transform_indices = @transform_2, window_bounds = array<i64: 1, 512>}, {pipeline_mode = #tpu.pipeline_mode<synchronous>, transform_indices = @transform_3, window_bounds = array<i64: 512, 512>}, {pipeline_mode = #tpu.pipeline_mode<synchronous>, transform_indices = @transform_4, window_bounds = array<i64: 1, 512>}, {pipeline_mode = #tpu.pipeline_mode<synchronous>, transform_indices = @transform_5, window_bounds = array<i64: 512, 128>}, {pipeline_mode = #tpu.pipeline_mode<synchronous>, transform_indices = @transform_6, window_bounds = array<i64: 1, 128>}, {transform_indices = @transform_7, window_bounds = array<i64: 16, 128>}]} {
    %c0 = arith.constant 0 : index
    %c0_0 = arith.constant 0 : index
    %0 = vector.load %arg1[%c0, %c0_0] : memref<16x896xbf16, #tpu.memory_space<vmem>>, vector<16x896xbf16>
    %c0_1 = arith.constant 0 : index
    %c0_2 = arith.constant 0 : index
    %1 = vector.load %arg2[%c0_1, %c0_2] : memref<896x512xbf16, #tpu.memory_space<vmem>>, vector<896x512xbf16>
    %cst = arith.constant dense<0.000000e+00> : vector<16x512xf32>
    %2 = tpu.matmul %0, %1, %cst {dimension_numbers = #tpu.dot_dimension_numbers<[1], [0], [0], [1], [0, 0, 1, 1], [], []>} : vector<16x896xbf16>, vector<896x512xbf16>, vector<16x512xf32> -> vector<16x512xf32>
    %c0_3 = arith.constant 0 : index
    %c0_4 = arith.constant 0 : index
    %3 = vector.load %arg3[%c0_3, %c0_4] : memref<1x512xf32, #tpu.memory_space<vmem>>, vector<1x512xf32>
    %4 = vector.broadcast %3 : vector<1x512xf32> to vector<16x512xf32>
    %5 = arith.addf %2, %4 : vector<16x512xf32>
    %cst_5 = arith.constant 0.000000e+00 : f32
    %6 = vector.broadcast %cst_5 : f32 to vector<16x512xf32>
    %7 = arith.maximumf %5, %6 : vector<16x512xf32>
    %8 = arith.truncf %7 : vector<16x512xf32> to vector<16x512xbf16>
    %c0_6 = arith.constant 0 : index
    %c0_7 = arith.constant 0 : index
    %9 = vector.load %arg4[%c0_6, %c0_7] : memref<512x512xbf16, #tpu.memory_space<vmem>>, vector<512x512xbf16>
    %cst_8 = arith.constant dense<0.000000e+00> : vector<16x512xf32>
    %10 = tpu.matmul %8, %9, %cst_8 {dimension_numbers = #tpu.dot_dimension_numbers<[1], [0], [0], [1], [0, 0, 1, 1], [], []>} : vector<16x512xbf16>, vector<512x512xbf16>, vector<16x512xf32> -> vector<16x512xf32>
    %c0_9 = arith.constant 0 : index
    %c0_10 = arith.constant 0 : index
    %11 = vector.load %arg5[%c0_9, %c0_10] : memref<1x512xf32, #tpu.memory_space<vmem>>, vector<1x512xf32>
    %12 = vector.broadcast %11 : vector<1x512xf32> to vector<16x512xf32>
    %13 = arith.addf %10, %12 : vector<16x512xf32>
    %cst_11 = arith.constant 0.000000e+00 : f32
    %14 = vector.broadcast %cst_11 : f32 to vector<16x512xf32>
    %15 = arith.maximumf %13, %14 : vector<16x512xf32>
    %16 = arith.truncf %15 : vector<16x512xf32> to vector<16x512xbf16>
    %c0_12 = arith.constant 0 : index
    %c0_13 = arith.constant 0 : index
    %17 = vector.load %arg6[%c0_12, %c0_13] : memref<512x128xbf16, #tpu.memory_space<vmem>>, vector<512x128xbf16>
    %cst_14 = arith.constant dense<0.000000e+00> : vector<16x128xf32>
    %18 = tpu.matmul %16, %17, %cst_14 {dimension_numbers = #tpu.dot_dimension_numbers<[1], [0], [0], [1], [0, 0, 1, 1], [], []>} : vector<16x512xbf16>, vector<512x128xbf16>, vector<16x128xf32> -> vector<16x128xf32>
    %c0_15 = arith.constant 0 : index
    %c0_16 = arith.constant 0 : index
    %19 = vector.load %arg7[%c0_15, %c0_16] : memref<1x128xf32, #tpu.memory_space<vmem>>, vector<1x128xf32>
    %20 = vector.broadcast %19 : vector<1x128xf32> to vector<16x128xf32>
    %21 = arith.addf %18, %20 : vector<16x128xf32>
    %c0_17 = arith.constant 0 : index
    %c0_18 = arith.constant 0 : index
    %22 = vector.load %arg8[%c0_17, %c0_18] : memref<16x128xf32, #tpu.memory_space<vmem>>, vector<16x128xf32>
    tpu.vector_store %arg8[%c0_17, %c0_18], %21 {strides = array<i32>} : memref<16x128xf32, #tpu.memory_space<vmem>>, vector<16x128xf32>,
    return
  }
  func.func @transform_0(%arg0: i32) -> (i32, i32) {
    %c0_i32 = arith.constant 0 : i32
    %c0_i32_0 = arith.constant 0 : i32
    return %arg0, %c0_i32 : i32, i32
  }
  func.func @transform_1(%arg0: i32) -> (i32, i32) {
    %c0_i32 = arith.constant 0 : i32
    %c0_i32_0 = arith.constant 0 : i32
    %c0_i32_1 = arith.constant 0 : i32
    return %c0_i32, %c0_i32_0 : i32, i32
  }
  func.func @transform_2(%arg0: i32) -> (i32, i32) {
    %c0_i32 = arith.constant 0 : i32
    %c0_i32_0 = arith.constant 0 : i32
    %c0_i32_1 = arith.constant 0 : i32
    return %c0_i32, %c0_i32_0 : i32, i32
  }
  func.func @transform_3(%arg0: i32) -> (i32, i32) {
    %c0_i32 = arith.constant 0 : i32
    %c0_i32_0 = arith.constant 0 : i32
    %c0_i32_1 = arith.constant 0 : i32
    return %c0_i32, %c0_i32_0 : i32, i32
  }
  func.func @transform_4(%arg0: i32) -> (i32, i32) {
    %c0_i32 = arith.constant 0 : i32
    %c0_i32_0 = arith.constant 0 : i32
    %c0_i32_1 = arith.constant 0 : i32
    return %c0_i32, %c0_i32_0 : i32, i32
  }
  func.func @transform_5(%arg0: i32) -> (i32, i32) {
    %c0_i32 = arith.constant 0 : i32
    %c0_i32_0 = arith.constant 0 : i32
    %c0_i32_1 = arith.constant 0 : i32
    return %c0_i32, %c0_i32_0 : i32, i32
  }
  func.func @transform_6(%arg0: i32) -> (i32, i32) {
    %c0_i32 = arith.constant 0 : i32
    %c0_i32_0 = arith.constant 0 : i32
    %c0_i32_1 = arith.constant 0 : i32
    return %c0_i32, %c0_i32_0 : i32, i32
  }
  func.func @transform_7(%arg0: i32) -> (i32, i32) {
    %c0_i32 = arith.constant 0 : i32
    %c0_i32_0 = arith.constant 0 : i32
    return %arg0, %c0_i32 : i32, i32
  }
}

</mosaic_0001>

<llo_original>
// kernel: _lambda_.1
$region0: #{_lambda_.1}
  #allocation0 [shape = 'u32[]', space=smem, size = 0x4, offset = 0x4, fixed_abs, tag = 'smem constant byte address 0x4 - core index']
  #allocation1 [shape = 'u32[72,128]{1,0:T(1,128)}', space=vmem, size = 0x9000, scoped, tag = 'internal scratch']
  %s0 = inlined_call_operand.vmem [shape: bf16[16,896], index: 0, kind: input, shape index: {}]
  %s1 = inlined_call_operand.hbm [shape: bf16[896,512], index: 1, kind: input, shape index: {}]
  %s2 = inlined_call_operand.vmem [shape: f32[1,512], index: 2, kind: input, shape index: {}]
  %s3 = inlined_call_operand.vmem [shape: bf16[512,512], index: 3, kind: input, shape index: {}]
  %s4 = inlined_call_operand.vmem [shape: f32[1,512], index: 4, kind: input, shape index: {}]
  %s5 = inlined_call_operand.vmem [shape: bf16[512,128], index: 5, kind: input, shape index: {}]
  %s6 = inlined_call_operand.vmem [shape: f32[1,128], index: 6, kind: input, shape index: {}]
  %s7 = inlined_call_operand.vmem [shape: f32[16,128], index: 7, kind: output, shape index: {}]
  %s8 = sld [smem:[#allocation0]]
  $region42: #{_lambda_.1} parent=0
    _
  %s10 = ssub.s32 1, %s8
  %s11 = scalar_select 0, %s10, %s8
  $region1: #{_lambda_.1} parent=0
    #allocation2 [shape = 'u8[917504]{0}', space=vmem, size = 0xe0000, scoped, tag = 'input window, operand 1, single buffered']
    #allocation3 [shape = 's32[1]{0}', space=sflag, size = 0x4, scoped, tag = 'scoped memory for _lambda_.1']
    %12 = vsyncpa [#allocation3], 0
    // Predicated region
    $region2: #{_lambda_.1} parent=1 // pred_check
      _
    $region3: #{_lambda_.1} parent=1 // pred_check_branch
      %14 = sbr.rel (0) target = $region5
    $region4: #{_lambda_.1} parent=1 // pred_region
      _
    $region5: #{_lambda_.1} parent=1 // pred_fallthru
      _
    // Predicated region
    $region6: #{_lambda_.1} parent=1 // pred_check
      _
    $region7: #{_lambda_.1} parent=1 // pred_check_branch
      %16 = sbr.rel (0) target = $region9
    $region8: #{_lambda_.1} parent=1 // pred_region
      %18 = vsyncadd [#allocation3], 0
      %s19 = sshll.u32 %s1, 4
      %s20 = int_to_ptr.hbm [resolvable:$true] %s19
      %s21 = sshll.u32 [#allocation2], 4
      %s22 = int_to_ptr.vmem [resolvable:$true] %s21
      %27 = dma.hbm_to_vmem [thread:$0]  %s20, 28672, %s22, [#allocation3], 256, 256, 16
    $region9: #{_lambda_.1} parent=1 // pred_fallthru
      _
    // Predicated region
    $region10: #{_lambda_.1} parent=1 // pred_check
      _
    $region11: #{_lambda_.1} parent=1 // pred_check_branch
      %29 = sbr.rel (0) target = $region13
    $region12: #{_lambda_.1} parent=1 // pred_region
      _
    $region13: #{_lambda_.1} parent=1 // pred_fallthru
      _
    // Predicated region
    $region14: #{_lambda_.1} parent=1 // pred_check
      _
    $region15: #{_lambda_.1} parent=1 // pred_check_branch
      %31 = sbr.rel (0) target = $region17
    $region16: #{_lambda_.1} parent=1 // pred_region
      _
    $region17: #{_lambda_.1} parent=1 // pred_fallthru
      _
    // Predicated region
    $region18: #{_lambda_.1} parent=1 // pred_check
      _
    $region19: #{_lambda_.1} parent=1 // pred_check_branch
      %33 = sbr.rel (0) target = $region21
    $region20: #{_lambda_.1} parent=1 // pred_region
      _
    $region21: #{_lambda_.1} parent=1 // pred_fallthru
      _
    // Predicated region
    $region22: #{_lambda_.1} parent=1 // pred_check
      _
    $region23: #{_lambda_.1} parent=1 // pred_check_branch
      %35 = sbr.rel (0) target = $region25
    $region24: #{_lambda_.1} parent=1 // pred_region
      _
    $region25: #{_lambda_.1} parent=1 // pred_fallthru
      _
    // Predicated region
    $region26: #{_lambda_.1} parent=1 // pred_check
      _
    $region27: #{_lambda_.1} parent=1 // pred_check_branch
      %37 = sbr.rel (0) target = $region29
    $region28: #{_lambda_.1} parent=1 // pred_region
      _
    $region29: #{_lambda_.1} parent=1 // pred_fallthru
      _
    // Predicated region
    $region30: #{_lambda_.1} parent=1 // pred_check
      _
    $region31: #{_lambda_.1} parent=1 // pred_check_branch
      %39 = sbr.rel (0) target = $region33
    $region32: #{_lambda_.1} parent=1 // pred_region
      %41 = dma.done [#allocation3], 28672
    $region33: #{_lambda_.1} parent=1 // pred_fallthru
      _
    %v42 = vld [vmem:[%s0] sm:$0xff]
    %v43 = vld [vmem:[%s0 + $0x8] sm:$0xff]
    %v44 = vld [vmem:[%s0 + $0x10] sm:$0xff]
    %v45 = vld [vmem:[%s0 + $0x18] sm:$0xf]
    %v46 = vld [vmem:[%s0 + $0x1c] sm:$0xff]
    %v47 = vld [vmem:[%s0 + $0x24] sm:$0xff]
    %v48 = vld [vmem:[%s0 + $0x2c] sm:$0xff]
    %v49 = vld [vmem:[%s0 + $0x34] sm:$0xf]
    %v50 = vld [vmem:[#allocation2] sm:$0xff]
    %v51 = vld [vmem:[#allocation2 + $0x8] sm:$0xff]
    %v52 = vld [vmem:[#allocation2 + $0x10] sm:$0xff]
    %v53 = vld [vmem:[#allocation2 + $0x18] sm:$0xff]
    %v54 = vld [vmem:[#allocation2 + $0x20] sm:$0xff]
    %v55 = vld [vmem:[#allocation2 + $0x28] sm:$0xff]
    %v56 = vld [vmem:[#allocation2 + $0x30] sm:$0xff]
    %v57 = vld [vmem:[#allocation2 + $0x38] sm:$0xff]
    %v58 = vld [vmem:[#allocation2 + $0x40] sm:$0xff]
    %v59 = vld [vmem:[#allocation2 + $0x48] sm:$0xff]
    %v60 = vld [vmem:[#allocation2 + $0x50] sm:$0xff]
    %v61 = vld [vmem:[#allocation2 + $0x58] sm:$0xff]
    %v62 = vld [vmem:[#allocation2 + $0x60] sm:$0xff]
    %v63 = vld [vmem:[#allocation2 + $0x68] sm:$0xff]
    %v64 = vld [vmem:[#allocation2 + $0x70] sm:$0xff]
    %v65 = vld [vmem:[#allocation2 + $0x78] sm:$0xff]
    %v66 = vld [vmem:[#allocation2 + $0x80] sm:$0xff]
    %v67 = vld [vmem:[#allocation2 + $0x88] sm:$0xff]
    %v68 = vld [vmem:[#allocation2 + $0x90] sm:$0xff]
    %v69 = vld [vmem:[#allocation2 + $0x98] sm:$0xff]
    %v70 = vld [vmem:[#allocation2 + $0xa0] sm:$0xff]
    %v71 = vld [vmem:[#allocation2 + $0xa8] sm:$0xff]
    %v72 = vld [vmem:[#allocation2 + $0xb0] sm:$0xff]
    %v73 = vld [vmem:[#allocation2 + $0xb8] sm:$0xff]
    %v74 = vld [vmem:[#allocation2 + $0xc0] sm:$0xff]
    %v75 = vld [vmem:[#allocation2 + $0xc8] sm:$0xff]
    %v76 = vld [vmem:[#allocation2 + $0xd0] sm:$0xff]
    %v77 = vld [vmem:[#allocation2 + $0xd8] sm:$0xff]
    %v78 = vld [vmem:[#allocation2 + $0xe0] sm:$0xff]
    %v79 = vld [vmem:[#allocation2 + $0xe8] sm:$0xff]
    %v80 = vld [vmem:[#allocation2 + $0xf0] sm:$0xff]
    %v81 = vld [vmem:[#allocation2 + $0xf8] sm:$0xff]
    %v82 = vld [vmem:[#allocation2 + $0x100] sm:$0xff]
    %v83 = vld [vmem:[#allocation2 + $0x108] sm:$0xff]
    %v84 = vld [vmem:[#allocation2 + $0x110] sm:$0xff]
    %v85 = vld [vmem:[#allocation2 + $0x118] sm:$0xff]
    %v86 = vld [vmem:[#allocation2 + $0x120] sm:$0xff]
    %v87 = vld [vmem:[#allocation2 + $0x128] sm:$0xff]
    %v88 = vld [vmem:[#allocation2 + $0x130] sm:$0xff]
    %v89 = vld [vmem:[#allocation2 + $0x138] sm:$0xff]
    %v90 = vld [vmem:[#allocation2 + $0x140] sm:$0xff]
    %v91 = vld [vmem:[#allocation2 + $0x148] sm:$0xff]
    %v92 = vld [vmem:[#allocation2 + $0x150] sm:$0xff]
    %v93 = vld [vmem:[#allocation2 + $0x158] sm:$0xff]
    %v94 = vld [vmem:[#allocation2 + $0x160] sm:$0xff]
    %v95 = vld [vmem:[#allocation2 + $0x168] sm:$0xff]
    %v96 = vld [vmem:[#allocation2 + $0x170] sm:$0xff]
    %v97 = vld [vmem:[#allocation2 + $0x178] sm:$0xff]
    %v98 = vld [vmem:[#allocation2 + $0x180] sm:$0xff]
    %v99 = vld [vmem:[#allocation2 + $0x188] sm:$0xff]
    %v100 = vld [vmem:[#allocation2 + $0x190] sm:$0xff]
    %v101 = vld [vmem:[#allocation2 + $0x198] sm:$0xff]
    %v102 = vld [vmem:[#allocation2 + $0x1a0] sm:$0xff]
    %v103 = vld [vmem:[#allocation2 + $0x1a8] sm:$0xff]
    %v104 = vld [vmem:[#allocation2 + $0x1b0] sm:$0xff]
    %v105 = vld [vmem:[#allocation2 + $0x1b8] sm:$0xff]
    %v106 = vld [vmem:[#allocation2 + $0x1c0] sm:$0xff]
    %v107 = vld [vmem:[#allocation2 + $0x1c8] sm:$0xff]
    %v108 = vld [vmem:[#allocation2 + $0x1d0] sm:$0xff]
    %v109 = vld [vmem:[#allocation2 + $0x1d8] sm:$0xff]
    %v110 = vld [vmem:[#allocation2 + $0x1e0] sm:$0xff]
    %v111 = vld [vmem:[#allocation2 + $0x1e8] sm:$0xff]
    %v112 = vld [vmem:[#allocation2 + $0x1f0] sm:$0xff]
    %v113 = vld [vmem:[#allocation2 + $0x1f8] sm:$0xff]
    %v114 = vld [vmem:[#allocation2 + $0x200] sm:$0xff]
    %v115 = vld [vmem:[#allocation2 + $0x208] sm:$0xff]
    %v116 = vld [vmem:[#allocation2 + $0x210] sm:$0xff]
    %v117 = vld [vmem:[#allocation2 + $0x218] sm:$0xff]
    %v118 = vld [vmem:[#allocation2 + $0x220] sm:$0xff]
    %v119 = vld [vmem:[#allocation2 + $0x228] sm:$0xff]
    %v120 = vld [vmem:[#allocation2 + $0x230] sm:$0xff]
    %v121 = vld [vmem:[#allocation2 + $0x238] sm:$0xff]
    %v122 = vld [vmem:[#allocation2 + $0x240] sm:$0xff]
    %v123 = vld [vmem:[#allocation2 + $0x248] sm:$0xff]
    %v124 = vld [vmem:[#allocation2 + $0x250] sm:$0xff]
    %v125 = vld [vmem:[#allocation2 + $0x258] sm:$0xff]
    %v126 = vld [vmem:[#allocation2 + $0x260] sm:$0xff]
    %v127 = vld [vmem:[#allocation2 + $0x268] sm:$0xff]
    %v128 = vld [vmem:[#allocation2 + $0x270] sm:$0xff]
    %v129 = vld [vmem:[#allocation2 + $0x278] sm:$0xff]
    %v130 = vld [vmem:[#allocation2 + $0x280] sm:$0xff]
    %v131 = vld [vmem:[#allocation2 + $0x288] sm:$0xff]
    %v132 = vld [vmem:[#allocation2 + $0x290] sm:$0xff]
    %v133 = vld [vmem:[#allocation2 + $0x298] sm:$0xff]
    %v134 = vld [vmem:[#allocation2 + $0x2a0] sm:$0xff]
    %v135 = vld [vmem:[#allocation2 + $0x2a8] sm:$0xff]
    %v136 = vld [vmem:[#allocation2 + $0x2b0] sm:$0xff]
    %v137 = vld [vmem:[#allocation2 + $0x2b8] sm:$0xff]
    %v138 = vld [vmem:[#allocation2 + $0x2c0] sm:$0xff]
    %v139 = vld [vmem:[#allocation2 + $0x2c8] sm:$0xff]
    %v140 = vld [vmem:[#allocation2 + $0x2d0] sm:$0xff]
    %v141 = vld [vmem:[#allocation2 + $0x2d8] sm:$0xff]
    %v142 = vld [vmem:[#allocation2 + $0x2e0] sm:$0xff]
    %v143 = vld [vmem:[#allocation2 + $0x2e8] sm:$0xff]
    %v144 = vld [vmem:[#allocation2 + $0x2f0] sm:$0xff]
    %v145 = vld [vmem:[#allocation2 + $0x2f8] sm:$0xff]
    %v146 = vld [vmem:[#allocation2 + $0x300] sm:$0xff]
    %v147 = vld [vmem:[#allocation2 + $0x308] sm:$0xff]
    %v148 = vld [vmem:[#allocation2 + $0x310] sm:$0xff]
    %v149 = vld [vmem:[#allocation2 + $0x318] sm:$0xff]
    %v150 = vld [vmem:[#allocation2 + $0x320] sm:$0xff]
    %v151 = vld [vmem:[#allocation2 + $0x328] sm:$0xff]
    %v152 = vld [vmem:[#allocation2 + $0x330] sm:$0xff]
    %v153 = vld [vmem:[#allocation2 + $0x338] sm:$0xff]
    %v154 = vld [vmem:[#allocation2 + $0x340] sm:$0xff]
    %v155 = vld [vmem:[#allocation2 + $0x348] sm:$0xff]
    %v156 = vld [vmem:[#allocation2 + $0x350] sm:$0xff]
    %v157 = vld [vmem:[#allocation2 + $0x358] sm:$0xff]
    %v158 = vld [vmem:[#allocation2 + $0x360] sm:$0xff]
    %v159 = vld [vmem:[#allocation2 + $0x368] sm:$0xff]
    %v160 = vld [vmem:[#allocation2 + $0x370] sm:$0xff]
    %v161 = vld [vmem:[#allocation2 + $0x378] sm:$0xff]
    %v162 = vld [vmem:[#allocation2 + $0x380] sm:$0xff]
    %v163 = vld [vmem:[#allocation2 + $0x388] sm:$0xff]
    %v164 = vld [vmem:[#allocation2 + $0x390] sm:$0xff]
    %v165 = vld [vmem:[#allocation2 + $0x398] sm:$0xff]
    %v166 = vld [vmem:[#allocation2 + $0x3a0] sm:$0xff]
    %v167 = vld [vmem:[#allocation2 + $0x3a8] sm:$0xff]
    %v168 = vld [vmem:[#allocation2 + $0x3b0] sm:$0xff]
    %v169 = vld [vmem:[#allocation2 + $0x3b8] sm:$0xff]
    %v170 = vld [vmem:[#allocation2 + $0x3c0] sm:$0xff]
    %v171 = vld [vmem:[#allocation2 + $0x3c8] sm:$0xff]
    %v172 = vld [vmem:[#allocation2 + $0x3d0] sm:$0xff]
    %v173 = vld [vmem:[#allocation2 + $0x3d8] sm:$0xff]
    %v174 = vld [vmem:[#allocation2 + $0x3e0] sm:$0xff]
    %v175 = vld [vmem:[#allocation2 + $0x3e8] sm:$0xff]
    %v176 = vld [vmem:[#allocation2 + $0x3f0] sm:$0xff]
    %v177 = vld [vmem:[#allocation2 + $0x3f8] sm:$0xff]
    %v178 = vld [vmem:[#allocation2 + $0x400] sm:$0xff]
    %v179 = vld [vmem:[#allocation2 + $0x408] sm:$0xff]
    %v180 = vld [vmem:[#allocation2 + $0x410] sm:$0xff]
    %v181 = vld [vmem:[#allocation2 + $0x418] sm:$0xff]
    %v182 = vld [vmem:[#allocation2 + $0x420] sm:$0xff]
    %v183 = vld [vmem:[#allocation2 + $0x428] sm:$0xff]
    %v184 = vld [vmem:[#allocation2 + $0x430] sm:$0xff]
    %v185 = vld [vmem:[#allocation2 + $0x438] sm:$0xff]
    %v186 = vld [vmem:[#allocation2 + $0x440] sm:$0xff]
    %v187 = vld [vmem:[#allocation2 + $0x448] sm:$0xff]
    %v188 = vld [vmem:[#allocation2 + $0x450] sm:$0xff]
    %v189 = vld [vmem:[#allocation2 + $0x458] sm:$0xff]
    %v190 = vld [vmem:[#allocation2 + $0x460] sm:$0xff]
    %v191 = vld [vmem:[#allocation2 + $0x468] sm:$0xff]
    %v192 = vld [vmem:[#allocation2 + $0x470] sm:$0xff]
    %v193 = vld [vmem:[#allocation2 + $0x478] sm:$0xff]
    %v194 = vld [vmem:[#allocation2 + $0x480] sm:$0xff]
    %v195 = vld [vmem:[#allocation2 + $0x488] sm:$0xff]
    %v196 = vld [vmem:[#allocation2 + $0x490] sm:$0xff]
    %v197 = vld [vmem:[#allocation2 + $0x498] sm:$0xff]
    %v198 = vld [vmem:[#allocation2 + $0x4a0] sm:$0xff]
    %v199 = vld [vmem:[#allocation2 + $0x4a8] sm:$0xff]
    %v200 = vld [vmem:[#allocation2 + $0x4b0] sm:$0xff]
    %v201 = vld [vmem:[#allocation2 + $0x4b8] sm:$0xff]
    %v202 = vld [vmem:[#allocation2 + $0x4c0] sm:$0xff]
    %v203 = vld [vmem:[#allocation2 + $0x4c8] sm:$0xff]
    %v204 = vld [vmem:[#allocation2 + $0x4d0] sm:$0xff]
    %v205 = vld [vmem:[#allocation2 + $0x4d8] sm:$0xff]
    %v206 = vld [vmem:[#allocation2 + $0x4e0] sm:$0xff]
    %v207 = vld [vmem:[#allocation2 + $0x4e8] sm:$0xff]
    %v208 = vld [vmem:[#allocation2 + $0x4f0] sm:$0xff]
    %v209 = vld [vmem:[#allocation2 + $0x4f8] sm:$0xff]
    %v210 = vld [vmem:[#allocation2 + $0x500] sm:$0xff]
    %v211 = vld [vmem:[#allocation2 + $0x508] sm:$0xff]
    %v212 = vld [vmem:[#allocation2 + $0x510] sm:$0xff]
    %v213 = vld [vmem:[#allocation2 + $0x518] sm:$0xff]
    %v214 = vld [vmem:[#allocation2 + $0x520] sm:$0xff]
    %v215 = vld [vmem:[#allocation2 + $0x528] sm:$0xff]
    %v216 = vld [vmem:[#allocation2 + $0x530] sm:$0xff]
    %v217 = vld [vmem:[#allocation2 + $0x538] sm:$0xff]
    %v218 = vld [vmem:[#allocation2 + $0x540] sm:$0xff]
    %v219 = vld [vmem:[#allocation2 + $0x548] sm:$0xff]
    %v220 = vld [vmem:[#allocation2 + $0x550] sm:$0xff]
    %v221 = vld [vmem:[#allocation2 + $0x558] sm:$0xff]
    %v222 = vld [vmem:[#allocation2 + $0x560] sm:$0xff]
    %v223 = vld [vmem:[#allocation2 + $0x568] sm:$0xff]
    %v224 = vld [vmem:[#allocation2 + $0x570] sm:$0xff]
    %v225 = vld [vmem:[#allocation2 + $0x578] sm:$0xff]
    %v226 = vld [vmem:[#allocation2 + $0x580] sm:$0xff]
    %v227 = vld [vmem:[#allocation2 + $0x588] sm:$0xff]
    %v228 = vld [vmem:[#allocation2 + $0x590] sm:$0xff]
    %v229 = vld [vmem:[#allocation2 + $0x598] sm:$0xff]
    %v230 = vld [vmem:[#allocation2 + $0x5a0] sm:$0xff]
    %v231 = vld [vmem:[#allocation2 + $0x5a8] sm:$0xff]
    %v232 = vld [vmem:[#allocation2 + $0x5b0] sm:$0xff]
    %v233 = vld [vmem:[#allocation2 + $0x5b8] sm:$0xff]
    %v234 = vld [vmem:[#allocation2 + $0x5c0] sm:$0xff]
    %v235 = vld [vmem:[#allocation2 + $0x5c8] sm:$0xff]
    %v236 = vld [vmem:[#allocation2 + $0x5d0] sm:$0xff]
    %v237 = vld [vmem:[#allocation2 + $0x5d8] sm:$0xff]
    %v238 = vld [vmem:[#allocation2 + $0x5e0] sm:$0xff]
    %v239 = vld [vmem:[#allocation2 + $0x5e8] sm:$0xff]
    %v240 = vld [vmem:[#allocation2 + $0x5f0] sm:$0xff]
    %v241 = vld [vmem:[#allocation2 + $0x5f8] sm:$0xff]
    %v242 = vld [vmem:[#allocation2 + $0x600] sm:$0xff]
    %v243 = vld [vmem:[#allocation2 + $0x608] sm:$0xff]
    %v244 = vld [vmem:[#allocation2 + $0x610] sm:$0xff]
    %v245 = vld [vmem:[#allocation2 + $0x618] sm:$0xff]
    %v246 = vld [vmem:[#allocation2 + $0x620] sm:$0xff]
    %v247 = vld [vmem:[#allocation2 + $0x628] sm:$0xff]
    %v248 = vld [vmem:[#allocation2 + $0x630] sm:$0xff]
    %v249 = vld [vmem:[#allocation2 + $0x638] sm:$0xff]
    %v250 = vld [vmem:[#allocation2 + $0x640] sm:$0xff]
    %v251 = vld [vmem:[#allocation2 + $0x648] sm:$0xff]
    %v252 = vld [vmem:[#allocation2 + $0x650] sm:$0xff]
    %v253 = vld [vmem:[#allocation2 + $0x658] sm:$0xff]
    %v254 = vld [vmem:[#allocation2 + $0x660] sm:$0xff]
    %v255 = vld [vmem:[#allocation2 + $0x668] sm:$0xff]
    %v256 = vld [vmem:[#allocation2 + $0x670] sm:$0xff]
    %v257 = vld [vmem:[#allocation2 + $0x678] sm:$0xff]
    %v258 = vld [vmem:[#allocation2 + $0x680] sm:$0xff]
    %v259 = vld [vmem:[#allocation2 + $0x688] sm:$0xff]
    %v260 = vld [vmem:[#allocation2 + $0x690] sm:$0xff]
    %v261 = vld [vmem:[#allocation2 + $0x698] sm:$0xff]
    %v262 = vld [vmem:[#allocation2 + $0x6a0] sm:$0xff]
    %v263 = vld [vmem:[#allocation2 + $0x6a8] sm:$0xff]
    %v264 = vld [vmem:[#allocation2 + $0x6b0] sm:$0xff]
    %v265 = vld [vmem:[#allocation2 + $0x6b8] sm:$0xff]
    %v266 = vld [vmem:[#allocation2 + $0x6c0] sm:$0xff]
    %v267 = vld [vmem:[#allocation2 + $0x6c8] sm:$0xff]
    %v268 = vld [vmem:[#allocation2 + $0x6d0] sm:$0xff]
    %v269 = vld [vmem:[#allocation2 + $0x6d8] sm:$0xff]
    %v270 = vld [vmem:[#allocation2 + $0x6e0] sm:$0xff]
    %v271 = vld [vmem:[#allocation2 + $0x6e8] sm:$0xff]
    %v272 = vld [vmem:[#allocation2 + $0x6f0] sm:$0xff]
    %v273 = vld [vmem:[#allocation2 + $0x6f8] sm:$0xff]
    %v274 = vld [vmem:[%s2] sm:$0xf]
    %v276 = vperm.slane %v274, 0
    %v277 = vperm.slane %v274, 1
    %v278 = vperm.slane %v274, 2
    %v279 = vperm.slane %v274, 3
    %v292 = vunpack.c.l.b16 %v42
    %v293 = vunpack.c.h.b16 %v42
    %v294 = vunpack.c.l.b16 %v43
    %v295 = vunpack.c.h.b16 %v43
    %v296 = vunpack.c.l.b16 %v44
    %v297 = vunpack.c.h.b16 %v44
    %v298 = vunpack.c.l.b16 %v45
    %v299 = vunpack.c.l.b16 %v46
    %v300 = vunpack.c.h.b16 %v46
    %v301 = vunpack.c.l.b16 %v47
    %v302 = vunpack.c.h.b16 %v47
    %v303 = vunpack.c.l.b16 %v48
    %v304 = vunpack.c.h.b16 %v48
    %v305 = vunpack.c.l.b16 %v49
    %v306 = vpack.c.b16 %v299, %v292
    %v307 = vpack.c.b16 %v300, %v293
    %v308 = vpack.c.b16 %v301, %v294
    %v309 = vpack.c.b16 %v302, %v295
    %v310 = vpack.c.b16 %v303, %v296
    %v311 = vpack.c.b16 %v304, %v297
    %v312 = vpack.c.b16 %v305, %v298
    %v544 = vunpack.c.l.b16 %v50
    %v545 = vunpack.c.h.b16 %v50
    %v546 = vunpack.c.l.b16 %v51
    %v547 = vunpack.c.h.b16 %v51
    %v548 = vunpack.c.l.b16 %v52
    %v549 = vunpack.c.h.b16 %v52
    %v550 = vunpack.c.l.b16 %v53
    %v551 = vunpack.c.h.b16 %v53
    %v552 = vunpack.c.l.b16 %v54
    %v553 = vunpack.c.h.b16 %v54
    %v554 = vunpack.c.l.b16 %v55
    %v555 = vunpack.c.h.b16 %v55
    %v556 = vunpack.c.l.b16 %v56
    %v557 = vunpack.c.h.b16 %v56
    %v558 = vunpack.c.l.b16 %v57
    %v559 = vunpack.c.h.b16 %v57
    %v560 = vunpack.c.l.b16 %v58
    %v561 = vunpack.c.h.b16 %v58
    %v562 = vunpack.c.l.b16 %v59
    %v563 = vunpack.c.h.b16 %v59
    %v564 = vunpack.c.l.b16 %v60
    %v565 = vunpack.c.h.b16 %v60
    %v566 = vunpack.c.l.b16 %v61
    %v567 = vunpack.c.h.b16 %v61
    %v568 = vunpack.c.l.b16 %v62
    %v569 = vunpack.c.h.b16 %v62
    %v570 = vunpack.c.l.b16 %v63
    %v571 = vunpack.c.h.b16 %v63
    %v572 = vunpack.c.l.b16 %v64
    %v573 = vunpack.c.h.b16 %v64
    %v574 = vunpack.c.l.b16 %v65
    %v575 = vunpack.c.h.b16 %v65
    %v576 = vunpack.c.l.b16 %v66
    %v577 = vunpack.c.h.b16 %v66
    %v578 = vunpack.c.l.b16 %v67
    %v579 = vunpack.c.h.b16 %v67
    %v580 = vunpack.c.l.b16 %v68
    %v581 = vunpack.c.h.b16 %v68
    %v582 = vunpack.c.l.b16 %v69
    %v583 = vunpack.c.h.b16 %v69
    %v584 = vunpack.c.l.b16 %v70
    %v585 = vunpack.c.h.b16 %v70
    %v586 = vunpack.c.l.b16 %v71
    %v587 = vunpack.c.h.b16 %v71
    %v588 = vunpack.c.l.b16 %v72
    %v589 = vunpack.c.h.b16 %v72
    %v590 = vunpack.c.l.b16 %v73
    %v591 = vunpack.c.h.b16 %v73
    %v592 = vunpack.c.l.b16 %v74
    %v593 = vunpack.c.h.b16 %v74
    %v594 = vunpack.c.l.b16 %v75
    %v595 = vunpack.c.h.b16 %v75
    %v596 = vunpack.c.l.b16 %v76
    %v597 = vunpack.c.h.b16 %v76
    %v598 = vunpack.c.l.b16 %v77
    %v599 = vunpack.c.h.b16 %v77
    %v600 = vunpack.c.l.b16 %v78
    %v601 = vunpack.c.h.b16 %v78
    %v602 = vunpack.c.l.b16 %v79
    %v603 = vunpack.c.h.b16 %v79
    %v604 = vunpack.c.l.b16 %v80
    %v605 = vunpack.c.h.b16 %v80
    %v606 = vunpack.c.l.b16 %v81
    %v607 = vunpack.c.h.b16 %v81
    %v608 = vunpack.c.l.b16 %v82
    %v609 = vunpack.c.h.b16 %v82
    %v610 = vunpack.c.l.b16 %v83
    %v611 = vunpack.c.h.b16 %v83
    %v612 = vunpack.c.l.b16 %v84
    %v613 = vunpack.c.h.b16 %v84
    %v614 = vunpack.c.l.b16 %v85
    %v615 = vunpack.c.h.b16 %v85
    %v616 = vunpack.c.l.b16 %v86
    %v617 = vunpack.c.h.b16 %v86
    %v618 = vunpack.c.l.b16 %v87
    %v619 = vunpack.c.h.b16 %v87
    %v620 = vunpack.c.l.b16 %v88
    %v621 = vunpack.c.h.b16 %v88
    %v622 = vunpack.c.l.b16 %v89
    %v623 = vunpack.c.h.b16 %v89
    %v624 = vunpack.c.l.b16 %v90
    %v625 = vunpack.c.h.b16 %v90
    %v626 = vunpack.c.l.b16 %v91
    %v627 = vunpack.c.h.b16 %v91
    %v628 = vunpack.c.l.b16 %v92
    %v629 = vunpack.c.h.b16 %v92
    %v630 = vunpack.c.l.b16 %v93
    %v631 = vunpack.c.h.b16 %v93
    %v632 = vunpack.c.l.b16 %v94
    %v633 = vunpack.c.h.b16 %v94
    %v634 = vunpack.c.l.b16 %v95
    %v635 = vunpack.c.h.b16 %v95
    %v636 = vunpack.c.l.b16 %v96
    %v637 = vunpack.c.h.b16 %v96
    %v638 = vunpack.c.l.b16 %v97
    %v639 = vunpack.c.h.b16 %v97
    %v640 = vunpack.c.l.b16 %v98
    %v641 = vunpack.c.h.b16 %v98
    %v642 = vunpack.c.l.b16 %v99
    %v643 = vunpack.c.h.b16 %v99
    %v644 = vunpack.c.l.b16 %v100
    %v645 = vunpack.c.h.b16 %v100
    %v646 = vunpack.c.l.b16 %v101
    %v647 = vunpack.c.h.b16 %v101
    %v648 = vunpack.c.l.b16 %v102
    %v649 = vunpack.c.h.b16 %v102
    %v650 = vunpack.c.l.b16 %v103
    %v651 = vunpack.c.h.b16 %v103
    %v652 = vunpack.c.l.b16 %v104
    %v653 = vunpack.c.h.b16 %v104
    %v654 = vunpack.c.l.b16 %v105
    %v655 = vunpack.c.h.b16 %v105
    %v656 = vunpack.c.l.b16 %v106
    %v657 = vunpack.c.h.b16 %v106
    %v658 = vunpack.c.l.b16 %v107
    %v659 = vunpack.c.h.b16 %v107
    %v660 = vunpack.c.l.b16 %v108
    %v661 = vunpack.c.h.b16 %v108
    %v662 = vunpack.c.l.b16 %v109
    %v663 = vunpack.c.h.b16 %v109
    %v664 = vunpack.c.l.b16 %v110
    %v665 = vunpack.c.h.b16 %v110
    %v666 = vunpack.c.l.b16 %v111
    %v667 = vunpack.c.h.b16 %v111
    %v668 = vunpack.c.l.b16 %v112
    %v669 = vunpack.c.h.b16 %v112
    %v670 = vunpack.c.l.b16 %v113
    %v671 = vunpack.c.h.b16 %v113
    %v672 = vunpack.c.l.b16 %v114
    %v673 = vunpack.c.h.b16 %v114
    %v674 = vunpack.c.l.b16 %v115
    %v675 = vunpack.c.h.b16 %v115
    %v676 = vunpack.c.l.b16 %v116
    %v677 = vunpack.c.h.b16 %v116
    %v678 = vunpack.c.l.b16 %v117
    %v679 = vunpack.c.h.b16 %v117
    %v680 = vunpack.c.l.b16 %v118
    %v681 = vunpack.c.h.b16 %v118
    %v682 = vunpack.c.l.b16 %v119
    %v683 = vunpack.c.h.b16 %v119
    %v684 = vunpack.c.l.b16 %v120
    %v685 = vunpack.c.h.b16 %v120
    %v686 = vunpack.c.l.b16 %v121
    %v687 = vunpack.c.h.b16 %v121
    %v688 = vunpack.c.l.b16 %v122
    %v689 = vunpack.c.h.b16 %v122
    %v690 = vunpack.c.l.b16 %v123
    %v691 = vunpack.c.h.b16 %v123
    %v692 = vunpack.c.l.b16 %v124
    %v693 = vunpack.c.h.b16 %v124
    %v694 = vunpack.c.l.b16 %v125
    %v695 = vunpack.c.h.b16 %v125
    %v696 = vunpack.c.l.b16 %v126
    %v697 = vunpack.c.h.b16 %v126
    %v698 = vunpack.c.l.b16 %v127
    %v699 = vunpack.c.h.b16 %v127
    %v700 = vunpack.c.l.b16 %v128
    %v701 = vunpack.c.h.b16 %v128
    %v702 = vunpack.c.l.b16 %v129
    %v703 = vunpack.c.h.b16 %v129
    %v704 = vunpack.c.l.b16 %v130
    %v705 = vunpack.c.h.b16 %v130
    %v706 = vunpack.c.l.b16 %v131
    %v707 = vunpack.c.h.b16 %v131
    %v708 = vunpack.c.l.b16 %v132
    %v709 = vunpack.c.h.b16 %v132
    %v710 = vunpack.c.l.b16 %v133
    %v711 = vunpack.c.h.b16 %v133
    %v712 = vunpack.c.l.b16 %v134
    %v713 = vunpack.c.h.b16 %v134
    %v714 = vunpack.c.l.b16 %v135
    %v715 = vunpack.c.h.b16 %v135
    %v716 = vunpack.c.l.b16 %v136
    %v717 = vunpack.c.h.b16 %v136
    %v718 = vunpack.c.l.b16 %v137
    %v719 = vunpack.c.h.b16 %v137
    %v720 = vunpack.c.l.b16 %v138
    %v721 = vunpack.c.h.b16 %v138
    %v722 = vunpack.c.l.b16 %v139
    %v723 = vunpack.c.h.b16 %v139
    %v724 = vunpack.c.l.b16 %v140
    %v725 = vunpack.c.h.b16 %v140
    %v726 = vunpack.c.l.b16 %v141
    %v727 = vunpack.c.h.b16 %v141
    %v728 = vunpack.c.l.b16 %v142
    %v729 = vunpack.c.h.b16 %v142
    %v730 = vunpack.c.l.b16 %v143
    %v731 = vunpack.c.h.b16 %v143
    %v732 = vunpack.c.l.b16 %v144
    %v733 = vunpack.c.h.b16 %v144
    %v734 = vunpack.c.l.b16 %v145
    %v735 = vunpack.c.h.b16 %v145
    %v736 = vunpack.c.l.b16 %v146
    %v737 = vunpack.c.h.b16 %v146
    %v738 = vunpack.c.l.b16 %v147
    %v739 = vunpack.c.h.b16 %v147
    %v740 = vunpack.c.l.b16 %v148
    %v741 = vunpack.c.h.b16 %v148
    %v742 = vunpack.c.l.b16 %v149
    %v743 = vunpack.c.h.b16 %v149
    %v744 = vunpack.c.l.b16 %v150
    %v745 = vunpack.c.h.b16 %v150
    %v746 = vunpack.c.l.b16 %v151
    %v747 = vunpack.c.h.b16 %v151
    %v748 = vunpack.c.l.b16 %v152
    %v749 = vunpack.c.h.b16 %v152
    %v750 = vunpack.c.l.b16 %v153
    %v751 = vunpack.c.h.b16 %v153
    %v752 = vunpack.c.l.b16 %v154
    %v753 = vunpack.c.h.b16 %v154
    %v754 = vunpack.c.l.b16 %v155
    %v755 = vunpack.c.h.b16 %v155
    %v756 = vunpack.c.l.b16 %v156
    %v757 = vunpack.c.h.b16 %v156
    %v758 = vunpack.c.l.b16 %v157
    %v759 = vunpack.c.h.b16 %v157
    %v760 = vunpack.c.l.b16 %v158
    %v761 = vunpack.c.h.b16 %v158
    %v762 = vunpack.c.l.b16 %v159
    %v763 = vunpack.c.h.b16 %v159
    %v764 = vunpack.c.l.b16 %v160
    %v765 = vunpack.c.h.b16 %v160
    %v766 = vunpack.c.l.b16 %v161
    %v767 = vunpack.c.h.b16 %v161
    %v768 = vunpack.c.l.b16 %v162
    %v769 = vunpack.c.h.b16 %v162
    %v770 = vunpack.c.l.b16 %v163
    %v771 = vunpack.c.h.b16 %v163
    %v772 = vunpack.c.l.b16 %v164
    %v773 = vunpack.c.h.b16 %v164
    %v774 = vunpack.c.l.b16 %v165
    %v775 = vunpack.c.h.b16 %v165
    %v776 = vunpack.c.l.b16 %v166
    %v777 = vunpack.c.h.b16 %v166
    %v778 = vunpack.c.l.b16 %v167
    %v779 = vunpack.c.h.b16 %v167
    %v780 = vunpack.c.l.b16 %v168
    %v781 = vunpack.c.h.b16 %v168
    %v782 = vunpack.c.l.b16 %v169
    %v783 = vunpack.c.h.b16 %v169
    %v784 = vunpack.c.l.b16 %v170
    %v785 = vunpack.c.h.b16 %v170
    %v786 = vunpack.c.l.b16 %v171
    %v787 = vunpack.c.h.b16 %v171
    %v788 = vunpack.c.l.b16 %v172
    %v789 = vunpack.c.h.b16 %v172
    %v790 = vunpack.c.l.b16 %v173
    %v791 = vunpack.c.h.b16 %v173
    %v792 = vunpack.c.l.b16 %v174
    %v793 = vunpack.c.h.b16 %v174
    %v794 = vunpack.c.l.b16 %v175
    %v795 = vunpack.c.h.b16 %v175
    %v796 = vunpack.c.l.b16 %v176
    %v797 = vunpack.c.h.b16 %v176
    %v798 = vunpack.c.l.b16 %v177
    %v799 = vunpack.c.h.b16 %v177
    %v800 = vunpack.c.l.b16 %v178
    %v801 = vunpack.c.h.b16 %v178
    %v802 = vunpack.c.l.b16 %v179
    %v803 = vunpack.c.h.b16 %v179
    %v804 = vunpack.c.l.b16 %v180
    %v805 = vunpack.c.h.b16 %v180
    %v806 = vunpack.c.l.b16 %v181
    %v807 = vunpack.c.h.b16 %v181
    %v808 = vunpack.c.l.b16 %v182
    %v809 = vunpack.c.h.b16 %v182
    %v810 = vunpack.c.l.b16 %v183
    %v811 = vunpack.c.h.b16 %v183
    %v812 = vunpack.c.l.b16 %v184
    %v813 = vunpack.c.h.b16 %v184
    %v814 = vunpack.c.l.b16 %v185
    %v815 = vunpack.c.h.b16 %v185
    %v816 = vunpack.c.l.b16 %v186
    %v817 = vunpack.c.h.b16 %v186
    %v818 = vunpack.c.l.b16 %v187
    %v819 = vunpack.c.h.b16 %v187
    %v820 = vunpack.c.l.b16 %v188
    %v821 = vunpack.c.h.b16 %v188
    %v822 = vunpack.c.l.b16 %v189
    %v823 = vunpack.c.h.b16 %v189
    %v824 = vunpack.c.l.b16 %v190
    %v825 = vunpack.c.h.b16 %v190
    %v826 = vunpack.c.l.b16 %v191
    %v827 = vunpack.c.h.b16 %v191
    %v828 = vunpack.c.l.b16 %v192
    %v829 = vunpack.c.h.b16 %v192
    %v830 = vunpack.c.l.b16 %v193
    %v831 = vunpack.c.h.b16 %v193
    %v832 = vunpack.c.l.b16 %v194
    %v833 = vunpack.c.h.b16 %v194
    %v834 = vunpack.c.l.b16 %v195
    %v835 = vunpack.c.h.b16 %v195
    %v836 = vunpack.c.l.b16 %v196
    %v837 = vunpack.c.h.b16 %v196
    %v838 = vunpack.c.l.b16 %v197
    %v839 = vunpack.c.h.b16 %v197
    %v840 = vunpack.c.l.b16 %v198
    %v841 = vunpack.c.h.b16 %v198
    %v842 = vunpack.c.l.b16 %v199
    %v843 = vunpack.c.h.b16 %v199
    %v844 = vunpack.c.l.b16 %v200
    %v845 = vunpack.c.h.b16 %v200
    %v846 = vunpack.c.l.b16 %v201
    %v847 = vunpack.c.h.b16 %v201
    %v848 = vunpack.c.l.b16 %v202
    %v849 = vunpack.c.h.b16 %v202
    %v850 = vunpack.c.l.b16 %v203
    %v851 = vunpack.c.h.b16 %v203
    %v852 = vunpack.c.l.b16 %v204
    %v853 = vunpack.c.h.b16 %v204
    %v854 = vunpack.c.l.b16 %v205
    %v855 = vunpack.c.h.b16 %v205
    %v856 = vunpack.c.l.b16 %v206
    %v857 = vunpack.c.h.b16 %v206
    %v858 = vunpack.c.l.b16 %v207
    %v859 = vunpack.c.h.b16 %v207
    %v860 = vunpack.c.l.b16 %v208
    %v861 = vunpack.c.h.b16 %v208
    %v862 = vunpack.c.l.b16 %v209
    %v863 = vunpack.c.h.b16 %v209
    %v864 = vunpack.c.l.b16 %v210
    %v865 = vunpack.c.h.b16 %v210
    %v866 = vunpack.c.l.b16 %v211
    %v867 = vunpack.c.h.b16 %v211
    %v868 = vunpack.c.l.b16 %v212
    %v869 = vunpack.c.h.b16 %v212
    %v870 = vunpack.c.l.b16 %v213
    %v871 = vunpack.c.h.b16 %v213
    %v872 = vunpack.c.l.b16 %v214
    %v873 = vunpack.c.h.b16 %v214
    %v874 = vunpack.c.l.b16 %v215
    %v875 = vunpack.c.h.b16 %v215
    %v876 = vunpack.c.l.b16 %v216
    %v877 = vunpack.c.h.b16 %v216
    %v878 = vunpack.c.l.b16 %v217
    %v879 = vunpack.c.h.b16 %v217
    %v880 = vunpack.c.l.b16 %v218
    %v881 = vunpack.c.h.b16 %v218
    %v882 = vunpack.c.l.b16 %v219
    %v883 = vunpack.c.h.b16 %v219
    %v884 = vunpack.c.l.b16 %v220
    %v885 = vunpack.c.h.b16 %v220
    %v886 = vunpack.c.l.b16 %v221
    %v887 = vunpack.c.h.b16 %v221
    %v888 = vunpack.c.l.b16 %v222
    %v889 = vunpack.c.h.b16 %v222
    %v890 = vunpack.c.l.b16 %v223
    %v891 = vunpack.c.h.b16 %v223
    %v892 = vunpack.c.l.b16 %v224
    %v893 = vunpack.c.h.b16 %v224
    %v894 = vunpack.c.l.b16 %v225
    %v895 = vunpack.c.h.b16 %v225
    %v896 = vunpack.c.l.b16 %v226
    %v897 = vunpack.c.h.b16 %v226
    %v898 = vunpack.c.l.b16 %v227
    %v899 = vunpack.c.h.b16 %v227
    %v900 = vunpack.c.l.b16 %v228
    %v901 = vunpack.c.h.b16 %v228
    %v902 = vunpack.c.l.b16 %v229
    %v903 = vunpack.c.h.b16 %v229
    %v904 = vunpack.c.l.b16 %v230
    %v905 = vunpack.c.h.b16 %v230
    %v906 = vunpack.c.l.b16 %v231
    %v907 = vunpack.c.h.b16 %v231
    %v908 = vunpack.c.l.b16 %v232
    %v909 = vunpack.c.h.b16 %v232
    %v910 = vunpack.c.l.b16 %v233
    %v911 = vunpack.c.h.b16 %v233
    %v912 = vunpack.c.l.b16 %v234
    %v913 = vunpack.c.h.b16 %v234
    %v914 = vunpack.c.l.b16 %v235
    %v915 = vunpack.c.h.b16 %v235
    %v916 = vunpack.c.l.b16 %v236
    %v917 = vunpack.c.h.b16 %v236
    %v918 = vunpack.c.l.b16 %v237
    %v919 = vunpack.c.h.b16 %v237
    %v920 = vunpack.c.l.b16 %v238
    %v921 = vunpack.c.h.b16 %v238
    %v922 = vunpack.c.l.b16 %v239
    %v923 = vunpack.c.h.b16 %v239
    %v924 = vunpack.c.l.b16 %v240
    %v925 = vunpack.c.h.b16 %v240
    %v926 = vunpack.c.l.b16 %v241
    %v927 = vunpack.c.h.b16 %v241
    %v928 = vunpack.c.l.b16 %v242
    %v929 = vunpack.c.h.b16 %v242
    %v930 = vunpack.c.l.b16 %v243
    %v931 = vunpack.c.h.b16 %v243
    %v932 = vunpack.c.l.b16 %v244
    %v933 = vunpack.c.h.b16 %v244
    %v934 = vunpack.c.l.b16 %v245
    %v935 = vunpack.c.h.b16 %v245
    %v936 = vunpack.c.l.b16 %v246
    %v937 = vunpack.c.h.b16 %v246
    %v938 = vunpack.c.l.b16 %v247
    %v939 = vunpack.c.h.b16 %v247
    %v940 = vunpack.c.l.b16 %v248
    %v941 = vunpack.c.h.b16 %v248
    %v942 = vunpack.c.l.b16 %v249
    %v943 = vunpack.c.h.b16 %v249
    %v944 = vunpack.c.l.b16 %v250
    %v945 = vunpack.c.h.b16 %v250
    %v946 = vunpack.c.l.b16 %v251
    %v947 = vunpack.c.h.b16 %v251
    %v948 = vunpack.c.l.b16 %v252
    %v949 = vunpack.c.h.b16 %v252
    %v950 = vunpack.c.l.b16 %v253
    %v951 = vunpack.c.h.b16 %v253
    %v952 = vunpack.c.l.b16 %v254
    %v953 = vunpack.c.h.b16 %v254
    %v954 = vunpack.c.l.b16 %v255
    %v955 = vunpack.c.h.b16 %v255
    %v956 = vunpack.c.l.b16 %v256
    %v957 = vunpack.c.h.b16 %v256
    %v958 = vunpack.c.l.b16 %v257
    %v959 = vunpack.c.h.b16 %v257
    %v960 = vunpack.c.l.b16 %v258
    %v961 = vunpack.c.h.b16 %v258
    %v962 = vunpack.c.l.b16 %v259
    %v963 = vunpack.c.h.b16 %v259
    %v964 = vunpack.c.l.b16 %v260
    %v965 = vunpack.c.h.b16 %v260
    %v966 = vunpack.c.l.b16 %v261
    %v967 = vunpack.c.h.b16 %v261
    %v968 = vunpack.c.l.b16 %v262
    %v969 = vunpack.c.h.b16 %v262
    %v970 = vunpack.c.l.b16 %v263
    %v971 = vunpack.c.h.b16 %v263
    %v972 = vunpack.c.l.b16 %v264
    %v973 = vunpack.c.h.b16 %v264
    %v974 = vunpack.c.l.b16 %v265
    %v975 = vunpack.c.h.b16 %v265
    %v976 = vunpack.c.l.b16 %v266
    %v977 = vunpack.c.h.b16 %v266
    %v978 = vunpack.c.l.b16 %v267
    %v979 = vunpack.c.h.b16 %v267
    %v980 = vunpack.c.l.b16 %v268
    %v981 = vunpack.c.h.b16 %v268
    %v982 = vunpack.c.l.b16 %v269
    %v983 = vunpack.c.h.b16 %v269
    %v984 = vunpack.c.l.b16 %v270
    %v985 = vunpack.c.h.b16 %v270
    %v986 = vunpack.c.l.b16 %v271
    %v987 = vunpack.c.h.b16 %v271
    %v988 = vunpack.c.l.b16 %v272
    %v989 = vunpack.c.h.b16 %v272
    %v990 = vunpack.c.l.b16 %v273
    %v991 = vunpack.c.h.b16 %v273
    %v992 = vpack.c.b16 %v548, %v544
    %v993 = vpack.c.b16 %v549, %v545
    %v994 = vpack.c.b16 %v550, %v546
    %v995 = vpack.c.b16 %v551, %v547
    %v996 = vpack.c.b16 %v556, %v552
    %v997 = vpack.c.b16 %v557, %v553
    %v998 = vpack.c.b16 %v558, %v554
    %v999 = vpack.c.b16 %v559, %v555
    %v1000 = vpack.c.b16 %v564, %v560
    %v1001 = vpack.c.b16 %v565, %v561
    %v1002 = vpack.c.b16 %v566, %v562
    %v1003 = vpack.c.b16 %v567, %v563
    %v1004 = vpack.c.b16 %v572, %v568
    %v1005 = vpack.c.b16 %v573, %v569
    %v1006 = vpack.c.b16 %v574, %v570
    %v1007 = vpack.c.b16 %v575, %v571
    %v1008 = vpack.c.b16 %v580, %v576
    %v1009 = vpack.c.b16 %v581, %v577
    %v1010 = vpack.c.b16 %v582, %v578
    %v1011 = vpack.c.b16 %v583, %v579
    %v1012 = vpack.c.b16 %v588, %v584
    %v1013 = vpack.c.b16 %v589, %v585
    %v1014 = vpack.c.b16 %v590, %v586
    %v1015 = vpack.c.b16 %v591, %v587
    %v1016 = vpack.c.b16 %v596, %v592
    %v1017 = vpack.c.b16 %v597, %v593
    %v1018 = vpack.c.b16 %v598, %v594
    %v1019 = vpack.c.b16 %v599, %v595
    %v1020 = vpack.c.b16 %v604, %v600
    %v1021 = vpack.c.b16 %v605, %v601
    %v1022 = vpack.c.b16 %v606, %v602
    %v1023 = vpack.c.b16 %v607, %v603
    %v1024 = vpack.c.b16 %v612, %v608
    %v1025 = vpack.c.b16 %v613, %v609
    %v1026 = vpack.c.b16 %v614, %v610
    %v1027 = vpack.c.b16 %v615, %v611
    %v1028 = vpack.c.b16 %v620, %v616
    %v1029 = vpack.c.b16 %v621, %v617
    %v1030 = vpack.c.b16 %v622, %v618
    %v1031 = vpack.c.b16 %v623, %v619
    %v1032 = vpack.c.b16 %v628, %v624
    %v1033 = vpack.c.b16 %v629, %v625
    %v1034 = vpack.c.b16 %v630, %v626
    %v1035 = vpack.c.b16 %v631, %v627
    %v1036 = vpack.c.b16 %v636, %v632
    %v1037 = vpack.c.b16 %v637, %v633
    %v1038 = vpack.c.b16 %v638, %v634
    %v1039 = vpack.c.b16 %v639, %v635
    %v1040 = vpack.c.b16 %v644, %v640
    %v1041 = vpack.c.b16 %v645, %v641
    %v1042 = vpack.c.b16 %v646, %v642
    %v1043 = vpack.c.b16 %v647, %v643
    %v1044 = vpack.c.b16 %v652, %v648
    %v1045 = vpack.c.b16 %v653, %v649
    %v1046 = vpack.c.b16 %v654, %v650
    %v1047 = vpack.c.b16 %v655, %v651
    %v1048 = vpack.c.b16 %v660, %v656
    %v1049 = vpack.c.b16 %v661, %v657
    %v1050 = vpack.c.b16 %v662, %v658
    %v1051 = vpack.c.b16 %v663, %v659
    %v1052 = vpack.c.b16 %v668, %v664
    %v1053 = vpack.c.b16 %v669, %v665
    %v1054 = vpack.c.b16 %v670, %v666
    %v1055 = vpack.c.b16 %v671, %v667
    %v1056 = vpack.c.b16 %v676, %v672
    %v1057 = vpack.c.b16 %v677, %v673
    %v1058 = vpack.c.b16 %v678, %v674
    %v1059 = vpack.c.b16 %v679, %v675
    %v1060 = vpack.c.b16 %v684, %v680
    %v1061 = vpack.c.b16 %v685, %v681
    %v1062 = vpack.c.b16 %v686, %v682
    %v1063 = vpack.c.b16 %v687, %v683
    %v1064 = vpack.c.b16 %v692, %v688
    %v1065 = vpack.c.b16 %v693, %v689
    %v1066 = vpack.c.b16 %v694, %v690
    %v1067 = vpack.c.b16 %v695, %v691
    %v1068 = vpack.c.b16 %v700, %v696
    %v1069 = vpack.c.b16 %v701, %v697
    %v1070 = vpack.c.b16 %v702, %v698
    %v1071 = vpack.c.b16 %v703, %v699
    %v1072 = vpack.c.b16 %v708, %v704
    %v1073 = vpack.c.b16 %v709, %v705
    %v1074 = vpack.c.b16 %v710, %v706
    %v1075 = vpack.c.b16 %v711, %v707
    %v1076 = vpack.c.b16 %v716, %v712
    %v1077 = vpack.c.b16 %v717, %v713
    %v1078 = vpack.c.b16 %v718, %v714
    %v1079 = vpack.c.b16 %v719, %v715
    %v1080 = vpack.c.b16 %v724, %v720
    %v1081 = vpack.c.b16 %v725, %v721
    %v1082 = vpack.c.b16 %v726, %v722
    %v1083 = vpack.c.b16 %v727, %v723
    %v1084 = vpack.c.b16 %v732, %v728
    %v1085 = vpack.c.b16 %v733, %v729
    %v1086 = vpack.c.b16 %v734, %v730
    %v1087 = vpack.c.b16 %v735, %v731
    %v1088 = vpack.c.b16 %v740, %v736
    %v1089 = vpack.c.b16 %v741, %v737
    %v1090 = vpack.c.b16 %v742, %v738
    %v1091 = vpack.c.b16 %v743, %v739
    %v1092 = vpack.c.b16 %v748, %v744
    %v1093 = vpack.c.b16 %v749, %v745
    %v1094 = vpack.c.b16 %v750, %v746
    %v1095 = vpack.c.b16 %v751, %v747
    %v1096 = vpack.c.b16 %v756, %v752
    %v1097 = vpack.c.b16 %v757, %v753
    %v1098 = vpack.c.b16 %v758, %v754
    %v1099 = vpack.c.b16 %v759, %v755
    %v1100 = vpack.c.b16 %v764, %v760
    %v1101 = vpack.c.b16 %v765, %v761
    %v1102 = vpack.c.b16 %v766, %v762
    %v1103 = vpack.c.b16 %v767, %v763
    %v1104 = vpack.c.b16 %v772, %v768
    %v1105 = vpack.c.b16 %v773, %v769
    %v1106 = vpack.c.b16 %v774, %v770
    %v1107 = vpack.c.b16 %v775, %v771
    %v1108 = vpack.c.b16 %v780, %v776
    %v1109 = vpack.c.b16 %v781, %v777
    %v1110 = vpack.c.b16 %v782, %v778
    %v1111 = vpack.c.b16 %v783, %v779
    %v1112 = vpack.c.b16 %v788, %v784
    %v1113 = vpack.c.b16 %v789, %v785
    %v1114 = vpack.c.b16 %v790, %v786
    %v1115 = vpack.c.b16 %v791, %v787
    %v1116 = vpack.c.b16 %v796, %v792
    %v1117 = vpack.c.b16 %v797, %v793
    %v1118 = vpack.c.b16 %v798, %v794
    %v1119 = vpack.c.b16 %v799, %v795
    %v1120 = vpack.c.b16 %v804, %v800
    %v1121 = vpack.c.b16 %v805, %v801
    %v1122 = vpack.c.b16 %v806, %v802
    %v1123 = vpack.c.b16 %v807, %v803
    %v1124 = vpack.c.b16 %v812, %v808
    %v1125 = vpack.c.b16 %v813, %v809
    %v1126 = vpack.c.b16 %v814, %v810
    %v1127 = vpack.c.b16 %v815, %v811
    %v1128 = vpack.c.b16 %v820, %v816
    %v1129 = vpack.c.b16 %v821, %v817
    %v1130 = vpack.c.b16 %v822, %v818
    %v1131 = vpack.c.b16 %v823, %v819
    %v1132 = vpack.c.b16 %v828, %v824
    %v1133 = vpack.c.b16 %v829, %v825
    %v1134 = vpack.c.b16 %v830, %v826
    %v1135 = vpack.c.b16 %v831, %v827
    %v1136 = vpack.c.b16 %v836, %v832
    %v1137 = vpack.c.b16 %v837, %v833
    %v1138 = vpack.c.b16 %v838, %v834
    %v1139 = vpack.c.b16 %v839, %v835
    %v1140 = vpack.c.b16 %v844, %v840
    %v1141 = vpack.c.b16 %v845, %v841
    %v1142 = vpack.c.b16 %v846, %v842
    %v1143 = vpack.c.b16 %v847, %v843
    %v1144 = vpack.c.b16 %v852, %v848
    %v1145 = vpack.c.b16 %v853, %v849
    %v1146 = vpack.c.b16 %v854, %v850
    %v1147 = vpack.c.b16 %v855, %v851
    %v1148 = vpack.c.b16 %v860, %v856
    %v1149 = vpack.c.b16 %v861, %v857
    %v1150 = vpack.c.b16 %v862, %v858
    %v1151 = vpack.c.b16 %v863, %v859
    %v1152 = vpack.c.b16 %v868, %v864
    %v1153 = vpack.c.b16 %v869, %v865
    %v1154 = vpack.c.b16 %v870, %v866
    %v1155 = vpack.c.b16 %v871, %v867
    %v1156 = vpack.c.b16 %v876, %v872
    %v1157 = vpack.c.b16 %v877, %v873
    %v1158 = vpack.c.b16 %v878, %v874
    %v1159 = vpack.c.b16 %v879, %v875
    %v1160 = vpack.c.b16 %v884, %v880
    %v1161 = vpack.c.b16 %v885, %v881
    %v1162 = vpack.c.b16 %v886, %v882
    %v1163 = vpack.c.b16 %v887, %v883
    %v1164 = vpack.c.b16 %v892, %v888
    %v1165 = vpack.c.b16 %v893, %v889
    %v1166 = vpack.c.b16 %v894, %v890
    %v1167 = vpack.c.b16 %v895, %v891
    %v1168 = vpack.c.b16 %v900, %v896
    %v1169 = vpack.c.b16 %v901, %v897
    %v1170 = vpack.c.b16 %v902, %v898
    %v1171 = vpack.c.b16 %v903, %v899
    %v1172 = vpack.c.b16 %v908, %v904
    %v1173 = vpack.c.b16 %v909, %v905
    %v1174 = vpack.c.b16 %v910, %v906
    %v1175 = vpack.c.b16 %v911, %v907
    %v1176 = vpack.c.b16 %v916, %v912
    %v1177 = vpack.c.b16 %v917, %v913
    %v1178 = vpack.c.b16 %v918, %v914
    %v1179 = vpack.c.b16 %v919, %v915
    %v1180 = vpack.c.b16 %v924, %v920
    %v1181 = vpack.c.b16 %v925, %v921
    %v1182 = vpack.c.b16 %v926, %v922
    %v1183 = vpack.c.b16 %v927, %v923
    %v1184 = vpack.c.b16 %v932, %v928
    %v1185 = vpack.c.b16 %v933, %v929
    %v1186 = vpack.c.b16 %v934, %v930
    %v1187 = vpack.c.b16 %v935, %v931
    %v1188 = vpack.c.b16 %v940, %v936
    %v1189 = vpack.c.b16 %v941, %v937
    %v1190 = vpack.c.b16 %v942, %v938
    %v1191 = vpack.c.b16 %v943, %v939
    %v1192 = vpack.c.b16 %v948, %v944
    %v1193 = vpack.c.b16 %v949, %v945
    %v1194 = vpack.c.b16 %v950, %v946
    %v1195 = vpack.c.b16 %v951, %v947
    %v1196 = vpack.c.b16 %v956, %v952
    %v1197 = vpack.c.b16 %v957, %v953
    %v1198 = vpack.c.b16 %v958, %v954
    %v1199 = vpack.c.b16 %v959, %v955
    %v1200 = vpack.c.b16 %v964, %v960
    %v1201 = vpack.c.b16 %v965, %v961
    %v1202 = vpack.c.b16 %v966, %v962
    %v1203 = vpack.c.b16 %v967, %v963
    %v1204 = vpack.c.b16 %v972, %v968
    %v1205 = vpack.c.b16 %v973, %v969
    %v1206 = vpack.c.b16 %v974, %v970
    %v1207 = vpack.c.b16 %v975, %v971
    %v1208 = vpack.c.b16 %v980, %v976
    %v1209 = vpack.c.b16 %v981, %v977
    %v1210 = vpack.c.b16 %v982, %v978
    %v1211 = vpack.c.b16 %v983, %v979
    %v1212 = vpack.c.b16 %v988, %v984
    %v1213 = vpack.c.b16 %v989, %v985
    %v1214 = vpack.c.b16 %v990, %v986
    %v1215 = vpack.c.b16 %v991, %v987
    %1440 = vmatpush.bf16.msra.mxu0 %v1020
    %1441 = vmatpush.bf16.msra.mxu0 %v1016
    %1442 = vmatpush.bf16.msra.mxu0 %v1012
    %1443 = vmatpush.bf16.msra.mxu0 %v1008
    %1444 = vmatpush.bf16.msra.mxu0 %v1004
    %1445 = vmatpush.bf16.msra.mxu0 %v1000
    %1446 = vmatpush.bf16.msra.mxu0 %v996
    %1447 = vmatpush.bf16.msra.mxu0 %v992
    %1448 = vmatmul.bf16.gmra.mxu0 %v306
    %v1449 = vpop.f32.mrf.mxu0
    %v1450 = vadd.f32 %v276, %v1449
    %v1451 = vpop.f32.mrf.mxu0
    %v1452 = vadd.f32 %v276, %v1451
    %1453 = vdwg.mxu0
    %1454 = vmatpush.bf16.msra.mxu0 %v1052
    %1455 = vmatpush.bf16.msra.mxu0 %v1048
    %1456 = vmatpush.bf16.msra.mxu0 %v1044
    %1457 = vmatpush.bf16.msra.mxu0 %v1040
    %1458 = vmatpush.bf16.msra.mxu0 %v1036
    %1459 = vmatpush.bf16.msra.mxu0 %v1032
    %1460 = vmatpush.bf16.msra.mxu0 %v1028
    %1461 = vmatpush.bf16.msra.mxu0 %v1024
    %1462 = vmatmul.bf16.gmra.mxu0 %v307
    %v1463 = vpop.f32.mrf.mxu0
    %v1464 = vadd.f32 %v1450, %v1463
    %v1465 = vpop.f32.mrf.mxu0
    %v1466 = vadd.f32 %v1452, %v1465
    %1467 = vdwg.mxu0
    %1468 = vmatpush.bf16.msra.mxu0 %v1084
    %1469 = vmatpush.bf16.msra.mxu0 %v1080
    %1470 = vmatpush.bf16.msra.mxu0 %v1076
    %1471 = vmatpush.bf16.msra.mxu0 %v1072
    %1472 = vmatpush.bf16.msra.mxu0 %v1068
    %1473 = vmatpush.bf16.msra.mxu0 %v1064
    %1474 = vmatpush.bf16.msra.mxu0 %v1060
    %1475 = vmatpush.bf16.msra.mxu0 %v1056
    %1476 = vmatmul.bf16.gmra.mxu0 %v308
    %v1477 = vpop.f32.mrf.mxu0
    %v1478 = vadd.f32 %v1464, %v1477
    %v1479 = vpop.f32.mrf.mxu0
    %v1480 = vadd.f32 %v1466, %v1479
    %1481 = vdwg.mxu0
    %1482 = vmatpush.bf16.msra.mxu0 %v1116
    %1483 = vmatpush.bf16.msra.mxu0 %v1112
    %1484 = vmatpush.bf16.msra.mxu0 %v1108
    %1485 = vmatpush.bf16.msra.mxu0 %v1104
    %1486 = vmatpush.bf16.msra.mxu0 %v1100
    %1487 = vmatpush.bf16.msra.mxu0 %v1096
    %1488 = vmatpush.bf16.msra.mxu0 %v1092
    %1489 = vmatpush.bf16.msra.mxu0 %v1088
    %1490 = vmatmul.bf16.gmra.mxu0 %v309
    %v1491 = vpop.f32.mrf.mxu0
    %v1492 = vadd.f32 %v1478, %v1491
    %v1493 = vpop.f32.mrf.mxu0
    %v1494 = vadd.f32 %v1480, %v1493
    %1495 = vdwg.mxu0
    %1496 = vmatpush.bf16.msra.mxu0 %v1148
    %1497 = vmatpush.bf16.msra.mxu0 %v1144
    %1498 = vmatpush.bf16.msra.mxu0 %v1140
    %1499 = vmatpush.bf16.msra.mxu0 %v1136
    %1500 = vmatpush.bf16.msra.mxu0 %v1132
    %1501 = vmatpush.bf16.msra.mxu0 %v1128
    %1502 = vmatpush.bf16.msra.mxu0 %v1124
    %1503 = vmatpush.bf16.msra.mxu0 %v1120
    %1504 = vmatmul.bf16.gmra.mxu0 %v310
    %v1505 = vpop.f32.mrf.mxu0
    %v1506 = vadd.f32 %v1492, %v1505
    %v1507 = vpop.f32.mrf.mxu0
    %v1508 = vadd.f32 %v1494, %v1507
    %1509 = vdwg.mxu0
    %1510 = vmatpush.bf16.msra.mxu0 %v1180
    %1511 = vmatpush.bf16.msra.mxu0 %v1176
    %1512 = vmatpush.bf16.msra.mxu0 %v1172
    %1513 = vmatpush.bf16.msra.mxu0 %v1168
    %1514 = vmatpush.bf16.msra.mxu0 %v1164
    %1515 = vmatpush.bf16.msra.mxu0 %v1160
    %1516 = vmatpush.bf16.msra.mxu0 %v1156
    %1517 = vmatpush.bf16.msra.mxu0 %v1152
    %1518 = vmatmul.bf16.gmra.mxu0 %v311
    %v1519 = vpop.f32.mrf.mxu0
    %v1520 = vadd.f32 %v1506, %v1519
    %v1521 = vpop.f32.mrf.mxu0
    %v1522 = vadd.f32 %v1508, %v1521
    %1523 = vdwg.mxu0
    %1524 = vmatpush.bf16.msra.mxu0 %v1212
    %1525 = vmatpush.bf16.msra.mxu0 %v1208
    %1526 = vmatpush.bf16.msra.mxu0 %v1204
    %1527 = vmatpush.bf16.msra.mxu0 %v1200
    %1528 = vmatpush.bf16.msra.mxu0 %v1196
    %1529 = vmatpush.bf16.msra.mxu0 %v1192
    %1530 = vmatpush.bf16.msra.mxu0 %v1188
    %1531 = vmatpush.bf16.msra.mxu0 %v1184
    %1532 = vmatmul.bf16.gmra.mxu0 %v312
    %v1533 = vpop.f32.mrf.mxu0
    %v1534 = vadd.f32 %v1520, %v1533
    %v1535 = vpop.f32.mrf.mxu0
    %v1536 = vadd.f32 %v1522, %v1535
    %1537 = vdwg.mxu0
    %1538 = vmatpush.bf16.msra.mxu0 %v1021
    %1539 = vmatpush.bf16.msra.mxu0 %v1017
    %1540 = vmatpush.bf16.msra.mxu0 %v1013
    %1541 = vmatpush.bf16.msra.mxu0 %v1009
    %1542 = vmatpush.bf16.msra.mxu0 %v1005
    %1543 = vmatpush.bf16.msra.mxu0 %v1001
    %1544 = vmatpush.bf16.msra.mxu0 %v997
    %1545 = vmatpush.bf16.msra.mxu0 %v993
    %1546 = vmatmul.bf16.gmra.mxu0 %v306
    %v1547 = vpop.f32.mrf.mxu0
    %v1548 = vadd.f32 %v277, %v1547
    %v1549 = vpop.f32.mrf.mxu0
    %v1550 = vadd.f32 %v277, %v1549
    %1551 = vdwg.mxu0
    %1552 = vmatpush.bf16.msra.mxu0 %v1053
    %1553 = vmatpush.bf16.msra.mxu0 %v1049
    %1554 = vmatpush.bf16.msra.mxu0 %v1045
    %1555 = vmatpush.bf16.msra.mxu0 %v1041
    %1556 = vmatpush.bf16.msra.mxu0 %v1037
    %1557 = vmatpush.bf16.msra.mxu0 %v1033
    %1558 = vmatpush.bf16.msra.mxu0 %v1029
    %1559 = vmatpush.bf16.msra.mxu0 %v1025
    %1560 = vmatmul.bf16.gmra.mxu0 %v307
    %v1561 = vpop.f32.mrf.mxu0
    %v1562 = vadd.f32 %v1548, %v1561
    %v1563 = vpop.f32.mrf.mxu0
    %v1564 = vadd.f32 %v1550, %v1563
    %1565 = vdwg.mxu0
    %1566 = vmatpush.bf16.msra.mxu0 %v1085
    %1567 = vmatpush.bf16.msra.mxu0 %v1081
    %1568 = vmatpush.bf16.msra.mxu0 %v1077
    %1569 = vmatpush.bf16.msra.mxu0 %v1073
    %1570 = vmatpush.bf16.msra.mxu0 %v1069
    %1571 = vmatpush.bf16.msra.mxu0 %v1065
    %1572 = vmatpush.bf16.msra.mxu0 %v1061
    %1573 = vmatpush.bf16.msra.mxu0 %v1057
    %1574 = vmatmul.bf16.gmra.mxu0 %v308
    %v1575 = vpop.f32.mrf.mxu0
    %v1576 = vadd.f32 %v1562, %v1575
    %v1577 = vpop.f32.mrf.mxu0
    %v1578 = vadd.f32 %v1564, %v1577
    %1579 = vdwg.mxu0
    %1580 = vmatpush.bf16.msra.mxu0 %v1117
    %1581 = vmatpush.bf16.msra.mxu0 %v1113
    %1582 = vmatpush.bf16.msra.mxu0 %v1109
    %1583 = vmatpush.bf16.msra.mxu0 %v1105
    %1584 = vmatpush.bf16.msra.mxu0 %v1101
    %1585 = vmatpush.bf16.msra.mxu0 %v1097
    %1586 = vmatpush.bf16.msra.mxu0 %v1093
    %1587 = vmatpush.bf16.msra.mxu0 %v1089
    %1588 = vmatmul.bf16.gmra.mxu0 %v309
    %v1589 = vpop.f32.mrf.mxu0
    %v1590 = vadd.f32 %v1576, %v1589
    %v1591 = vpop.f32.mrf.mxu0
    %v1592 = vadd.f32 %v1578, %v1591
    %1593 = vdwg.mxu0
    %1594 = vmatpush.bf16.msra.mxu0 %v1149
    %1595 = vmatpush.bf16.msra.mxu0 %v1145
    %1596 = vmatpush.bf16.msra.mxu0 %v1141
    %1597 = vmatpush.bf16.msra.mxu0 %v1137
    %1598 = vmatpush.bf16.msra.mxu0 %v1133
    %1599 = vmatpush.bf16.msra.mxu0 %v1129
    %1600 = vmatpush.bf16.msra.mxu0 %v1125
    %1601 = vmatpush.bf16.msra.mxu0 %v1121
    %1602 = vmatmul.bf16.gmra.mxu0 %v310
    %v1603 = vpop.f32.mrf.mxu0
    %v1604 = vadd.f32 %v1590, %v1603
    %v1605 = vpop.f32.mrf.mxu0
    %v1606 = vadd.f32 %v1592, %v1605
    %1607 = vdwg.mxu0
    %1608 = vmatpush.bf16.msra.mxu0 %v1181
    %1609 = vmatpush.bf16.msra.mxu0 %v1177
    %1610 = vmatpush.bf16.msra.mxu0 %v1173
    %1611 = vmatpush.bf16.msra.mxu0 %v1169
    %1612 = vmatpush.bf16.msra.mxu0 %v1165
    %1613 = vmatpush.bf16.msra.mxu0 %v1161
    %1614 = vmatpush.bf16.msra.mxu0 %v1157
    %1615 = vmatpush.bf16.msra.mxu0 %v1153
    %1616 = vmatmul.bf16.gmra.mxu0 %v311
    %v1617 = vpop.f32.mrf.mxu0
    %v1618 = vadd.f32 %v1604, %v1617
    %v1619 = vpop.f32.mrf.mxu0
    %v1620 = vadd.f32 %v1606, %v1619
    %1621 = vdwg.mxu0
    %1622 = vmatpush.bf16.msra.mxu0 %v1213
    %1623 = vmatpush.bf16.msra.mxu0 %v1209
    %1624 = vmatpush.bf16.msra.mxu0 %v1205
    %1625 = vmatpush.bf16.msra.mxu0 %v1201
    %1626 = vmatpush.bf16.msra.mxu0 %v1197
    %1627 = vmatpush.bf16.msra.mxu0 %v1193
    %1628 = vmatpush.bf16.msra.mxu0 %v1189
    %1629 = vmatpush.bf16.msra.mxu0 %v1185
    %1630 = vmatmul.bf16.gmra.mxu0 %v312
    %v1631 = vpop.f32.mrf.mxu0
    %v1632 = vadd.f32 %v1618, %v1631
    %v1633 = vpop.f32.mrf.mxu0
    %v1634 = vadd.f32 %v1620, %v1633
    %1635 = vdwg.mxu0
    %1636 = vmatpush.bf16.msra.mxu0 %v1022
    %1637 = vmatpush.bf16.msra.mxu0 %v1018
    %1638 = vmatpush.bf16.msra.mxu0 %v1014
    %1639 = vmatpush.bf16.msra.mxu0 %v1010
    %1640 = vmatpush.bf16.msra.mxu0 %v1006
    %1641 = vmatpush.bf16.msra.mxu0 %v1002
    %1642 = vmatpush.bf16.msra.mxu0 %v998
    %1643 = vmatpush.bf16.msra.mxu0 %v994
    %1644 = vmatmul.bf16.gmra.mxu0 %v306
    %v1645 = vpop.f32.mrf.mxu0
    %v1646 = vadd.f32 %v278, %v1645
    %v1647 = vpop.f32.mrf.mxu0
    %v1648 = vadd.f32 %v278, %v1647
    %1649 = vdwg.mxu0
    %1650 = vmatpush.bf16.msra.mxu0 %v1054
    %1651 = vmatpush.bf16.msra.mxu0 %v1050
    %1652 = vmatpush.bf16.msra.mxu0 %v1046
    %1653 = vmatpush.bf16.msra.mxu0 %v1042
    %1654 = vmatpush.bf16.msra.mxu0 %v1038
    %1655 = vmatpush.bf16.msra.mxu0 %v1034
    %1656 = vmatpush.bf16.msra.mxu0 %v1030
    %1657 = vmatpush.bf16.msra.mxu0 %v1026
    %1658 = vmatmul.bf16.gmra.mxu0 %v307
    %v1659 = vpop.f32.mrf.mxu0
    %v1660 = vadd.f32 %v1646, %v1659
    %v1661 = vpop.f32.mrf.mxu0
    %v1662 = vadd.f32 %v1648, %v1661
    %1663 = vdwg.mxu0
    %1664 = vmatpush.bf16.msra.mxu0 %v1086
    %1665 = vmatpush.bf16.msra.mxu0 %v1082
    %1666 = vmatpush.bf16.msra.mxu0 %v1078
    %1667 = vmatpush.bf16.msra.mxu0 %v1074
    %1668 = vmatpush.bf16.msra.mxu0 %v1070
    %1669 = vmatpush.bf16.msra.mxu0 %v1066
    %1670 = vmatpush.bf16.msra.mxu0 %v1062
    %1671 = vmatpush.bf16.msra.mxu0 %v1058
    %1672 = vmatmul.bf16.gmra.mxu0 %v308
    %v1673 = vpop.f32.mrf.mxu0
    %v1674 = vadd.f32 %v1660, %v1673
    %v1675 = vpop.f32.mrf.mxu0
    %v1676 = vadd.f32 %v1662, %v1675
    %1677 = vdwg.mxu0
    %1678 = vmatpush.bf16.msra.mxu0 %v1118
    %1679 = vmatpush.bf16.msra.mxu0 %v1114
    %1680 = vmatpush.bf16.msra.mxu0 %v1110
    %1681 = vmatpush.bf16.msra.mxu0 %v1106
    %1682 = vmatpush.bf16.msra.mxu0 %v1102
    %1683 = vmatpush.bf16.msra.mxu0 %v1098
    %1684 = vmatpush.bf16.msra.mxu0 %v1094
    %1685 = vmatpush.bf16.msra.mxu0 %v1090
    %1686 = vmatmul.bf16.gmra.mxu0 %v309
    %v1687 = vpop.f32.mrf.mxu0
    %v1688 = vadd.f32 %v1674, %v1687
    %v1689 = vpop.f32.mrf.mxu0
    %v1690 = vadd.f32 %v1676, %v1689
    %1691 = vdwg.mxu0
    %1692 = vmatpush.bf16.msra.mxu0 %v1150
    %1693 = vmatpush.bf16.msra.mxu0 %v1146
    %1694 = vmatpush.bf16.msra.mxu0 %v1142
    %1695 = vmatpush.bf16.msra.mxu0 %v1138
    %1696 = vmatpush.bf16.msra.mxu0 %v1134
    %1697 = vmatpush.bf16.msra.mxu0 %v1130
    %1698 = vmatpush.bf16.msra.mxu0 %v1126
    %1699 = vmatpush.bf16.msra.mxu0 %v1122
    %1700 = vmatmul.bf16.gmra.mxu0 %v310
    %v1701 = vpop.f32.mrf.mxu0
    %v1702 = vadd.f32 %v1688, %v1701
    %v1703 = vpop.f32.mrf.mxu0
    %v1704 = vadd.f32 %v1690, %v1703
    %1705 = vdwg.mxu0
    %1706 = vmatpush.bf16.msra.mxu0 %v1182
    %1707 = vmatpush.bf16.msra.mxu0 %v1178
    %1708 = vmatpush.bf16.msra.mxu0 %v1174
    %1709 = vmatpush.bf16.msra.mxu0 %v1170
    %1710 = vmatpush.bf16.msra.mxu0 %v1166
    %1711 = vmatpush.bf16.msra.mxu0 %v1162
    %1712 = vmatpush.bf16.msra.mxu0 %v1158
    %1713 = vmatpush.bf16.msra.mxu0 %v1154
    %1714 = vmatmul.bf16.gmra.mxu0 %v311
    %v1715 = vpop.f32.mrf.mxu0
    %v1716 = vadd.f32 %v1702, %v1715
    %v1717 = vpop.f32.mrf.mxu0
    %v1718 = vadd.f32 %v1704, %v1717
    %1719 = vdwg.mxu0
    %1720 = vmatpush.bf16.msra.mxu0 %v1214
    %1721 = vmatpush.bf16.msra.mxu0 %v1210
    %1722 = vmatpush.bf16.msra.mxu0 %v1206
    %1723 = vmatpush.bf16.msra.mxu0 %v1202
    %1724 = vmatpush.bf16.msra.mxu0 %v1198
    %1725 = vmatpush.bf16.msra.mxu0 %v1194
    %1726 = vmatpush.bf16.msra.mxu0 %v1190
    %1727 = vmatpush.bf16.msra.mxu0 %v1186
    %1728 = vmatmul.bf16.gmra.mxu0 %v312
    %v1729 = vpop.f32.mrf.mxu0
    %v1730 = vadd.f32 %v1716, %v1729
    %v1731 = vpop.f32.mrf.mxu0
    %v1732 = vadd.f32 %v1718, %v1731
    %1733 = vdwg.mxu0
    %1734 = vmatpush.bf16.msra.mxu0 %v1023
    %1735 = vmatpush.bf16.msra.mxu0 %v1019
    %1736 = vmatpush.bf16.msra.mxu0 %v1015
    %1737 = vmatpush.bf16.msra.mxu0 %v1011
    %1738 = vmatpush.bf16.msra.mxu0 %v1007
    %1739 = vmatpush.bf16.msra.mxu0 %v1003
    %1740 = vmatpush.bf16.msra.mxu0 %v999
    %1741 = vmatpush.bf16.msra.mxu0 %v995
    %1742 = vmatmul.bf16.gmra.mxu0 %v306
    %v1743 = vpop.f32.mrf.mxu0
    %v1744 = vadd.f32 %v279, %v1743
    %v1745 = vpop.f32.mrf.mxu0
    %v1746 = vadd.f32 %v279, %v1745
    %1747 = vdwg.mxu0
    %1748 = vmatpush.bf16.msra.mxu0 %v1055
    %1749 = vmatpush.bf16.msra.mxu0 %v1051
    %1750 = vmatpush.bf16.msra.mxu0 %v1047
    %1751 = vmatpush.bf16.msra.mxu0 %v1043
    %1752 = vmatpush.bf16.msra.mxu0 %v1039
    %1753 = vmatpush.bf16.msra.mxu0 %v1035
    %1754 = vmatpush.bf16.msra.mxu0 %v1031
    %1755 = vmatpush.bf16.msra.mxu0 %v1027
    %1756 = vmatmul.bf16.gmra.mxu0 %v307
    %v1757 = vpop.f32.mrf.mxu0
    %v1758 = vadd.f32 %v1744, %v1757
    %v1759 = vpop.f32.mrf.mxu0
    %v1760 = vadd.f32 %v1746, %v1759
    %1761 = vdwg.mxu0
    %1762 = vmatpush.bf16.msra.mxu0 %v1087
    %1763 = vmatpush.bf16.msra.mxu0 %v1083
    %1764 = vmatpush.bf16.msra.mxu0 %v1079
    %1765 = vmatpush.bf16.msra.mxu0 %v1075
    %1766 = vmatpush.bf16.msra.mxu0 %v1071
    %1767 = vmatpush.bf16.msra.mxu0 %v1067
    %1768 = vmatpush.bf16.msra.mxu0 %v1063
    %1769 = vmatpush.bf16.msra.mxu0 %v1059
    %1770 = vmatmul.bf16.gmra.mxu0 %v308
    %v1771 = vpop.f32.mrf.mxu0
    %v1772 = vadd.f32 %v1758, %v1771
    %v1773 = vpop.f32.mrf.mxu0
    %v1774 = vadd.f32 %v1760, %v1773
    %1775 = vdwg.mxu0
    %1776 = vmatpush.bf16.msra.mxu0 %v1119
    %1777 = vmatpush.bf16.msra.mxu0 %v1115
    %1778 = vmatpush.bf16.msra.mxu0 %v1111
    %1779 = vmatpush.bf16.msra.mxu0 %v1107
    %1780 = vmatpush.bf16.msra.mxu0 %v1103
    %1781 = vmatpush.bf16.msra.mxu0 %v1099
    %1782 = vmatpush.bf16.msra.mxu0 %v1095
    %1783 = vmatpush.bf16.msra.mxu0 %v1091
    %1784 = vmatmul.bf16.gmra.mxu0 %v309
    %v1785 = vpop.f32.mrf.mxu0
    %v1786 = vadd.f32 %v1772, %v1785
    %v1787 = vpop.f32.mrf.mxu0
    %v1788 = vadd.f32 %v1774, %v1787
    %1789 = vdwg.mxu0
    %1790 = vmatpush.bf16.msra.mxu0 %v1151
    %1791 = vmatpush.bf16.msra.mxu0 %v1147
    %1792 = vmatpush.bf16.msra.mxu0 %v1143
    %1793 = vmatpush.bf16.msra.mxu0 %v1139
    %1794 = vmatpush.bf16.msra.mxu0 %v1135
    %1795 = vmatpush.bf16.msra.mxu0 %v1131
    %1796 = vmatpush.bf16.msra.mxu0 %v1127
    %1797 = vmatpush.bf16.msra.mxu0 %v1123
    %1798 = vmatmul.bf16.gmra.mxu0 %v310
    %v1799 = vpop.f32.mrf.mxu0
    %v1800 = vadd.f32 %v1786, %v1799
    %v1801 = vpop.f32.mrf.mxu0
    %v1802 = vadd.f32 %v1788, %v1801
    %1803 = vdwg.mxu0
    %1804 = vmatpush.bf16.msra.mxu0 %v1183
    %1805 = vmatpush.bf16.msra.mxu0 %v1179
    %1806 = vmatpush.bf16.msra.mxu0 %v1175
    %1807 = vmatpush.bf16.msra.mxu0 %v1171
    %1808 = vmatpush.bf16.msra.mxu0 %v1167
    %1809 = vmatpush.bf16.msra.mxu0 %v1163
    %1810 = vmatpush.bf16.msra.mxu0 %v1159
    %1811 = vmatpush.bf16.msra.mxu0 %v1155
    %1812 = vmatmul.bf16.gmra.mxu0 %v311
    %v1813 = vpop.f32.mrf.mxu0
    %v1814 = vadd.f32 %v1800, %v1813
    %v1815 = vpop.f32.mrf.mxu0
    %v1816 = vadd.f32 %v1802, %v1815
    %1817 = vdwg.mxu0
    %1818 = vmatpush.bf16.msra.mxu0 %v1215
    %1819 = vmatpush.bf16.msra.mxu0 %v1211
    %1820 = vmatpush.bf16.msra.mxu0 %v1207
    %1821 = vmatpush.bf16.msra.mxu0 %v1203
    %1822 = vmatpush.bf16.msra.mxu0 %v1199
    %1823 = vmatpush.bf16.msra.mxu0 %v1195
    %1824 = vmatpush.bf16.msra.mxu0 %v1191
    %1825 = vmatpush.bf16.msra.mxu0 %v1187
    %1826 = vmatmul.bf16.gmra.mxu0 %v312
    %v1827 = vpop.f32.mrf.mxu0
    %v1828 = vadd.f32 %v1814, %v1827
    %v1829 = vpop.f32.mrf.mxu0
    %v1830 = vadd.f32 %v1816, %v1829
    %1831 = vdwg.mxu0
    %v1832 = vmax.f32 %v1534, 0.0
    %v1833 = vmax.f32 %v1632, 0.0
    %v1834 = vmax.f32 %v1730, 0.0
    %v1835 = vmax.f32 %v1828, 0.0
    %v1836 = vmax.f32 %v1536, 0.0
    %v1837 = vmax.f32 %v1634, 0.0
    %v1838 = vmax.f32 %v1732, 0.0
    %v1839 = vmax.f32 %v1830, 0.0
    %v1840 = vpack.c.bf16 %v1836, %v1832
    %v1841 = vpack.c.bf16 %v1837, %v1833
    %v1842 = vpack.c.bf16 %v1838, %v1834
    %v1843 = vpack.c.bf16 %v1839, %v1835
    %v1844 = vld [vmem:[%s3] sm:$0xff]
    %v1845 = vld [vmem:[%s3 + $0x8] sm:$0xff]
    %v1846 = vld [vmem:[%s3 + $0x10] sm:$0xff]
    %v1847 = vld [vmem:[%s3 + $0x18] sm:$0xff]
    %v1848 = vld [vmem:[%s3 + $0x20] sm:$0xff]
    %v1849 = vld [vmem:[%s3 + $0x28] sm:$0xff]
    %v1850 = vld [vmem:[%s3 + $0x30] sm:$0xff]
    %v1851 = vld [vmem:[%s3 + $0x38] sm:$0xff]
    %v1852 = vld [vmem:[%s3 + $0x40] sm:$0xff]
    %v1853 = vld [vmem:[%s3 + $0x48] sm:$0xff]
    %v1854 = vld [vmem:[%s3 + $0x50] sm:$0xff]
    %v1855 = vld [vmem:[%s3 + $0x58] sm:$0xff]
    %v1856 = vld [vmem:[%s3 + $0x60] sm:$0xff]
    %v1857 = vld [vmem:[%s3 + $0x68] sm:$0xff]
    %v1858 = vld [vmem:[%s3 + $0x70] sm:$0xff]
    %v1859 = vld [vmem:[%s3 + $0x78] sm:$0xff]
    %v1860 = vld [vmem:[%s3 + $0x80] sm:$0xff]
    %v1861 = vld [vmem:[%s3 + $0x88] sm:$0xff]
    %v1862 = vld [vmem:[%s3 + $0x90] sm:$0xff]
    %v1863 = vld [vmem:[%s3 + $0x98] sm:$0xff]
    %v1864 = vld [vmem:[%s3 + $0xa0] sm:$0xff]
    %v1865 = vld [vmem:[%s3 + $0xa8] sm:$0xff]
    %v1866 = vld [vmem:[%s3 + $0xb0] sm:$0xff]
    %v1867 = vld [vmem:[%s3 + $0xb8] sm:$0xff]
    %v1868 = vld [vmem:[%s3 + $0xc0] sm:$0xff]
    %v1869 = vld [vmem:[%s3 + $0xc8] sm:$0xff]
    %v1870 = vld [vmem:[%s3 + $0xd0] sm:$0xff]
    %v1871 = vld [vmem:[%s3 + $0xd8] sm:$0xff]
    %v1872 = vld [vmem:[%s3 + $0xe0] sm:$0xff]
    %v1873 = vld [vmem:[%s3 + $0xe8] sm:$0xff]
    %v1874 = vld [vmem:[%s3 + $0xf0] sm:$0xff]
    %v1875 = vld [vmem:[%s3 + $0xf8] sm:$0xff]
    %v1876 = vld [vmem:[%s3 + $0x100] sm:$0xff]
    %v1877 = vld [vmem:[%s3 + $0x108] sm:$0xff]
    %v1878 = vld [vmem:[%s3 + $0x110] sm:$0xff]
    %v1879 = vld [vmem:[%s3 + $0x118] sm:$0xff]
    %v1880 = vld [vmem:[%s3 + $0x120] sm:$0xff]
    %v1881 = vld [vmem:[%s3 + $0x128] sm:$0xff]
    %v1882 = vld [vmem:[%s3 + $0x130] sm:$0xff]
    %v1883 = vld [vmem:[%s3 + $0x138] sm:$0xff]
    %v1884 = vld [vmem:[%s3 + $0x140] sm:$0xff]
    %v1885 = vld [vmem:[%s3 + $0x148] sm:$0xff]
    %v1886 = vld [vmem:[%s3 + $0x150] sm:$0xff]
    %v1887 = vld [vmem:[%s3 + $0x158] sm:$0xff]
    %v1888 = vld [vmem:[%s3 + $0x160] sm:$0xff]
    %v1889 = vld [vmem:[%s3 + $0x168] sm:$0xff]
    %v1890 = vld [vmem:[%s3 + $0x170] sm:$0xff]
    %v1891 = vld [vmem:[%s3 + $0x178] sm:$0xff]
    %v1892 = vld [vmem:[%s3 + $0x180] sm:$0xff]
    %v1893 = vld [vmem:[%s3 + $0x188] sm:$0xff]
    %v1894 = vld [vmem:[%s3 + $0x190] sm:$0xff]
    %v1895 = vld [vmem:[%s3 + $0x198] sm:$0xff]
    %v1896 = vld [vmem:[%s3 + $0x1a0] sm:$0xff]
    %v1897 = vld [vmem:[%s3 + $0x1a8] sm:$0xff]
    %v1898 = vld [vmem:[%s3 + $0x1b0] sm:$0xff]
    %v1899 = vld [vmem:[%s3 + $0x1b8] sm:$0xff]
    %v1900 = vld [vmem:[%s3 + $0x1c0] sm:$0xff]
    %v1901 = vld [vmem:[%s3 + $0x1c8] sm:$0xff]
    %v1902 = vld [vmem:[%s3 + $0x1d0] sm:$0xff]
    %v1903 = vld [vmem:[%s3 + $0x1d8] sm:$0xff]
    %v1904 = vld [vmem:[%s3 + $0x1e0] sm:$0xff]
    %v1905 = vld [vmem:[%s3 + $0x1e8] sm:$0xff]
    %v1906 = vld [vmem:[%s3 + $0x1f0] sm:$0xff]
    %v1907 = vld [vmem:[%s3 + $0x1f8] sm:$0xff]
    %v1908 = vld [vmem:[%s3 + $0x200] sm:$0xff]
    %v1909 = vld [vmem:[%s3 + $0x208] sm:$0xff]
    %v1910 = vld [vmem:[%s3 + $0x210] sm:$0xff]
    %v1911 = vld [vmem:[%s3 + $0x218] sm:$0xff]
    %v1912 = vld [vmem:[%s3 + $0x220] sm:$0xff]
    %v1913 = vld [vmem:[%s3 + $0x228] sm:$0xff]
    %v1914 = vld [vmem:[%s3 + $0x230] sm:$0xff]
    %v1915 = vld [vmem:[%s3 + $0x238] sm:$0xff]
    %v1916 = vld [vmem:[%s3 + $0x240] sm:$0xff]
    %v1917 = vld [vmem:[%s3 + $0x248] sm:$0xff]
    %v1918 = vld [vmem:[%s3 + $0x250] sm:$0xff]
    %v1919 = vld [vmem:[%s3 + $0x258] sm:$0xff]
    %v1920 = vld [vmem:[%s3 + $0x260] sm:$0xff]
    %v1921 = vld [vmem:[%s3 + $0x268] sm:$0xff]
    %v1922 = vld [vmem:[%s3 + $0x270] sm:$0xff]
    %v1923 = vld [vmem:[%s3 + $0x278] sm:$0xff]
    %v1924 = vld [vmem:[%s3 + $0x280] sm:$0xff]
    %v1925 = vld [vmem:[%s3 + $0x288] sm:$0xff]
    %v1926 = vld [vmem:[%s3 + $0x290] sm:$0xff]
    %v1927 = vld [vmem:[%s3 + $0x298] sm:$0xff]
    %v1928 = vld [vmem:[%s3 + $0x2a0] sm:$0xff]
    %v1929 = vld [vmem:[%s3 + $0x2a8] sm:$0xff]
    %v1930 = vld [vmem:[%s3 + $0x2b0] sm:$0xff]
    %v1931 = vld [vmem:[%s3 + $0x2b8] sm:$0xff]
    %v1932 = vld [vmem:[%s3 + $0x2c0] sm:$0xff]
    %v1933 = vld [vmem:[%s3 + $0x2c8] sm:$0xff]
    %v1934 = vld [vmem:[%s3 + $0x2d0] sm:$0xff]
    %v1935 = vld [vmem:[%s3 + $0x2d8] sm:$0xff]
    %v1936 = vld [vmem:[%s3 + $0x2e0] sm:$0xff]
    %v1937 = vld [vmem:[%s3 + $0x2e8] sm:$0xff]
    %v1938 = vld [vmem:[%s3 + $0x2f0] sm:$0xff]
    %v1939 = vld [vmem:[%s3 + $0x2f8] sm:$0xff]
    %v1940 = vld [vmem:[%s3 + $0x300] sm:$0xff]
    %v1941 = vld [vmem:[%s3 + $0x308] sm:$0xff]
    %v1942 = vld [vmem:[%s3 + $0x310] sm:$0xff]
    %v1943 = vld [vmem:[%s3 + $0x318] sm:$0xff]
    %v1944 = vld [vmem:[%s3 + $0x320] sm:$0xff]
    %v1945 = vld [vmem:[%s3 + $0x328] sm:$0xff]
    %v1946 = vld [vmem:[%s3 + $0x330] sm:$0xff]
    %v1947 = vld [vmem:[%s3 + $0x338] sm:$0xff]
    %v1948 = vld [vmem:[%s3 + $0x340] sm:$0xff]
    %v1949 = vld [vmem:[%s3 + $0x348] sm:$0xff]
    %v1950 = vld [vmem:[%s3 + $0x350] sm:$0xff]
    %v1951 = vld [vmem:[%s3 + $0x358] sm:$0xff]
    %v1952 = vld [vmem:[%s3 + $0x360] sm:$0xff]
    %v1953 = vld [vmem:[%s3 + $0x368] sm:$0xff]
    %v1954 = vld [vmem:[%s3 + $0x370] sm:$0xff]
    %v1955 = vld [vmem:[%s3 + $0x378] sm:$0xff]
    %v1956 = vld [vmem:[%s3 + $0x380] sm:$0xff]
    %v1957 = vld [vmem:[%s3 + $0x388] sm:$0xff]
    %v1958 = vld [vmem:[%s3 + $0x390] sm:$0xff]
    %v1959 = vld [vmem:[%s3 + $0x398] sm:$0xff]
    %v1960 = vld [vmem:[%s3 + $0x3a0] sm:$0xff]
    %v1961 = vld [vmem:[%s3 + $0x3a8] sm:$0xff]
    %v1962 = vld [vmem:[%s3 + $0x3b0] sm:$0xff]
    %v1963 = vld [vmem:[%s3 + $0x3b8] sm:$0xff]
    %v1964 = vld [vmem:[%s3 + $0x3c0] sm:$0xff]
    %v1965 = vld [vmem:[%s3 + $0x3c8] sm:$0xff]
    %v1966 = vld [vmem:[%s3 + $0x3d0] sm:$0xff]
    %v1967 = vld [vmem:[%s3 + $0x3d8] sm:$0xff]
    %v1968 = vld [vmem:[%s3 + $0x3e0] sm:$0xff]
    %v1969 = vld [vmem:[%s3 + $0x3e8] sm:$0xff]
    %v1970 = vld [vmem:[%s3 + $0x3f0] sm:$0xff]
    %v1971 = vld [vmem:[%s3 + $0x3f8] sm:$0xff]
    %v1972 = vld [vmem:[%s4] sm:$0xf]
    %v1974 = vperm.slane %v1972, 0
    %v1975 = vperm.slane %v1972, 1
    %v1976 = vperm.slane %v1972, 2
    %v1977 = vperm.slane %v1972, 3
    %v2110 = vunpack.c.l.b16 %v1844
    %v2111 = vunpack.c.h.b16 %v1844
    %v2112 = vunpack.c.l.b16 %v1845
    %v2113 = vunpack.c.h.b16 %v1845
    %v2114 = vunpack.c.l.b16 %v1846
    %v2115 = vunpack.c.h.b16 %v1846
    %v2116 = vunpack.c.l.b16 %v1847
    %v2117 = vunpack.c.h.b16 %v1847
    %v2118 = vunpack.c.l.b16 %v1848
    %v2119 = vunpack.c.h.b16 %v1848
    %v2120 = vunpack.c.l.b16 %v1849
    %v2121 = vunpack.c.h.b16 %v1849
    %v2122 = vunpack.c.l.b16 %v1850
    %v2123 = vunpack.c.h.b16 %v1850
    %v2124 = vunpack.c.l.b16 %v1851
    %v2125 = vunpack.c.h.b16 %v1851
    %v2126 = vunpack.c.l.b16 %v1852
    %v2127 = vunpack.c.h.b16 %v1852
    %v2128 = vunpack.c.l.b16 %v1853
    %v2129 = vunpack.c.h.b16 %v1853
    %v2130 = vunpack.c.l.b16 %v1854
    %v2131 = vunpack.c.h.b16 %v1854
    %v2132 = vunpack.c.l.b16 %v1855
    %v2133 = vunpack.c.h.b16 %v1855
    %v2134 = vunpack.c.l.b16 %v1856
    %v2135 = vunpack.c.h.b16 %v1856
    %v2136 = vunpack.c.l.b16 %v1857
    %v2137 = vunpack.c.h.b16 %v1857
    %v2138 = vunpack.c.l.b16 %v1858
    %v2139 = vunpack.c.h.b16 %v1858
    %v2140 = vunpack.c.l.b16 %v1859
    %v2141 = vunpack.c.h.b16 %v1859
    %v2142 = vunpack.c.l.b16 %v1860
    %v2143 = vunpack.c.h.b16 %v1860
    %v2144 = vunpack.c.l.b16 %v1861
    %v2145 = vunpack.c.h.b16 %v1861
    %v2146 = vunpack.c.l.b16 %v1862
    %v2147 = vunpack.c.h.b16 %v1862
    %v2148 = vunpack.c.l.b16 %v1863
    %v2149 = vunpack.c.h.b16 %v1863
    %v2150 = vunpack.c.l.b16 %v1864
    %v2151 = vunpack.c.h.b16 %v1864
    %v2152 = vunpack.c.l.b16 %v1865
    %v2153 = vunpack.c.h.b16 %v1865
    %v2154 = vunpack.c.l.b16 %v1866
    %v2155 = vunpack.c.h.b16 %v1866
    %v2156 = vunpack.c.l.b16 %v1867
    %v2157 = vunpack.c.h.b16 %v1867
    %v2158 = vunpack.c.l.b16 %v1868
    %v2159 = vunpack.c.h.b16 %v1868
    %v2160 = vunpack.c.l.b16 %v1869
    %v2161 = vunpack.c.h.b16 %v1869
    %v2162 = vunpack.c.l.b16 %v1870
    %v2163 = vunpack.c.h.b16 %v1870
    %v2164 = vunpack.c.l.b16 %v1871
    %v2165 = vunpack.c.h.b16 %v1871
    %v2166 = vunpack.c.l.b16 %v1872
    %v2167 = vunpack.c.h.b16 %v1872
    %v2168 = vunpack.c.l.b16 %v1873
    %v2169 = vunpack.c.h.b16 %v1873
    %v2170 = vunpack.c.l.b16 %v1874
    %v2171 = vunpack.c.h.b16 %v1874
    %v2172 = vunpack.c.l.b16 %v1875
    %v2173 = vunpack.c.h.b16 %v1875
    %v2174 = vunpack.c.l.b16 %v1876
    %v2175 = vunpack.c.h.b16 %v1876
    %v2176 = vunpack.c.l.b16 %v1877
    %v2177 = vunpack.c.h.b16 %v1877
    %v2178 = vunpack.c.l.b16 %v1878
    %v2179 = vunpack.c.h.b16 %v1878
    %v2180 = vunpack.c.l.b16 %v1879
    %v2181 = vunpack.c.h.b16 %v1879
    %v2182 = vunpack.c.l.b16 %v1880
    %v2183 = vunpack.c.h.b16 %v1880
    %v2184 = vunpack.c.l.b16 %v1881
    %v2185 = vunpack.c.h.b16 %v1881
    %v2186 = vunpack.c.l.b16 %v1882
    %v2187 = vunpack.c.h.b16 %v1882
    %v2188 = vunpack.c.l.b16 %v1883
    %v2189 = vunpack.c.h.b16 %v1883
    %v2190 = vunpack.c.l.b16 %v1884
    %v2191 = vunpack.c.h.b16 %v1884
    %v2192 = vunpack.c.l.b16 %v1885
    %v2193 = vunpack.c.h.b16 %v1885
    %v2194 = vunpack.c.l.b16 %v1886
    %v2195 = vunpack.c.h.b16 %v1886
    %v2196 = vunpack.c.l.b16 %v1887
    %v2197 = vunpack.c.h.b16 %v1887
    %v2198 = vunpack.c.l.b16 %v1888
    %v2199 = vunpack.c.h.b16 %v1888
    %v2200 = vunpack.c.l.b16 %v1889
    %v2201 = vunpack.c.h.b16 %v1889
    %v2202 = vunpack.c.l.b16 %v1890
    %v2203 = vunpack.c.h.b16 %v1890
    %v2204 = vunpack.c.l.b16 %v1891
    %v2205 = vunpack.c.h.b16 %v1891
    %v2206 = vunpack.c.l.b16 %v1892
    %v2207 = vunpack.c.h.b16 %v1892
    %v2208 = vunpack.c.l.b16 %v1893
    %v2209 = vunpack.c.h.b16 %v1893
    %v2210 = vunpack.c.l.b16 %v1894
    %v2211 = vunpack.c.h.b16 %v1894
    %v2212 = vunpack.c.l.b16 %v1895
    %v2213 = vunpack.c.h.b16 %v1895
    %v2214 = vunpack.c.l.b16 %v1896
    %v2215 = vunpack.c.h.b16 %v1896
    %v2216 = vunpack.c.l.b16 %v1897
    %v2217 = vunpack.c.h.b16 %v1897
    %v2218 = vunpack.c.l.b16 %v1898
    %v2219 = vunpack.c.h.b16 %v1898
    %v2220 = vunpack.c.l.b16 %v1899
    %v2221 = vunpack.c.h.b16 %v1899
    %v2222 = vunpack.c.l.b16 %v1900
    %v2223 = vunpack.c.h.b16 %v1900
    %v2224 = vunpack.c.l.b16 %v1901
    %v2225 = vunpack.c.h.b16 %v1901
    %v2226 = vunpack.c.l.b16 %v1902
    %v2227 = vunpack.c.h.b16 %v1902
    %v2228 = vunpack.c.l.b16 %v1903
    %v2229 = vunpack.c.h.b16 %v1903
    %v2230 = vunpack.c.l.b16 %v1904
    %v2231 = vunpack.c.h.b16 %v1904
    %v2232 = vunpack.c.l.b16 %v1905
    %v2233 = vunpack.c.h.b16 %v1905
    %v2234 = vunpack.c.l.b16 %v1906
    %v2235 = vunpack.c.h.b16 %v1906
    %v2236 = vunpack.c.l.b16 %v1907
    %v2237 = vunpack.c.h.b16 %v1907
    %v2238 = vunpack.c.l.b16 %v1908
    %v2239 = vunpack.c.h.b16 %v1908
    %v2240 = vunpack.c.l.b16 %v1909
    %v2241 = vunpack.c.h.b16 %v1909
    %v2242 = vunpack.c.l.b16 %v1910
    %v2243 = vunpack.c.h.b16 %v1910
    %v2244 = vunpack.c.l.b16 %v1911
    %v2245 = vunpack.c.h.b16 %v1911
    %v2246 = vunpack.c.l.b16 %v1912
    %v2247 = vunpack.c.h.b16 %v1912
    %v2248 = vunpack.c.l.b16 %v1913
    %v2249 = vunpack.c.h.b16 %v1913
    %v2250 = vunpack.c.l.b16 %v1914
    %v2251 = vunpack.c.h.b16 %v1914
    %v2252 = vunpack.c.l.b16 %v1915
    %v2253 = vunpack.c.h.b16 %v1915
    %v2254 = vunpack.c.l.b16 %v1916
    %v2255 = vunpack.c.h.b16 %v1916
    %v2256 = vunpack.c.l.b16 %v1917
    %v2257 = vunpack.c.h.b16 %v1917
    %v2258 = vunpack.c.l.b16 %v1918
    %v2259 = vunpack.c.h.b16 %v1918
    %v2260 = vunpack.c.l.b16 %v1919
    %v2261 = vunpack.c.h.b16 %v1919
    %v2262 = vunpack.c.l.b16 %v1920
    %v2263 = vunpack.c.h.b16 %v1920
    %v2264 = vunpack.c.l.b16 %v1921
    %v2265 = vunpack.c.h.b16 %v1921
    %v2266 = vunpack.c.l.b16 %v1922
    %v2267 = vunpack.c.h.b16 %v1922
    %v2268 = vunpack.c.l.b16 %v1923
    %v2269 = vunpack.c.h.b16 %v1923
    %v2270 = vunpack.c.l.b16 %v1924
    %v2271 = vunpack.c.h.b16 %v1924
    %v2272 = vunpack.c.l.b16 %v1925
    %v2273 = vunpack.c.h.b16 %v1925
    %v2274 = vunpack.c.l.b16 %v1926
    %v2275 = vunpack.c.h.b16 %v1926
    %v2276 = vunpack.c.l.b16 %v1927
    %v2277 = vunpack.c.h.b16 %v1927
    %v2278 = vunpack.c.l.b16 %v1928
    %v2279 = vunpack.c.h.b16 %v1928
    %v2280 = vunpack.c.l.b16 %v1929
    %v2281 = vunpack.c.h.b16 %v1929
    %v2282 = vunpack.c.l.b16 %v1930
    %v2283 = vunpack.c.h.b16 %v1930
    %v2284 = vunpack.c.l.b16 %v1931
    %v2285 = vunpack.c.h.b16 %v1931
    %v2286 = vunpack.c.l.b16 %v1932
    %v2287 = vunpack.c.h.b16 %v1932
    %v2288 = vunpack.c.l.b16 %v1933
    %v2289 = vunpack.c.h.b16 %v1933
    %v2290 = vunpack.c.l.b16 %v1934
    %v2291 = vunpack.c.h.b16 %v1934
    %v2292 = vunpack.c.l.b16 %v1935
    %v2293 = vunpack.c.h.b16 %v1935
    %v2294 = vunpack.c.l.b16 %v1936
    %v2295 = vunpack.c.h.b16 %v1936
    %v2296 = vunpack.c.l.b16 %v1937
    %v2297 = vunpack.c.h.b16 %v1937
    %v2298 = vunpack.c.l.b16 %v1938
    %v2299 = vunpack.c.h.b16 %v1938
    %v2300 = vunpack.c.l.b16 %v1939
    %v2301 = vunpack.c.h.b16 %v1939
    %v2302 = vunpack.c.l.b16 %v1940
    %v2303 = vunpack.c.h.b16 %v1940
    %v2304 = vunpack.c.l.b16 %v1941
    %v2305 = vunpack.c.h.b16 %v1941
    %v2306 = vunpack.c.l.b16 %v1942
    %v2307 = vunpack.c.h.b16 %v1942
    %v2308 = vunpack.c.l.b16 %v1943
    %v2309 = vunpack.c.h.b16 %v1943
    %v2310 = vunpack.c.l.b16 %v1944
    %v2311 = vunpack.c.h.b16 %v1944
    %v2312 = vunpack.c.l.b16 %v1945
    %v2313 = vunpack.c.h.b16 %v1945
    %v2314 = vunpack.c.l.b16 %v1946
    %v2315 = vunpack.c.h.b16 %v1946
    %v2316 = vunpack.c.l.b16 %v1947
    %v2317 = vunpack.c.h.b16 %v1947
    %v2318 = vunpack.c.l.b16 %v1948
    %v2319 = vunpack.c.h.b16 %v1948
    %v2320 = vunpack.c.l.b16 %v1949
    %v2321 = vunpack.c.h.b16 %v1949
    %v2322 = vunpack.c.l.b16 %v1950
    %v2323 = vunpack.c.h.b16 %v1950
    %v2324 = vunpack.c.l.b16 %v1951
    %v2325 = vunpack.c.h.b16 %v1951
    %v2326 = vunpack.c.l.b16 %v1952
    %v2327 = vunpack.c.h.b16 %v1952
    %v2328 = vunpack.c.l.b16 %v1953
    %v2329 = vunpack.c.h.b16 %v1953
    %v2330 = vunpack.c.l.b16 %v1954
    %v2331 = vunpack.c.h.b16 %v1954
    %v2332 = vunpack.c.l.b16 %v1955
    %v2333 = vunpack.c.h.b16 %v1955
    %v2334 = vunpack.c.l.b16 %v1956
    %v2335 = vunpack.c.h.b16 %v1956
    %v2336 = vunpack.c.l.b16 %v1957
    %v2337 = vunpack.c.h.b16 %v1957
    %v2338 = vunpack.c.l.b16 %v1958
    %v2339 = vunpack.c.h.b16 %v1958
    %v2340 = vunpack.c.l.b16 %v1959
    %v2341 = vunpack.c.h.b16 %v1959
    %v2342 = vunpack.c.l.b16 %v1960
    %v2343 = vunpack.c.h.b16 %v1960
    %v2344 = vunpack.c.l.b16 %v1961
    %v2345 = vunpack.c.h.b16 %v1961
    %v2346 = vunpack.c.l.b16 %v1962
    %v2347 = vunpack.c.h.b16 %v1962
    %v2348 = vunpack.c.l.b16 %v1963
    %v2349 = vunpack.c.h.b16 %v1963
    %v2350 = vunpack.c.l.b16 %v1964
    %v2351 = vunpack.c.h.b16 %v1964
    %v2352 = vunpack.c.l.b16 %v1965
    %v2353 = vunpack.c.h.b16 %v1965
    %v2354 = vunpack.c.l.b16 %v1966
    %v2355 = vunpack.c.h.b16 %v1966
    %v2356 = vunpack.c.l.b16 %v1967
    %v2357 = vunpack.c.h.b16 %v1967
    %v2358 = vunpack.c.l.b16 %v1968
    %v2359 = vunpack.c.h.b16 %v1968
    %v2360 = vunpack.c.l.b16 %v1969
    %v2361 = vunpack.c.h.b16 %v1969
    %v2362 = vunpack.c.l.b16 %v1970
    %v2363 = vunpack.c.h.b16 %v1970
    %v2364 = vunpack.c.l.b16 %v1971
    %v2365 = vunpack.c.h.b16 %v1971
    %v2366 = vpack.c.b16 %v2114, %v2110
    %v2367 = vpack.c.b16 %v2115, %v2111
    %v2368 = vpack.c.b16 %v2116, %v2112
    %v2369 = vpack.c.b16 %v2117, %v2113
    %v2370 = vpack.c.b16 %v2122, %v2118
    %v2371 = vpack.c.b16 %v2123, %v2119
    %v2372 = vpack.c.b16 %v2124, %v2120
    %v2373 = vpack.c.b16 %v2125, %v2121
    %v2374 = vpack.c.b16 %v2130, %v2126
    %v2375 = vpack.c.b16 %v2131, %v2127
    %v2376 = vpack.c.b16 %v2132, %v2128
    %v2377 = vpack.c.b16 %v2133, %v2129
    %v2378 = vpack.c.b16 %v2138, %v2134
    %v2379 = vpack.c.b16 %v2139, %v2135
    %v2380 = vpack.c.b16 %v2140, %v2136
    %v2381 = vpack.c.b16 %v2141, %v2137
    %v2382 = vpack.c.b16 %v2146, %v2142
    %v2383 = vpack.c.b16 %v2147, %v2143
    %v2384 = vpack.c.b16 %v2148, %v2144
    %v2385 = vpack.c.b16 %v2149, %v2145
    %v2386 = vpack.c.b16 %v2154, %v2150
    %v2387 = vpack.c.b16 %v2155, %v2151
    %v2388 = vpack.c.b16 %v2156, %v2152
    %v2389 = vpack.c.b16 %v2157, %v2153
    %v2390 = vpack.c.b16 %v2162, %v2158
    %v2391 = vpack.c.b16 %v2163, %v2159
    %v2392 = vpack.c.b16 %v2164, %v2160
    %v2393 = vpack.c.b16 %v2165, %v2161
    %v2394 = vpack.c.b16 %v2170, %v2166
    %v2395 = vpack.c.b16 %v2171, %v2167
    %v2396 = vpack.c.b16 %v2172, %v2168
    %v2397 = vpack.c.b16 %v2173, %v2169
    %v2398 = vpack.c.b16 %v2178, %v2174
    %v2399 = vpack.c.b16 %v2179, %v2175
    %v2400 = vpack.c.b16 %v2180, %v2176
    %v2401 = vpack.c.b16 %v2181, %v2177
    %v2402 = vpack.c.b16 %v2186, %v2182
    %v2403 = vpack.c.b16 %v2187, %v2183
    %v2404 = vpack.c.b16 %v2188, %v2184
    %v2405 = vpack.c.b16 %v2189, %v2185
    %v2406 = vpack.c.b16 %v2194, %v2190
    %v2407 = vpack.c.b16 %v2195, %v2191
    %v2408 = vpack.c.b16 %v2196, %v2192
    %v2409 = vpack.c.b16 %v2197, %v2193
    %v2410 = vpack.c.b16 %v2202, %v2198
    %v2411 = vpack.c.b16 %v2203, %v2199
    %v2412 = vpack.c.b16 %v2204, %v2200
    %v2413 = vpack.c.b16 %v2205, %v2201
    %v2414 = vpack.c.b16 %v2210, %v2206
    %v2415 = vpack.c.b16 %v2211, %v2207
    %v2416 = vpack.c.b16 %v2212, %v2208
    %v2417 = vpack.c.b16 %v2213, %v2209
    %v2418 = vpack.c.b16 %v2218, %v2214
    %v2419 = vpack.c.b16 %v2219, %v2215
    %v2420 = vpack.c.b16 %v2220, %v2216
    %v2421 = vpack.c.b16 %v2221, %v2217
    %v2422 = vpack.c.b16 %v2226, %v2222
    %v2423 = vpack.c.b16 %v2227, %v2223
    %v2424 = vpack.c.b16 %v2228, %v2224
    %v2425 = vpack.c.b16 %v2229, %v2225
    %v2426 = vpack.c.b16 %v2234, %v2230
    %v2427 = vpack.c.b16 %v2235, %v2231
    %v2428 = vpack.c.b16 %v2236, %v2232
    %v2429 = vpack.c.b16 %v2237, %v2233
    %v2430 = vpack.c.b16 %v2242, %v2238
    %v2431 = vpack.c.b16 %v2243, %v2239
    %v2432 = vpack.c.b16 %v2244, %v2240
    %v2433 = vpack.c.b16 %v2245, %v2241
    %v2434 = vpack.c.b16 %v2250, %v2246
    %v2435 = vpack.c.b16 %v2251, %v2247
    %v2436 = vpack.c.b16 %v2252, %v2248
    %v2437 = vpack.c.b16 %v2253, %v2249
    %v2438 = vpack.c.b16 %v2258, %v2254
    %v2439 = vpack.c.b16 %v2259, %v2255
    %v2440 = vpack.c.b16 %v2260, %v2256
    %v2441 = vpack.c.b16 %v2261, %v2257
    %v2442 = vpack.c.b16 %v2266, %v2262
    %v2443 = vpack.c.b16 %v2267, %v2263
    %v2444 = vpack.c.b16 %v2268, %v2264
    %v2445 = vpack.c.b16 %v2269, %v2265
    %v2446 = vpack.c.b16 %v2274, %v2270
    %v2447 = vpack.c.b16 %v2275, %v2271
    %v2448 = vpack.c.b16 %v2276, %v2272
    %v2449 = vpack.c.b16 %v2277, %v2273
    %v2450 = vpack.c.b16 %v2282, %v2278
    %v2451 = vpack.c.b16 %v2283, %v2279
    %v2452 = vpack.c.b16 %v2284, %v2280
    %v2453 = vpack.c.b16 %v2285, %v2281
    %v2454 = vpack.c.b16 %v2290, %v2286
    %v2455 = vpack.c.b16 %v2291, %v2287
    %v2456 = vpack.c.b16 %v2292, %v2288
    %v2457 = vpack.c.b16 %v2293, %v2289
    %v2458 = vpack.c.b16 %v2298, %v2294
    %v2459 = vpack.c.b16 %v2299, %v2295
    %v2460 = vpack.c.b16 %v2300, %v2296
    %v2461 = vpack.c.b16 %v2301, %v2297
    %v2462 = vpack.c.b16 %v2306, %v2302
    %v2463 = vpack.c.b16 %v2307, %v2303
    %v2464 = vpack.c.b16 %v2308, %v2304
    %v2465 = vpack.c.b16 %v2309, %v2305
    %v2466 = vpack.c.b16 %v2314, %v2310
    %v2467 = vpack.c.b16 %v2315, %v2311
    %v2468 = vpack.c.b16 %v2316, %v2312
    %v2469 = vpack.c.b16 %v2317, %v2313
    %v2470 = vpack.c.b16 %v2322, %v2318
    %v2471 = vpack.c.b16 %v2323, %v2319
    %v2472 = vpack.c.b16 %v2324, %v2320
    %v2473 = vpack.c.b16 %v2325, %v2321
    %v2474 = vpack.c.b16 %v2330, %v2326
    %v2475 = vpack.c.b16 %v2331, %v2327
    %v2476 = vpack.c.b16 %v2332, %v2328
    %v2477 = vpack.c.b16 %v2333, %v2329
    %v2478 = vpack.c.b16 %v2338, %v2334
    %v2479 = vpack.c.b16 %v2339, %v2335
    %v2480 = vpack.c.b16 %v2340, %v2336
    %v2481 = vpack.c.b16 %v2341, %v2337
    %v2482 = vpack.c.b16 %v2346, %v2342
    %v2483 = vpack.c.b16 %v2347, %v2343
    %v2484 = vpack.c.b16 %v2348, %v2344
    %v2485 = vpack.c.b16 %v2349, %v2345
    %v2486 = vpack.c.b16 %v2354, %v2350
    %v2487 = vpack.c.b16 %v2355, %v2351
    %v2488 = vpack.c.b16 %v2356, %v2352
    %v2489 = vpack.c.b16 %v2357, %v2353
    %v2490 = vpack.c.b16 %v2362, %v2358
    %v2491 = vpack.c.b16 %v2363, %v2359
    %v2492 = vpack.c.b16 %v2364, %v2360
    %v2493 = vpack.c.b16 %v2365, %v2361
    %2622 = vmatpush.bf16.msra.mxu0 %v2394
    %2623 = vmatpush.bf16.msra.mxu0 %v2390
    %2624 = vmatpush.bf16.msra.mxu0 %v2386
    %2625 = vmatpush.bf16.msra.mxu0 %v2382
    %2626 = vmatpush.bf16.msra.mxu0 %v2378
    %2627 = vmatpush.bf16.msra.mxu0 %v2374
    %2628 = vmatpush.bf16.msra.mxu0 %v2370
    %2629 = vmatpush.bf16.msra.mxu0 %v2366
    %2630 = vmatmul.bf16.gmra.mxu0 %v1840
    %v2631 = vpop.f32.mrf.mxu0
    %v2632 = vadd.f32 %v1974, %v2631
    %v2633 = vpop.f32.mrf.mxu0
    %v2634 = vadd.f32 %v1974, %v2633
    %2635 = vdwg.mxu0
    %2636 = vmatpush.bf16.msra.mxu0 %v2426
    %2637 = vmatpush.bf16.msra.mxu0 %v2422
    %2638 = vmatpush.bf16.msra.mxu0 %v2418
    %2639 = vmatpush.bf16.msra.mxu0 %v2414
    %2640 = vmatpush.bf16.msra.mxu0 %v2410
    %2641 = vmatpush.bf16.msra.mxu0 %v2406
    %2642 = vmatpush.bf16.msra.mxu0 %v2402
    %2643 = vmatpush.bf16.msra.mxu0 %v2398
    %2644 = vmatmul.bf16.gmra.mxu0 %v1841
    %v2645 = vpop.f32.mrf.mxu0
    %v2646 = vadd.f32 %v2632, %v2645
    %v2647 = vpop.f32.mrf.mxu0
    %v2648 = vadd.f32 %v2634, %v2647
    %2649 = vdwg.mxu0
    %2650 = vmatpush.bf16.msra.mxu0 %v2458
    %2651 = vmatpush.bf16.msra.mxu0 %v2454
    %2652 = vmatpush.bf16.msra.mxu0 %v2450
    %2653 = vmatpush.bf16.msra.mxu0 %v2446
    %2654 = vmatpush.bf16.msra.mxu0 %v2442
    %2655 = vmatpush.bf16.msra.mxu0 %v2438
    %2656 = vmatpush.bf16.msra.mxu0 %v2434
    %2657 = vmatpush.bf16.msra.mxu0 %v2430
    %2658 = vmatmul.bf16.gmra.mxu0 %v1842
    %v2659 = vpop.f32.mrf.mxu0
    %v2660 = vadd.f32 %v2646, %v2659
    %v2661 = vpop.f32.mrf.mxu0
    %v2662 = vadd.f32 %v2648, %v2661
    %2663 = vdwg.mxu0
    %2664 = vmatpush.bf16.msra.mxu0 %v2490
    %2665 = vmatpush.bf16.msra.mxu0 %v2486
    %2666 = vmatpush.bf16.msra.mxu0 %v2482
    %2667 = vmatpush.bf16.msra.mxu0 %v2478
    %2668 = vmatpush.bf16.msra.mxu0 %v2474
    %2669 = vmatpush.bf16.msra.mxu0 %v2470
    %2670 = vmatpush.bf16.msra.mxu0 %v2466
    %2671 = vmatpush.bf16.msra.mxu0 %v2462
    %2672 = vmatmul.bf16.gmra.mxu0 %v1843
    %v2673 = vpop.f32.mrf.mxu0
    %v2674 = vadd.f32 %v2660, %v2673
    %v2675 = vpop.f32.mrf.mxu0
    %v2676 = vadd.f32 %v2662, %v2675
    %2677 = vdwg.mxu0
    %2678 = vmatpush.bf16.msra.mxu0 %v2395
    %2679 = vmatpush.bf16.msra.mxu0 %v2391
    %2680 = vmatpush.bf16.msra.mxu0 %v2387
    %2681 = vmatpush.bf16.msra.mxu0 %v2383
    %2682 = vmatpush.bf16.msra.mxu0 %v2379
    %2683 = vmatpush.bf16.msra.mxu0 %v2375
    %2684 = vmatpush.bf16.msra.mxu0 %v2371
    %2685 = vmatpush.bf16.msra.mxu0 %v2367
    %2686 = vmatmul.bf16.gmra.mxu0 %v1840
    %v2687 = vpop.f32.mrf.mxu0
    %v2688 = vadd.f32 %v1975, %v2687
    %v2689 = vpop.f32.mrf.mxu0
    %v2690 = vadd.f32 %v1975, %v2689
    %2691 = vdwg.mxu0
    %2692 = vmatpush.bf16.msra.mxu0 %v2427
    %2693 = vmatpush.bf16.msra.mxu0 %v2423
    %2694 = vmatpush.bf16.msra.mxu0 %v2419
    %2695 = vmatpush.bf16.msra.mxu0 %v2415
    %2696 = vmatpush.bf16.msra.mxu0 %v2411
    %2697 = vmatpush.bf16.msra.mxu0 %v2407
    %2698 = vmatpush.bf16.msra.mxu0 %v2403
    %2699 = vmatpush.bf16.msra.mxu0 %v2399
    %2700 = vmatmul.bf16.gmra.mxu0 %v1841
    %v2701 = vpop.f32.mrf.mxu0
    %v2702 = vadd.f32 %v2688, %v2701
    %v2703 = vpop.f32.mrf.mxu0
    %v2704 = vadd.f32 %v2690, %v2703
    %2705 = vdwg.mxu0
    %2706 = vmatpush.bf16.msra.mxu0 %v2459
    %2707 = vmatpush.bf16.msra.mxu0 %v2455
    %2708 = vmatpush.bf16.msra.mxu0 %v2451
    %2709 = vmatpush.bf16.msra.mxu0 %v2447
    %2710 = vmatpush.bf16.msra.mxu0 %v2443
    %2711 = vmatpush.bf16.msra.mxu0 %v2439
    %2712 = vmatpush.bf16.msra.mxu0 %v2435
    %2713 = vmatpush.bf16.msra.mxu0 %v2431
    %2714 = vmatmul.bf16.gmra.mxu0 %v1842
    %v2715 = vpop.f32.mrf.mxu0
    %v2716 = vadd.f32 %v2702, %v2715
    %v2717 = vpop.f32.mrf.mxu0
    %v2718 = vadd.f32 %v2704, %v2717
    %2719 = vdwg.mxu0
    %2720 = vmatpush.bf16.msra.mxu0 %v2491
    %2721 = vmatpush.bf16.msra.mxu0 %v2487
    %2722 = vmatpush.bf16.msra.mxu0 %v2483
    %2723 = vmatpush.bf16.msra.mxu0 %v2479
    %2724 = vmatpush.bf16.msra.mxu0 %v2475
    %2725 = vmatpush.bf16.msra.mxu0 %v2471
    %2726 = vmatpush.bf16.msra.mxu0 %v2467
    %2727 = vmatpush.bf16.msra.mxu0 %v2463
    %2728 = vmatmul.bf16.gmra.mxu0 %v1843
    %v2729 = vpop.f32.mrf.mxu0
    %v2730 = vadd.f32 %v2716, %v2729
    %v2731 = vpop.f32.mrf.mxu0
    %v2732 = vadd.f32 %v2718, %v2731
    %2733 = vdwg.mxu0
    %2734 = vmatpush.bf16.msra.mxu0 %v2396
    %2735 = vmatpush.bf16.msra.mxu0 %v2392
    %2736 = vmatpush.bf16.msra.mxu0 %v2388
    %2737 = vmatpush.bf16.msra.mxu0 %v2384
    %2738 = vmatpush.bf16.msra.mxu0 %v2380
    %2739 = vmatpush.bf16.msra.mxu0 %v2376
    %2740 = vmatpush.bf16.msra.mxu0 %v2372
    %2741 = vmatpush.bf16.msra.mxu0 %v2368
    %2742 = vmatmul.bf16.gmra.mxu0 %v1840
    %v2743 = vpop.f32.mrf.mxu0
    %v2744 = vadd.f32 %v1976, %v2743
    %v2745 = vpop.f32.mrf.mxu0
    %v2746 = vadd.f32 %v1976, %v2745
    %2747 = vdwg.mxu0
    %2748 = vmatpush.bf16.msra.mxu0 %v2428
    %2749 = vmatpush.bf16.msra.mxu0 %v2424
    %2750 = vmatpush.bf16.msra.mxu0 %v2420
    %2751 = vmatpush.bf16.msra.mxu0 %v2416
    %2752 = vmatpush.bf16.msra.mxu0 %v2412
    %2753 = vmatpush.bf16.msra.mxu0 %v2408
    %2754 = vmatpush.bf16.msra.mxu0 %v2404
    %2755 = vmatpush.bf16.msra.mxu0 %v2400
    %2756 = vmatmul.bf16.gmra.mxu0 %v1841
    %v2757 = vpop.f32.mrf.mxu0
    %v2758 = vadd.f32 %v2744, %v2757
    %v2759 = vpop.f32.mrf.mxu0
    %v2760 = vadd.f32 %v2746, %v2759
    %2761 = vdwg.mxu0
    %2762 = vmatpush.bf16.msra.mxu0 %v2460
    %2763 = vmatpush.bf16.msra.mxu0 %v2456
    %2764 = vmatpush.bf16.msra.mxu0 %v2452
    %2765 = vmatpush.bf16.msra.mxu0 %v2448
    %2766 = vmatpush.bf16.msra.mxu0 %v2444
    %2767 = vmatpush.bf16.msra.mxu0 %v2440
    %2768 = vmatpush.bf16.msra.mxu0 %v2436
    %2769 = vmatpush.bf16.msra.mxu0 %v2432
    %2770 = vmatmul.bf16.gmra.mxu0 %v1842
    %v2771 = vpop.f32.mrf.mxu0
    %v2772 = vadd.f32 %v2758, %v2771
    %v2773 = vpop.f32.mrf.mxu0
    %v2774 = vadd.f32 %v2760, %v2773
    %2775 = vdwg.mxu0
    %2776 = vmatpush.bf16.msra.mxu0 %v2492
    %2777 = vmatpush.bf16.msra.mxu0 %v2488
    %2778 = vmatpush.bf16.msra.mxu0 %v2484
    %2779 = vmatpush.bf16.msra.mxu0 %v2480
    %2780 = vmatpush.bf16.msra.mxu0 %v2476
    %2781 = vmatpush.bf16.msra.mxu0 %v2472
    %2782 = vmatpush.bf16.msra.mxu0 %v2468
    %2783 = vmatpush.bf16.msra.mxu0 %v2464
    %2784 = vmatmul.bf16.gmra.mxu0 %v1843
    %v2785 = vpop.f32.mrf.mxu0
    %v2786 = vadd.f32 %v2772, %v2785
    %v2787 = vpop.f32.mrf.mxu0
    %v2788 = vadd.f32 %v2774, %v2787
    %2789 = vdwg.mxu0
    %2790 = vmatpush.bf16.msra.mxu0 %v2397
    %2791 = vmatpush.bf16.msra.mxu0 %v2393
    %2792 = vmatpush.bf16.msra.mxu0 %v2389
    %2793 = vmatpush.bf16.msra.mxu0 %v2385
    %2794 = vmatpush.bf16.msra.mxu0 %v2381
    %2795 = vmatpush.bf16.msra.mxu0 %v2377
    %2796 = vmatpush.bf16.msra.mxu0 %v2373
    %2797 = vmatpush.bf16.msra.mxu0 %v2369
    %2798 = vmatmul.bf16.gmra.mxu0 %v1840
    %v2799 = vpop.f32.mrf.mxu0
    %v2800 = vadd.f32 %v1977, %v2799
    %v2801 = vpop.f32.mrf.mxu0
    %v2802 = vadd.f32 %v1977, %v2801
    %2803 = vdwg.mxu0
    %2804 = vmatpush.bf16.msra.mxu0 %v2429
    %2805 = vmatpush.bf16.msra.mxu0 %v2425
    %2806 = vmatpush.bf16.msra.mxu0 %v2421
    %2807 = vmatpush.bf16.msra.mxu0 %v2417
    %2808 = vmatpush.bf16.msra.mxu0 %v2413
    %2809 = vmatpush.bf16.msra.mxu0 %v2409
    %2810 = vmatpush.bf16.msra.mxu0 %v2405
    %2811 = vmatpush.bf16.msra.mxu0 %v2401
    %2812 = vmatmul.bf16.gmra.mxu0 %v1841
    %v2813 = vpop.f32.mrf.mxu0
    %v2814 = vadd.f32 %v2800, %v2813
    %v2815 = vpop.f32.mrf.mxu0
    %v2816 = vadd.f32 %v2802, %v2815
    %2817 = vdwg.mxu0
    %2818 = vmatpush.bf16.msra.mxu0 %v2461
    %2819 = vmatpush.bf16.msra.mxu0 %v2457
    %2820 = vmatpush.bf16.msra.mxu0 %v2453
    %2821 = vmatpush.bf16.msra.mxu0 %v2449
    %2822 = vmatpush.bf16.msra.mxu0 %v2445
    %2823 = vmatpush.bf16.msra.mxu0 %v2441
    %2824 = vmatpush.bf16.msra.mxu0 %v2437
    %2825 = vmatpush.bf16.msra.mxu0 %v2433
    %2826 = vmatmul.bf16.gmra.mxu0 %v1842
    %v2827 = vpop.f32.mrf.mxu0
    %v2828 = vadd.f32 %v2814, %v2827
    %v2829 = vpop.f32.mrf.mxu0
    %v2830 = vadd.f32 %v2816, %v2829
    %2831 = vdwg.mxu0
    %2832 = vmatpush.bf16.msra.mxu0 %v2493
    %2833 = vmatpush.bf16.msra.mxu0 %v2489
    %2834 = vmatpush.bf16.msra.mxu0 %v2485
    %2835 = vmatpush.bf16.msra.mxu0 %v2481
    %2836 = vmatpush.bf16.msra.mxu0 %v2477
    %2837 = vmatpush.bf16.msra.mxu0 %v2473
    %2838 = vmatpush.bf16.msra.mxu0 %v2469
    %2839 = vmatpush.bf16.msra.mxu0 %v2465
    %2840 = vmatmul.bf16.gmra.mxu0 %v1843
    %v2841 = vpop.f32.mrf.mxu0
    %v2842 = vadd.f32 %v2828, %v2841
    %v2843 = vpop.f32.mrf.mxu0
    %v2844 = vadd.f32 %v2830, %v2843
    %2845 = vdwg.mxu0
    %v2846 = vmax.f32 %v2674, 0.0
    %v2847 = vmax.f32 %v2730, 0.0
    %v2848 = vmax.f32 %v2786, 0.0
    %v2849 = vmax.f32 %v2842, 0.0
    %v2850 = vmax.f32 %v2676, 0.0
    %v2851 = vmax.f32 %v2732, 0.0
    %v2852 = vmax.f32 %v2788, 0.0
    %v2853 = vmax.f32 %v2844, 0.0
    %v2854 = vpack.c.bf16 %v2850, %v2846
    %v2855 = vpack.c.bf16 %v2851, %v2847
    %v2856 = vpack.c.bf16 %v2852, %v2848
    %v2857 = vpack.c.bf16 %v2853, %v2849
    %v2858 = vld [vmem:[%s5] sm:$0xf]
    %v2859 = vld [vmem:[%s5 + $0x4] sm:$0xf]
    %v2860 = vld [vmem:[%s5 + $0x8] sm:$0xf]
    %v2861 = vld [vmem:[%s5 + $0xc] sm:$0xf]
    %v2862 = vld [vmem:[%s5 + $0x10] sm:$0xf]
    %v2863 = vld [vmem:[%s5 + $0x14] sm:$0xf]
    %v2864 = vld [vmem:[%s5 + $0x18] sm:$0xf]
    %v2865 = vld [vmem:[%s5 + $0x1c] sm:$0xf]
    %v2866 = vld [vmem:[%s5 + $0x20] sm:$0xf]
    %v2867 = vld [vmem:[%s5 + $0x24] sm:$0xf]
    %v2868 = vld [vmem:[%s5 + $0x28] sm:$0xf]
    %v2869 = vld [vmem:[%s5 + $0x2c] sm:$0xf]
    %v2870 = vld [vmem:[%s5 + $0x30] sm:$0xf]
    %v2871 = vld [vmem:[%s5 + $0x34] sm:$0xf]
    %v2872 = vld [vmem:[%s5 + $0x38] sm:$0xf]
    %v2873 = vld [vmem:[%s5 + $0x3c] sm:$0xf]
    %v2874 = vld [vmem:[%s5 + $0x40] sm:$0xf]
    %v2875 = vld [vmem:[%s5 + $0x44] sm:$0xf]
    %v2876 = vld [vmem:[%s5 + $0x48] sm:$0xf]
    %v2877 = vld [vmem:[%s5 + $0x4c] sm:$0xf]
    %v2878 = vld [vmem:[%s5 + $0x50] sm:$0xf]
    %v2879 = vld [vmem:[%s5 + $0x54] sm:$0xf]
    %v2880 = vld [vmem:[%s5 + $0x58] sm:$0xf]
    %v2881 = vld [vmem:[%s5 + $0x5c] sm:$0xf]
    %v2882 = vld [vmem:[%s5 + $0x60] sm:$0xf]
    %v2883 = vld [vmem:[%s5 + $0x64] sm:$0xf]
    %v2884 = vld [vmem:[%s5 + $0x68] sm:$0xf]
    %v2885 = vld [vmem:[%s5 + $0x6c] sm:$0xf]
    %v2886 = vld [vmem:[%s5 + $0x70] sm:$0xf]
    %v2887 = vld [vmem:[%s5 + $0x74] sm:$0xf]
    %v2888 = vld [vmem:[%s5 + $0x78] sm:$0xf]
    %v2889 = vld [vmem:[%s5 + $0x7c] sm:$0xf]
    %v2890 = vld [vmem:[%s5 + $0x80] sm:$0xf]
    %v2891 = vld [vmem:[%s5 + $0x84] sm:$0xf]
    %v2892 = vld [vmem:[%s5 + $0x88] sm:$0xf]
    %v2893 = vld [vmem:[%s5 + $0x8c] sm:$0xf]
    %v2894 = vld [vmem:[%s5 + $0x90] sm:$0xf]
    %v2895 = vld [vmem:[%s5 + $0x94] sm:$0xf]
    %v2896 = vld [vmem:[%s5 + $0x98] sm:$0xf]
    %v2897 = vld [vmem:[%s5 + $0x9c] sm:$0xf]
    %v2898 = vld [vmem:[%s5 + $0xa0] sm:$0xf]
    %v2899 = vld [vmem:[%s5 + $0xa4] sm:$0xf]
    %v2900 = vld [vmem:[%s5 + $0xa8] sm:$0xf]
    %v2901 = vld [vmem:[%s5 + $0xac] sm:$0xf]
    %v2902 = vld [vmem:[%s5 + $0xb0] sm:$0xf]
    %v2903 = vld [vmem:[%s5 + $0xb4] sm:$0xf]
    %v2904 = vld [vmem:[%s5 + $0xb8] sm:$0xf]
    %v2905 = vld [vmem:[%s5 + $0xbc] sm:$0xf]
    %v2906 = vld [vmem:[%s5 + $0xc0] sm:$0xf]
    %v2907 = vld [vmem:[%s5 + $0xc4] sm:$0xf]
    %v2908 = vld [vmem:[%s5 + $0xc8] sm:$0xf]
    %v2909 = vld [vmem:[%s5 + $0xcc] sm:$0xf]
    %v2910 = vld [vmem:[%s5 + $0xd0] sm:$0xf]
    %v2911 = vld [vmem:[%s5 + $0xd4] sm:$0xf]
    %v2912 = vld [vmem:[%s5 + $0xd8] sm:$0xf]
    %v2913 = vld [vmem:[%s5 + $0xdc] sm:$0xf]
    %v2914 = vld [vmem:[%s5 + $0xe0] sm:$0xf]
    %v2915 = vld [vmem:[%s5 + $0xe4] sm:$0xf]
    %v2916 = vld [vmem:[%s5 + $0xe8] sm:$0xf]
    %v2917 = vld [vmem:[%s5 + $0xec] sm:$0xf]
    %v2918 = vld [vmem:[%s5 + $0xf0] sm:$0xf]
    %v2919 = vld [vmem:[%s5 + $0xf4] sm:$0xf]
    %v2920 = vld [vmem:[%s5 + $0xf8] sm:$0xf]
    %v2921 = vld [vmem:[%s5 + $0xfc] sm:$0xf]
    %v2922 = vld [vmem:[%s6] sm:$0x1]
    %v2924 = vperm.slane %v2922, 0
    %v2990 = vunpack.c.l.b16 %v2858
    %v2991 = vunpack.c.l.b16 %v2859
    %v2992 = vunpack.c.l.b16 %v2860
    %v2993 = vunpack.c.l.b16 %v2861
    %v2994 = vunpack.c.l.b16 %v2862
    %v2995 = vunpack.c.l.b16 %v2863
    %v2996 = vunpack.c.l.b16 %v2864
    %v2997 = vunpack.c.l.b16 %v2865
    %v2998 = vunpack.c.l.b16 %v2866
    %v2999 = vunpack.c.l.b16 %v2867
    %v3000 = vunpack.c.l.b16 %v2868
    %v3001 = vunpack.c.l.b16 %v2869
    %v3002 = vunpack.c.l.b16 %v2870
    %v3003 = vunpack.c.l.b16 %v2871
    %v3004 = vunpack.c.l.b16 %v2872
    %v3005 = vunpack.c.l.b16 %v2873
    %v3006 = vunpack.c.l.b16 %v2874
    %v3007 = vunpack.c.l.b16 %v2875
    %v3008 = vunpack.c.l.b16 %v2876
    %v3009 = vunpack.c.l.b16 %v2877
    %v3010 = vunpack.c.l.b16 %v2878
    %v3011 = vunpack.c.l.b16 %v2879
    %v3012 = vunpack.c.l.b16 %v2880
    %v3013 = vunpack.c.l.b16 %v2881
    %v3014 = vunpack.c.l.b16 %v2882
    %v3015 = vunpack.c.l.b16 %v2883
    %v3016 = vunpack.c.l.b16 %v2884
    %v3017 = vunpack.c.l.b16 %v2885
    %v3018 = vunpack.c.l.b16 %v2886
    %v3019 = vunpack.c.l.b16 %v2887
    %v3020 = vunpack.c.l.b16 %v2888
    %v3021 = vunpack.c.l.b16 %v2889
    %v3022 = vunpack.c.l.b16 %v2890
    %v3023 = vunpack.c.l.b16 %v2891
    %v3024 = vunpack.c.l.b16 %v2892
    %v3025 = vunpack.c.l.b16 %v2893
    %v3026 = vunpack.c.l.b16 %v2894
    %v3027 = vunpack.c.l.b16 %v2895
    %v3028 = vunpack.c.l.b16 %v2896
    %v3029 = vunpack.c.l.b16 %v2897
    %v3030 = vunpack.c.l.b16 %v2898
    %v3031 = vunpack.c.l.b16 %v2899
    %v3032 = vunpack.c.l.b16 %v2900
    %v3033 = vunpack.c.l.b16 %v2901
    %v3034 = vunpack.c.l.b16 %v2902
    %v3035 = vunpack.c.l.b16 %v2903
    %v3036 = vunpack.c.l.b16 %v2904
    %v3037 = vunpack.c.l.b16 %v2905
    %v3038 = vunpack.c.l.b16 %v2906
    %v3039 = vunpack.c.l.b16 %v2907
    %v3040 = vunpack.c.l.b16 %v2908
    %v3041 = vunpack.c.l.b16 %v2909
    %v3042 = vunpack.c.l.b16 %v2910
    %v3043 = vunpack.c.l.b16 %v2911
    %v3044 = vunpack.c.l.b16 %v2912
    %v3045 = vunpack.c.l.b16 %v2913
    %v3046 = vunpack.c.l.b16 %v2914
    %v3047 = vunpack.c.l.b16 %v2915
    %v3048 = vunpack.c.l.b16 %v2916
    %v3049 = vunpack.c.l.b16 %v2917
    %v3050 = vunpack.c.l.b16 %v2918
    %v3051 = vunpack.c.l.b16 %v2919
    %v3052 = vunpack.c.l.b16 %v2920
    %v3053 = vunpack.c.l.b16 %v2921
    %v3054 = vpack.c.b16 %v2991, %v2990
    %v3055 = vpack.c.b16 %v2993, %v2992
    %v3056 = vpack.c.b16 %v2995, %v2994
    %v3057 = vpack.c.b16 %v2997, %v2996
    %v3058 = vpack.c.b16 %v2999, %v2998
    %v3059 = vpack.c.b16 %v3001, %v3000
    %v3060 = vpack.c.b16 %v3003, %v3002
    %v3061 = vpack.c.b16 %v3005, %v3004
    %v3062 = vpack.c.b16 %v3007, %v3006
    %v3063 = vpack.c.b16 %v3009, %v3008
    %v3064 = vpack.c.b16 %v3011, %v3010
    %v3065 = vpack.c.b16 %v3013, %v3012
    %v3066 = vpack.c.b16 %v3015, %v3014
    %v3067 = vpack.c.b16 %v3017, %v3016
    %v3068 = vpack.c.b16 %v3019, %v3018
    %v3069 = vpack.c.b16 %v3021, %v3020
    %v3070 = vpack.c.b16 %v3023, %v3022
    %v3071 = vpack.c.b16 %v3025, %v3024
    %v3072 = vpack.c.b16 %v3027, %v3026
    %v3073 = vpack.c.b16 %v3029, %v3028
    %v3074 = vpack.c.b16 %v3031, %v3030
    %v3075 = vpack.c.b16 %v3033, %v3032
    %v3076 = vpack.c.b16 %v3035, %v3034
    %v3077 = vpack.c.b16 %v3037, %v3036
    %v3078 = vpack.c.b16 %v3039, %v3038
    %v3079 = vpack.c.b16 %v3041, %v3040
    %v3080 = vpack.c.b16 %v3043, %v3042
    %v3081 = vpack.c.b16 %v3045, %v3044
    %v3082 = vpack.c.b16 %v3047, %v3046
    %v3083 = vpack.c.b16 %v3049, %v3048
    %v3084 = vpack.c.b16 %v3051, %v3050
    %v3085 = vpack.c.b16 %v3053, %v3052
    %3118 = vmatpush.bf16.msra.mxu0 %v3061
    %3119 = vmatpush.bf16.msra.mxu0 %v3060
    %3120 = vmatpush.bf16.msra.mxu0 %v3059
    %3121 = vmatpush.bf16.msra.mxu0 %v3058
    %3122 = vmatpush.bf16.msra.mxu0 %v3057
    %3123 = vmatpush.bf16.msra.mxu0 %v3056
    %3124 = vmatpush.bf16.msra.mxu0 %v3055
    %3125 = vmatpush.bf16.msra.mxu0 %v3054
    %3126 = vmatmul.bf16.gmra.mxu0 %v2854
    %v3127 = vpop.f32.mrf.mxu0
    %v3128 = vadd.f32 %v2924, %v3127
    %v3129 = vpop.f32.mrf.mxu0
    %v3130 = vadd.f32 %v2924, %v3129
    %3131 = vdwg.mxu0
    %3132 = vmatpush.bf16.msra.mxu0 %v3069
    %3133 = vmatpush.bf16.msra.mxu0 %v3068
    %3134 = vmatpush.bf16.msra.mxu0 %v3067
    %3135 = vmatpush.bf16.msra.mxu0 %v3066
    %3136 = vmatpush.bf16.msra.mxu0 %v3065
    %3137 = vmatpush.bf16.msra.mxu0 %v3064
    %3138 = vmatpush.bf16.msra.mxu0 %v3063
    %3139 = vmatpush.bf16.msra.mxu0 %v3062
    %3140 = vmatmul.bf16.gmra.mxu0 %v2855
    %v3141 = vpop.f32.mrf.mxu0
    %v3142 = vadd.f32 %v3128, %v3141
    %v3143 = vpop.f32.mrf.mxu0
    %v3144 = vadd.f32 %v3130, %v3143
    %3145 = vdwg.mxu0
    %3146 = vmatpush.bf16.msra.mxu0 %v3077
    %3147 = vmatpush.bf16.msra.mxu0 %v3076
    %3148 = vmatpush.bf16.msra.mxu0 %v3075
    %3149 = vmatpush.bf16.msra.mxu0 %v3074
    %3150 = vmatpush.bf16.msra.mxu0 %v3073
    %3151 = vmatpush.bf16.msra.mxu0 %v3072
    %3152 = vmatpush.bf16.msra.mxu0 %v3071
    %3153 = vmatpush.bf16.msra.mxu0 %v3070
    %3154 = vmatmul.bf16.gmra.mxu0 %v2856
    %v3155 = vpop.f32.mrf.mxu0
    %v3156 = vadd.f32 %v3142, %v3155
    %v3157 = vpop.f32.mrf.mxu0
    %v3158 = vadd.f32 %v3144, %v3157
    %3159 = vdwg.mxu0
    %3160 = vmatpush.bf16.msra.mxu0 %v3085
    %3161 = vmatpush.bf16.msra.mxu0 %v3084
    %3162 = vmatpush.bf16.msra.mxu0 %v3083
    %3163 = vmatpush.bf16.msra.mxu0 %v3082
    %3164 = vmatpush.bf16.msra.mxu0 %v3081
    %3165 = vmatpush.bf16.msra.mxu0 %v3080
    %3166 = vmatpush.bf16.msra.mxu0 %v3079
    %3167 = vmatpush.bf16.msra.mxu0 %v3078
    %3168 = vmatmul.bf16.gmra.mxu0 %v2857
    %v3169 = vpop.f32.mrf.mxu0
    %v3170 = vadd.f32 %v3156, %v3169
    %v3171 = vpop.f32.mrf.mxu0
    %v3172 = vadd.f32 %v3158, %v3171
    %3173 = vdwg.mxu0
    %3174 = vst [vmem:[%s7] sm:$0xff] %v3170
    %3175 = vst [vmem:[%s7 + $0x8] sm:$0xff] %v3172
    // Predicated region
    $region34: #{_lambda_.1} parent=1 // pred_check
      _
    $region35: #{_lambda_.1} parent=1 // pred_check_branch
      %3177 = sbr.rel (0) target = $region37
    $region36: #{_lambda_.1} parent=1 // pred_region
      _
    $region37: #{_lambda_.1} parent=1 // pred_fallthru
      _
    // Predicated region
    $region38: #{_lambda_.1} parent=1 // pred_check
      _
    $region39: #{_lambda_.1} parent=1 // pred_check_branch
      %3179 = sbr.rel (0) target = $region41
    $region40: #{_lambda_.1} parent=1 // pred_region
      _
    $region41: #{_lambda_.1} parent=1 // pred_fallthru
      _
    %3180 = vsyncpa [#allocation3], 1

// kernel: _lambda_.1
$region0: #{_lambda_.1}
  #allocation0 [shape = 'u32[]', space=smem, size = 0x4, offset = 0x4, fixed_abs, tag = 'smem constant byte address 0x4 - core index']
  #allocation1 [shape = 'u32[72,128]{1,0:T(1,128)}', space=vmem, size = 0x9000, scoped, tag = 'internal scratch']
  %s0 = inlined_call_operand.vmem [shape: bf16[16,896], index: 0, kind: input, shape index: {}]
  %s1 = inlined_call_operand.hbm [shape: bf16[896,512], index: 1, kind: input, shape index: {}]
  %s2 = inlined_call_operand.vmem [shape: f32[1,512], index: 2, kind: input, shape index: {}]
  %s3 = inlined_call_operand.vmem [shape: bf16[512,512], index: 3, kind: input, shape index: {}]
  %s4 = inlined_call_operand.vmem [shape: f32[1,512], index: 4, kind: input, shape index: {}]
  %s5 = inlined_call_operand.vmem [shape: bf16[512,128], index: 5, kind: input, shape index: {}]
  %s6 = inlined_call_operand.vmem [shape: f32[1,128], index: 6, kind: input, shape index: {}]
  %s7 = inlined_call_operand.vmem [shape: f32[16,128], index: 7, kind: output, shape index: {}]
  %s8 = sld [smem:[#allocation0]]
  $region42: #{_lambda_.1} parent=0
    _
  %s10 = ssub.s32 1, %s8
  %s11 = scalar_select 0, %s10, %s8
  $region1: #{_lambda_.1} parent=0
    #allocation2 [shape = 'u8[917504]{0}', space=vmem, size = 0xe0000, scoped, tag = 'input window, operand 1, single buffered']
    #allocation3 [shape = 's32[1]{0}', space=sflag, size = 0x4, scoped, tag = 'scoped memory for _lambda_.1']
    %12 = vsyncpa [#allocation3], 0
    // Predicated region
    $region2: #{_lambda_.1} parent=1 // pred_check
      _
    $region3: #{_lambda_.1} parent=1 // pred_check_branch
      %14 = sbr.rel (0) target = $region5
    $region4: #{_lambda_.1} parent=1 // pred_region
      _
    $region5: #{_lambda_.1} parent=1 // pred_fallthru
      _
    // Predicated region
    $region6: #{_lambda_.1} parent=1 // pred_check
      _
    $region7: #{_lambda_.1} parent=1 // pred_check_branch
      %16 = sbr.rel (0) target = $region9
    $region8: #{_lambda_.1} parent=1 // pred_region
      %18 = vsyncadd [#allocation3], 0
      %s19 = sshll.u32 %s1, 4
      %s20 = int_to_ptr.hbm [resolvable:$true] %s19
      %s21 = sshll.u32 [#allocation2], 4
      %s22 = int_to_ptr.vmem [resolvable:$true] %s21
      %27 = dma.hbm_to_vmem [thread:$0]  %s20, 28672, %s22, [#allocation3], 256, 256, 16
    $region9: #{_lambda_.1} parent=1 // pred_fallthru
      _
    // Predicated region
    $region10: #{_lambda_.1} parent=1 // pred_check
      _
    $region11: #{_lambda_.1} parent=1 // pred_check_branch
      %29 = sbr.rel (0) target = $region13
    $region12: #{_lambda_.1} parent=1 // pred_region
      _
    $region13: #{_lambda_.1} parent=1 // pred_fallthru
      _
    // Predicated region
    $region14: #{_lambda_.1} parent=1 // pred_check
      _
    $region15: #{_lambda_.1} parent=1 // pred_check_branch
      %31 = sbr.rel (0) target = $region17
    $region16: #{_lambda_.1} parent=1 // pred_region
      _
    $region17: #{_lambda_.1} parent=1 // pred_fallthru
      _
    // Predicated region
    $region18: #{_lambda_.1} parent=1 // pred_check
      _
    $region19: #{_lambda_.1} parent=1 // pred_check_branch
      %33 = sbr.rel (0) target = $region21
    $region20: #{_lambda_.1} parent=1 // pred_region
      _
    $region21: #{_lambda_.1} parent=1 // pred_fallthru
      _
    // Predicated region
    $region22: #{_lambda_.1} parent=1 // pred_check
      _
    $region23: #{_lambda_.1} parent=1 // pred_check_branch
      %35 = sbr.rel (0) target = $region25
    $region24: #{_lambda_.1} parent=1 // pred_region
      _
    $region25: #{_lambda_.1} parent=1 // pred_fallthru
      _
    // Predicated region
    $region26: #{_lambda_.1} parent=1 // pred_check
      _
    $region27: #{_lambda_.1} parent=1 // pred_check_branch
      %37 = sbr.rel (0) target = $region29
    $region28: #{_lambda_.1} parent=1 // pred_region
      _
    $region29: #{_lambda_.1} parent=1 // pred_fallthru
      _
    // Predicated region
    $region30: #{_lambda_.1} parent=1 // pred_check
      _
    $region31: #{_lambda_.1} parent=1 // pred_check_branch
      %39 = sbr.rel (0) target = $region33
    $region32: #{_lambda_.1} parent=1 // pred_region
      %41 = dma.done [#allocation3], 28672
    $region33: #{_lambda_.1} parent=1 // pred_fallthru
      _
    %v42 = vld [vmem:[%s0] sm:$0xff]
    %v43 = vld [vmem:[%s0 + $0x8] sm:$0xff]
    %v44 = vld [vmem:[%s0 + $0x10] sm:$0xff]
    %v45 = vld [vmem:[%s0 + $0x18] sm:$0xf]
    %v46 = vld [vmem:[%s0 + $0x1c] sm:$0xff]
    %v47 = vld [vmem:[%s0 + $0x24] sm:$0xff]
    %v48 = vld [vmem:[%s0 + $0x2c] sm:$0xff]
    %v49 = vld [vmem:[%s0 + $0x34] sm:$0xf]
    %v50 = vld [vmem:[#allocation2] sm:$0xff]
    %v51 = vld [vmem:[#allocation2 + $0x8] sm:$0xff]
    %v52 = vld [vmem:[#allocation2 + $0x10] sm:$0xff]
    %v53 = vld [vmem:[#allocation2 + $0x18] sm:$0xff]
    %v54 = vld [vmem:[#allocation2 + $0x20] sm:$0xff]
    %v55 = vld [vmem:[#allocation2 + $0x28] sm:$0xff]
    %v56 = vld [vmem:[#allocation2 + $0x30] sm:$0xff]
    %v57 = vld [vmem:[#allocation2 + $0x38] sm:$0xff]
    %v58 = vld [vmem:[#allocation2 + $0x40] sm:$0xff]
    %v59 = vld [vmem:[#allocation2 + $0x48] sm:$0xff]
    %v60 = vld [vmem:[#allocation2 + $0x50] sm:$0xff]
    %v61 = vld [vmem:[#allocation2 + $0x58] sm:$0xff]
    %v62 = vld [vmem:[#allocation2 + $0x60] sm:$0xff]
    %v63 = vld [vmem:[#allocation2 + $0x68] sm:$0xff]
    %v64 = vld [vmem:[#allocation2 + $0x70] sm:$0xff]
    %v65 = vld [vmem:[#allocation2 + $0x78] sm:$0xff]
    %v66 = vld [vmem:[#allocation2 + $0x80] sm:$0xff]
    %v67 = vld [vmem:[#allocation2 + $0x88] sm:$0xff]
    %v68 = vld [vmem:[#allocation2 + $0x90] sm:$0xff]
    %v69 = vld [vmem:[#allocation2 + $0x98] sm:$0xff]
    %v70 = vld [vmem:[#allocation2 + $0xa0] sm:$0xff]
    %v71 = vld [vmem:[#allocation2 + $0xa8] sm:$0xff]
    %v72 = vld [vmem:[#allocation2 + $0xb0] sm:$0xff]
    %v73 = vld [vmem:[#allocation2 + $0xb8] sm:$0xff]
    %v74 = vld [vmem:[#allocation2 + $0xc0] sm:$0xff]
    %v75 = vld [vmem:[#allocation2 + $0xc8] sm:$0xff]
    %v76 = vld [vmem:[#allocation2 + $0xd0] sm:$0xff]
    %v77 = vld [vmem:[#allocation2 + $0xd8] sm:$0xff]
    %v78 = vld [vmem:[#allocation2 + $0xe0] sm:$0xff]
    %v79 = vld [vmem:[#allocation2 + $0xe8] sm:$0xff]
    %v80 = vld [vmem:[#allocation2 + $0xf0] sm:$0xff]
    %v81 = vld [vmem:[#allocation2 + $0xf8] sm:$0xff]
    %v82 = vld [vmem:[#allocation2 + $0x100] sm:$0xff]
    %v83 = vld [vmem:[#allocation2 + $0x108] sm:$0xff]
    %v84 = vld [vmem:[#allocation2 + $0x110] sm:$0xff]
    %v85 = vld [vmem:[#allocation2 + $0x118] sm:$0xff]
    %v86 = vld [vmem:[#allocation2 + $0x120] sm:$0xff]
    %v87 = vld [vmem:[#allocation2 + $0x128] sm:$0xff]
    %v88 = vld [vmem:[#allocation2 + $0x130] sm:$0xff]
    %v89 = vld [vmem:[#allocation2 + $0x138] sm:$0xff]
    %v90 = vld [vmem:[#allocation2 + $0x140] sm:$0xff]
    %v91 = vld [vmem:[#allocation2 + $0x148] sm:$0xff]
    %v92 = vld [vmem:[#allocation2 + $0x150] sm:$0xff]
    %v93 = vld [vmem:[#allocation2 + $0x158] sm:$0xff]
    %v94 = vld [vmem:[#allocation2 + $0x160] sm:$0xff]
    %v95 = vld [vmem:[#allocation2 + $0x168] sm:$0xff]
    %v96 = vld [vmem:[#allocation2 + $0x170] sm:$0xff]
    %v97 = vld [vmem:[#allocation2 + $0x178] sm:$0xff]
    %v98 = vld [vmem:[#allocation2 + $0x180] sm:$0xff]
    %v99 = vld [vmem:[#allocation2 + $0x188] sm:$0xff]
    %v100 = vld [vmem:[#allocation2 + $0x190] sm:$0xff]
    %v101 = vld [vmem:[#allocation2 + $0x198] sm:$0xff]
    %v102 = vld [vmem:[#allocation2 + $0x1a0] sm:$0xff]
    %v103 = vld [vmem:[#allocation2 + $0x1a8] sm:$0xff]
    %v104 = vld [vmem:[#allocation2 + $0x1b0] sm:$0xff]
    %v105 = vld [vmem:[#allocation2 + $0x1b8] sm:$0xff]
    %v106 = vld [vmem:[#allocation2 + $0x1c0] sm:$0xff]
    %v107 = vld [vmem:[#allocation2 + $0x1c8] sm:$0xff]
    %v108 = vld [vmem:[#allocation2 + $0x1d0] sm:$0xff]
    %v109 = vld [vmem:[#allocation2 + $0x1d8] sm:$0xff]
    %v110 = vld [vmem:[#allocation2 + $0x1e0] sm:$0xff]
    %v111 = vld [vmem:[#allocation2 + $0x1e8] sm:$0xff]
    %v112 = vld [vmem:[#allocation2 + $0x1f0] sm:$0xff]
    %v113 = vld [vmem:[#allocation2 + $0x1f8] sm:$0xff]
    %v114 = vld [vmem:[#allocation2 + $0x200] sm:$0xff]
    %v115 = vld [vmem:[#allocation2 + $0x208] sm:$0xff]
    %v116 = vld [vmem:[#allocation2 + $0x210] sm:$0xff]
    %v117 = vld [vmem:[#allocation2 + $0x218] sm:$0xff]
    %v118 = vld [vmem:[#allocation2 + $0x220] sm:$0xff]
    %v119 = vld [vmem:[#allocation2 + $0x228] sm:$0xff]
    %v120 = vld [vmem:[#allocation2 + $0x230] sm:$0xff]
    %v121 = vld [vmem:[#allocation2 + $0x238] sm:$0xff]
    %v122 = vld [vmem:[#allocation2 + $0x240] sm:$0xff]
    %v123 = vld [vmem:[#allocation2 + $0x248] sm:$0xff]
    %v124 = vld [vmem:[#allocation2 + $0x250] sm:$0xff]
    %v125 = vld [vmem:[#allocation2 + $0x258] sm:$0xff]
    %v126 = vld [vmem:[#allocation2 + $0x260] sm:$0xff]
    %v127 = vld [vmem:[#allocation2 + $0x268] sm:$0xff]
    %v128 = vld [vmem:[#allocation2 + $0x270] sm:$0xff]
    %v129 = vld [vmem:[#allocation2 + $0x278] sm:$0xff]
    %v130 = vld [vmem:[#allocation2 + $0x280] sm:$0xff]
    %v131 = vld [vmem:[#allocation2 + $0x288] sm:$0xff]
    %v132 = vld [vmem:[#allocation2 + $0x290] sm:$0xff]
    %v133 = vld [vmem:[#allocation2 + $0x298] sm:$0xff]
    %v134 = vld [vmem:[#allocation2 + $0x2a0] sm:$0xff]
    %v135 = vld [vmem:[#allocation2 + $0x2a8] sm:$0xff]
    %v136 = vld [vmem:[#allocation2 + $0x2b0] sm:$0xff]
    %v137 = vld [vmem:[#allocation2 + $0x2b8] sm:$0xff]
    %v138 = vld [vmem:[#allocation2 + $0x2c0] sm:$0xff]
    %v139 = vld [vmem:[#allocation2 + $0x2c8] sm:$0xff]
    %v140 = vld [vmem:[#allocation2 + $0x2d0] sm:$0xff]
    %v141 = vld [vmem:[#allocation2 + $0x2d8] sm:$0xff]
    %v142 = vld [vmem:[#allocation2 + $0x2e0] sm:$0xff]
    %v143 = vld [vmem:[#allocation2 + $0x2e8] sm:$0xff]
    %v144 = vld [vmem:[#allocation2 + $0x2f0] sm:$0xff]
    %v145 = vld [vmem:[#allocation2 + $0x2f8] sm:$0xff]
    %v146 = vld [vmem:[#allocation2 + $0x300] sm:$0xff]
    %v147 = vld [vmem:[#allocation2 + $0x308] sm:$0xff]
    %v148 = vld [vmem:[#allocation2 + $0x310] sm:$0xff]
    %v149 = vld [vmem:[#allocation2 + $0x318] sm:$0xff]
    %v150 = vld [vmem:[#allocation2 + $0x320] sm:$0xff]
    %v151 = vld [vmem:[#allocation2 + $0x328] sm:$0xff]
    %v152 = vld [vmem:[#allocation2 + $0x330] sm:$0xff]
    %v153 = vld [vmem:[#allocation2 + $0x338] sm:$0xff]
    %v154 = vld [vmem:[#allocation2 + $0x340] sm:$0xff]
    %v155 = vld [vmem:[#allocation2 + $0x348] sm:$0xff]
    %v156 = vld [vmem:[#allocation2 + $0x350] sm:$0xff]
    %v157 = vld [vmem:[#allocation2 + $0x358] sm:$0xff]
    %v158 = vld [vmem:[#allocation2 + $0x360] sm:$0xff]
    %v159 = vld [vmem:[#allocation2 + $0x368] sm:$0xff]
    %v160 = vld [vmem:[#allocation2 + $0x370] sm:$0xff]
    %v161 = vld [vmem:[#allocation2 + $0x378] sm:$0xff]
    %v162 = vld [vmem:[#allocation2 + $0x380] sm:$0xff]
    %v163 = vld [vmem:[#allocation2 + $0x388] sm:$0xff]
    %v164 = vld [vmem:[#allocation2 + $0x390] sm:$0xff]
    %v165 = vld [vmem:[#allocation2 + $0x398] sm:$0xff]
    %v166 = vld [vmem:[#allocation2 + $0x3a0] sm:$0xff]
    %v167 = vld [vmem:[#allocation2 + $0x3a8] sm:$0xff]
    %v168 = vld [vmem:[#allocation2 + $0x3b0] sm:$0xff]
    %v169 = vld [vmem:[#allocation2 + $0x3b8] sm:$0xff]
    %v170 = vld [vmem:[#allocation2 + $0x3c0] sm:$0xff]
    %v171 = vld [vmem:[#allocation2 + $0x3c8] sm:$0xff]
    %v172 = vld [vmem:[#allocation2 + $0x3d0] sm:$0xff]
    %v173 = vld [vmem:[#allocation2 + $0x3d8] sm:$0xff]
    %v174 = vld [vmem:[#allocation2 + $0x3e0] sm:$0xff]
    %v175 = vld [vmem:[#allocation2 + $0x3e8] sm:$0xff]
    %v176 = vld [vmem:[#allocation2 + $0x3f0] sm:$0xff]
    %v177 = vld [vmem:[#allocation2 + $0x3f8] sm:$0xff]
    %v178 = vld [vmem:[#allocation2 + $0x400] sm:$0xff]
    %v179 = vld [vmem:[#allocation2 + $0x408] sm:$0xff]
    %v180 = vld [vmem:[#allocation2 + $0x410] sm:$0xff]
    %v181 = vld [vmem:[#allocation2 + $0x418] sm:$0xff]
    %v182 = vld [vmem:[#allocation2 + $0x420] sm:$0xff]
    %v183 = vld [vmem:[#allocation2 + $0x428] sm:$0xff]
    %v184 = vld [vmem:[#allocation2 + $0x430] sm:$0xff]
    %v185 = vld [vmem:[#allocation2 + $0x438] sm:$0xff]
    %v186 = vld [vmem:[#allocation2 + $0x440] sm:$0xff]
    %v187 = vld [vmem:[#allocation2 + $0x448] sm:$0xff]
    %v188 = vld [vmem:[#allocation2 + $0x450] sm:$0xff]
    %v189 = vld [vmem:[#allocation2 + $0x458] sm:$0xff]
    %v190 = vld [vmem:[#allocation2 + $0x460] sm:$0xff]
    %v191 = vld [vmem:[#allocation2 + $0x468] sm:$0xff]
    %v192 = vld [vmem:[#allocation2 + $0x470] sm:$0xff]
    %v193 = vld [vmem:[#allocation2 + $0x478] sm:$0xff]
    %v194 = vld [vmem:[#allocation2 + $0x480] sm:$0xff]
    %v195 = vld [vmem:[#allocation2 + $0x488] sm:$0xff]
    %v196 = vld [vmem:[#allocation2 + $0x490] sm:$0xff]
    %v197 = vld [vmem:[#allocation2 + $0x498] sm:$0xff]
    %v198 = vld [vmem:[#allocation2 + $0x4a0] sm:$0xff]
    %v199 = vld [vmem:[#allocation2 + $0x4a8] sm:$0xff]
    %v200 = vld [vmem:[#allocation2 + $0x4b0] sm:$0xff]
    %v201 = vld [vmem:[#allocation2 + $0x4b8] sm:$0xff]
    %v202 = vld [vmem:[#allocation2 + $0x4c0] sm:$0xff]
    %v203 = vld [vmem:[#allocation2 + $0x4c8] sm:$0xff]
    %v204 = vld [vmem:[#allocation2 + $0x4d0] sm:$0xff]
    %v205 = vld [vmem:[#allocation2 + $0x4d8] sm:$0xff]
    %v206 = vld [vmem:[#allocation2 + $0x4e0] sm:$0xff]
    %v207 = vld [vmem:[#allocation2 + $0x4e8] sm:$0xff]
    %v208 = vld [vmem:[#allocation2 + $0x4f0] sm:$0xff]
    %v209 = vld [vmem:[#allocation2 + $0x4f8] sm:$0xff]
    %v210 = vld [vmem:[#allocation2 + $0x500] sm:$0xff]
    %v211 = vld [vmem:[#allocation2 + $0x508] sm:$0xff]
    %v212 = vld [vmem:[#allocation2 + $0x510] sm:$0xff]
    %v213 = vld [vmem:[#allocation2 + $0x518] sm:$0xff]
    %v214 = vld [vmem:[#allocation2 + $0x520] sm:$0xff]
    %v215 = vld [vmem:[#allocation2 + $0x528] sm:$0xff]
    %v216 = vld [vmem:[#allocation2 + $0x530] sm:$0xff]
    %v217 = vld [vmem:[#allocation2 + $0x538] sm:$0xff]
    %v218 = vld [vmem:[#allocation2 + $0x540] sm:$0xff]
    %v219 = vld [vmem:[#allocation2 + $0x548] sm:$0xff]
    %v220 = vld [vmem:[#allocation2 + $0x550] sm:$0xff]
    %v221 = vld [vmem:[#allocation2 + $0x558] sm:$0xff]
    %v222 = vld [vmem:[#allocation2 + $0x560] sm:$0xff]
    %v223 = vld [vmem:[#allocation2 + $0x568] sm:$0xff]
    %v224 = vld [vmem:[#allocation2 + $0x570] sm:$0xff]
    %v225 = vld [vmem:[#allocation2 + $0x578] sm:$0xff]
    %v226 = vld [vmem:[#allocation2 + $0x580] sm:$0xff]
    %v227 = vld [vmem:[#allocation2 + $0x588] sm:$0xff]
    %v228 = vld [vmem:[#allocation2 + $0x590] sm:$0xff]
    %v229 = vld [vmem:[#allocation2 + $0x598] sm:$0xff]
    %v230 = vld [vmem:[#allocation2 + $0x5a0] sm:$0xff]
    %v231 = vld [vmem:[#allocation2 + $0x5a8] sm:$0xff]
    %v232 = vld [vmem:[#allocation2 + $0x5b0] sm:$0xff]
    %v233 = vld [vmem:[#allocation2 + $0x5b8] sm:$0xff]
    %v234 = vld [vmem:[#allocation2 + $0x5c0] sm:$0xff]
    %v235 = vld [vmem:[#allocation2 + $0x5c8] sm:$0xff]
    %v236 = vld [vmem:[#allocation2 + $0x5d0] sm:$0xff]
    %v237 = vld [vmem:[#allocation2 + $0x5d8] sm:$0xff]
    %v238 = vld [vmem:[#allocation2 + $0x5e0] sm:$0xff]
    %v239 = vld [vmem:[#allocation2 + $0x5e8] sm:$0xff]
    %v240 = vld [vmem:[#allocation2 + $0x5f0] sm:$0xff]
    %v241 = vld [vmem:[#allocation2 + $0x5f8] sm:$0xff]
    %v242 = vld [vmem:[#allocation2 + $0x600] sm:$0xff]
    %v243 = vld [vmem:[#allocation2 + $0x608] sm:$0xff]
    %v244 = vld [vmem:[#allocation2 + $0x610] sm:$0xff]
    %v245 = vld [vmem:[#allocation2 + $0x618] sm:$0xff]
    %v246 = vld [vmem:[#allocation2 + $0x620] sm:$0xff]
    %v247 = vld [vmem:[#allocation2 + $0x628] sm:$0xff]
    %v248 = vld [vmem:[#allocation2 + $0x630] sm:$0xff]
    %v249 = vld [vmem:[#allocation2 + $0x638] sm:$0xff]
    %v250 = vld [vmem:[#allocation2 + $0x640] sm:$0xff]
    %v251 = vld [vmem:[#allocation2 + $0x648] sm:$0xff]
    %v252 = vld [vmem:[#allocation2 + $0x650] sm:$0xff]
    %v253 = vld [vmem:[#allocation2 + $0x658] sm:$0xff]
    %v254 = vld [vmem:[#allocation2 + $0x660] sm:$0xff]
    %v255 = vld [vmem:[#allocation2 + $0x668] sm:$0xff]
    %v256 = vld [vmem:[#allocation2 + $0x670] sm:$0xff]
    %v257 = vld [vmem:[#allocation2 + $0x678] sm:$0xff]
    %v258 = vld [vmem:[#allocation2 + $0x680] sm:$0xff]
    %v259 = vld [vmem:[#allocation2 + $0x688] sm:$0xff]
    %v260 = vld [vmem:[#allocation2 + $0x690] sm:$0xff]
    %v261 = vld [vmem:[#allocation2 + $0x698] sm:$0xff]
    %v262 = vld [vmem:[#allocation2 + $0x6a0] sm:$0xff]
    %v263 = vld [vmem:[#allocation2 + $0x6a8] sm:$0xff]
    %v264 = vld [vmem:[#allocation2 + $0x6b0] sm:$0xff]
    %v265 = vld [vmem:[#allocation2 + $0x6b8] sm:$0xff]
    %v266 = vld [vmem:[#allocation2 + $0x6c0] sm:$0xff]
    %v267 = vld [vmem:[#allocation2 + $0x6c8] sm:$0xff]
    %v268 = vld [vmem:[#allocation2 + $0x6d0] sm:$0xff]
    %v269 = vld [vmem:[#allocation2 + $0x6d8] sm:$0xff]
    %v270 = vld [vmem:[#allocation2 + $0x6e0] sm:$0xff]
    %v271 = vld [vmem:[#allocation2 + $0x6e8] sm:$0xff]
    %v272 = vld [vmem:[#allocation2 + $0x6f0] sm:$0xff]
    %v273 = vld [vmem:[#allocation2 + $0x6f8] sm:$0xff]
    %v274 = vld [vmem:[%s2] sm:$0xf]
    %v276 = vperm.slane %v274, 0
    %v277 = vperm.slane %v274, 1
    %v278 = vperm.slane %v274, 2
    %v279 = vperm.slane %v274, 3
    %v292 = vunpack.c.l.b16 %v42
    %v293 = vunpack.c.h.b16 %v42
    %v294 = vunpack.c.l.b16 %v43
    %v295 = vunpack.c.h.b16 %v43
    %v296 = vunpack.c.l.b16 %v44
    %v297 = vunpack.c.h.b16 %v44
    %v298 = vunpack.c.l.b16 %v45
    %v299 = vunpack.c.l.b16 %v46
    %v300 = vunpack.c.h.b16 %v46
    %v301 = vunpack.c.l.b16 %v47
    %v302 = vunpack.c.h.b16 %v47
    %v303 = vunpack.c.l.b16 %v48
    %v304 = vunpack.c.h.b16 %v48
    %v305 = vunpack.c.l.b16 %v49
    %v306 = vpack.c.b16 %v299, %v292
    %v307 = vpack.c.b16 %v300, %v293
    %v308 = vpack.c.b16 %v301, %v294
    %v309 = vpack.c.b16 %v302, %v295
    %v310 = vpack.c.b16 %v303, %v296
    %v311 = vpack.c.b16 %v304, %v297
    %v312 = vpack.c.b16 %v305, %v298
    %v544 = vunpack.c.l.b16 %v50
    %v545 = vunpack.c.h.b16 %v50
    %v546 = vunpack.c.l.b16 %v51
    %v547 = vunpack.c.h.b16 %v51
    %v548 = vunpack.c.l.b16 %v52
    %v549 = vunpack.c.h.b16 %v52
    %v550 = vunpack.c.l.b16 %v53
    %v551 = vunpack.c.h.b16 %v53
    %v552 = vunpack.c.l.b16 %v54
    %v553 = vunpack.c.h.b16 %v54
    %v554 = vunpack.c.l.b16 %v55
    %v555 = vunpack.c.h.b16 %v55
    %v556 = vunpack.c.l.b16 %v56
    %v557 = vunpack.c.h.b16 %v56
    %v558 = vunpack.c.l.b16 %v57
    %v559 = vunpack.c.h.b16 %v57
    %v560 = vunpack.c.l.b16 %v58
    %v561 = vunpack.c.h.b16 %v58
    %v562 = vunpack.c.l.b16 %v59
    %v563 = vunpack.c.h.b16 %v59
    %v564 = vunpack.c.l.b16 %v60
    %v565 = vunpack.c.h.b16 %v60
    %v566 = vunpack.c.l.b16 %v61
    %v567 = vunpack.c.h.b16 %v61
    %v568 = vunpack.c.l.b16 %v62
    %v569 = vunpack.c.h.b16 %v62
    %v570 = vunpack.c.l.b16 %v63
    %v571 = vunpack.c.h.b16 %v63
    %v572 = vunpack.c.l.b16 %v64
    %v573 = vunpack.c.h.b16 %v64
    %v574 = vunpack.c.l.b16 %v65
    %v575 = vunpack.c.h.b16 %v65
    %v576 = vunpack.c.l.b16 %v66
    %v577 = vunpack.c.h.b16 %v66
    %v578 = vunpack.c.l.b16 %v67
    %v579 = vunpack.c.h.b16 %v67
    %v580 = vunpack.c.l.b16 %v68
    %v581 = vunpack.c.h.b16 %v68
    %v582 = vunpack.c.l.b16 %v69
    %v583 = vunpack.c.h.b16 %v69
    %v584 = vunpack.c.l.b16 %v70
    %v585 = vunpack.c.h.b16 %v70
    %v586 = vunpack.c.l.b16 %v71
    %v587 = vunpack.c.h.b16 %v71
    %v588 = vunpack.c.l.b16 %v72
    %v589 = vunpack.c.h.b16 %v72
    %v590 = vunpack.c.l.b16 %v73
    %v591 = vunpack.c.h.b16 %v73
    %v592 = vunpack.c.l.b16 %v74
    %v593 = vunpack.c.h.b16 %v74
    %v594 = vunpack.c.l.b16 %v75
    %v595 = vunpack.c.h.b16 %v75
    %v596 = vunpack.c.l.b16 %v76
    %v597 = vunpack.c.h.b16 %v76
    %v598 = vunpack.c.l.b16 %v77
    %v599 = vunpack.c.h.b16 %v77
    %v600 = vunpack.c.l.b16 %v78
    %v601 = vunpack.c.h.b16 %v78
    %v602 = vunpack.c.l.b16 %v79
    %v603 = vunpack.c.h.b16 %v79
    %v604 = vunpack.c.l.b16 %v80
    %v605 = vunpack.c.h.b16 %v80
    %v606 = vunpack.c.l.b16 %v81
    %v607 = vunpack.c.h.b16 %v81
    %v608 = vunpack.c.l.b16 %v82
    %v609 = vunpack.c.h.b16 %v82
    %v610 = vunpack.c.l.b16 %v83
    %v611 = vunpack.c.h.b16 %v83
    %v612 = vunpack.c.l.b16 %v84
    %v613 = vunpack.c.h.b16 %v84
    %v614 = vunpack.c.l.b16 %v85
    %v615 = vunpack.c.h.b16 %v85
    %v616 = vunpack.c.l.b16 %v86
    %v617 = vunpack.c.h.b16 %v86
    %v618 = vunpack.c.l.b16 %v87
    %v619 = vunpack.c.h.b16 %v87
    %v620 = vunpack.c.l.b16 %v88
    %v621 = vunpack.c.h.b16 %v88
    %v622 = vunpack.c.l.b16 %v89
    %v623 = vunpack.c.h.b16 %v89
    %v624 = vunpack.c.l.b16 %v90
    %v625 = vunpack.c.h.b16 %v90
    %v626 = vunpack.c.l.b16 %v91
    %v627 = vunpack.c.h.b16 %v91
    %v628 = vunpack.c.l.b16 %v92
    %v629 = vunpack.c.h.b16 %v92
    %v630 = vunpack.c.l.b16 %v93
    %v631 = vunpack.c.h.b16 %v93
    %v632 = vunpack.c.l.b16 %v94
    %v633 = vunpack.c.h.b16 %v94
    %v634 = vunpack.c.l.b16 %v95
    %v635 = vunpack.c.h.b16 %v95
    %v636 = vunpack.c.l.b16 %v96
    %v637 = vunpack.c.h.b16 %v96
    %v638 = vunpack.c.l.b16 %v97
    %v639 = vunpack.c.h.b16 %v97
    %v640 = vunpack.c.l.b16 %v98
    %v641 = vunpack.c.h.b16 %v98
    %v642 = vunpack.c.l.b16 %v99
    %v643 = vunpack.c.h.b16 %v99
    %v644 = vunpack.c.l.b16 %v100
    %v645 = vunpack.c.h.b16 %v100
    %v646 = vunpack.c.l.b16 %v101
    %v647 = vunpack.c.h.b16 %v101
    %v648 = vunpack.c.l.b16 %v102
    %v649 = vunpack.c.h.b16 %v102
    %v650 = vunpack.c.l.b16 %v103
    %v651 = vunpack.c.h.b16 %v103
    %v652 = vunpack.c.l.b16 %v104
    %v653 = vunpack.c.h.b16 %v104
    %v654 = vunpack.c.l.b16 %v105
    %v655 = vunpack.c.h.b16 %v105
    %v656 = vunpack.c.l.b16 %v106
    %v657 = vunpack.c.h.b16 %v106
    %v658 = vunpack.c.l.b16 %v107
    %v659 = vunpack.c.h.b16 %v107
    %v660 = vunpack.c.l.b16 %v108
    %v661 = vunpack.c.h.b16 %v108
    %v662 = vunpack.c.l.b16 %v109
    %v663 = vunpack.c.h.b16 %v109
    %v664 = vunpack.c.l.b16 %v110
    %v665 = vunpack.c.h.b16 %v110
    %v666 = vunpack.c.l.b16 %v111
    %v667 = vunpack.c.h.b16 %v111
    %v668 = vunpack.c.l.b16 %v112
    %v669 = vunpack.c.h.b16 %v112
    %v670 = vunpack.c.l.b16 %v113
    %v671 = vunpack.c.h.b16 %v113
    %v672 = vunpack.c.l.b16 %v114
    %v673 = vunpack.c.h.b16 %v114
    %v674 = vunpack.c.l.b16 %v115
    %v675 = vunpack.c.h.b16 %v115
    %v676 = vunpack.c.l.b16 %v116
    %v677 = vunpack.c.h.b16 %v116
    %v678 = vunpack.c.l.b16 %v117
    %v679 = vunpack.c.h.b16 %v117
    %v680 = vunpack.c.l.b16 %v118
    %v681 = vunpack.c.h.b16 %v118
    %v682 = vunpack.c.l.b16 %v119
    %v683 = vunpack.c.h.b16 %v119
    %v684 = vunpack.c.l.b16 %v120
    %v685 = vunpack.c.h.b16 %v120
    %v686 = vunpack.c.l.b16 %v121
    %v687 = vunpack.c.h.b16 %v121
    %v688 = vunpack.c.l.b16 %v122
    %v689 = vunpack.c.h.b16 %v122
    %v690 = vunpack.c.l.b16 %v123
    %v691 = vunpack.c.h.b16 %v123
    %v692 = vunpack.c.l.b16 %v124
    %v693 = vunpack.c.h.b16 %v124
    %v694 = vunpack.c.l.b16 %v125
    %v695 = vunpack.c.h.b16 %v125
    %v696 = vunpack.c.l.b16 %v126
    %v697 = vunpack.c.h.b16 %v126
    %v698 = vunpack.c.l.b16 %v127
    %v699 = vunpack.c.h.b16 %v127
    %v700 = vunpack.c.l.b16 %v128
    %v701 = vunpack.c.h.b16 %v128
    %v702 = vunpack.c.l.b16 %v129
    %v703 = vunpack.c.h.b16 %v129
    %v704 = vunpack.c.l.b16 %v130
    %v705 = vunpack.c.h.b16 %v130
    %v706 = vunpack.c.l.b16 %v131
    %v707 = vunpack.c.h.b16 %v131
    %v708 = vunpack.c.l.b16 %v132
    %v709 = vunpack.c.h.b16 %v132
    %v710 = vunpack.c.l.b16 %v133
    %v711 = vunpack.c.h.b16 %v133
    %v712 = vunpack.c.l.b16 %v134
    %v713 = vunpack.c.h.b16 %v134
    %v714 = vunpack.c.l.b16 %v135
    %v715 = vunpack.c.h.b16 %v135
    %v716 = vunpack.c.l.b16 %v136
    %v717 = vunpack.c.h.b16 %v136
    %v718 = vunpack.c.l.b16 %v137
    %v719 = vunpack.c.h.b16 %v137
    %v720 = vunpack.c.l.b16 %v138
    %v721 = vunpack.c.h.b16 %v138
    %v722 = vunpack.c.l.b16 %v139
    %v723 = vunpack.c.h.b16 %v139
    %v724 = vunpack.c.l.b16 %v140
    %v725 = vunpack.c.h.b16 %v140
    %v726 = vunpack.c.l.b16 %v141
    %v727 = vunpack.c.h.b16 %v141
    %v728 = vunpack.c.l.b16 %v142
    %v729 = vunpack.c.h.b16 %v142
    %v730 = vunpack.c.l.b16 %v143
    %v731 = vunpack.c.h.b16 %v143
    %v732 = vunpack.c.l.b16 %v144
    %v733 = vunpack.c.h.b16 %v144
    %v734 = vunpack.c.l.b16 %v145
    %v735 = vunpack.c.h.b16 %v145
    %v736 = vunpack.c.l.b16 %v146
    %v737 = vunpack.c.h.b16 %v146
    %v738 = vunpack.c.l.b16 %v147
    %v739 = vunpack.c.h.b16 %v147
    %v740 = vunpack.c.l.b16 %v148
    %v741 = vunpack.c.h.b16 %v148
    %v742 = vunpack.c.l.b16 %v149
    %v743 = vunpack.c.h.b16 %v149
    %v744 = vunpack.c.l.b16 %v150
    %v745 = vunpack.c.h.b16 %v150
    %v746 = vunpack.c.l.b16 %v151
    %v747 = vunpack.c.h.b16 %v151
    %v748 = vunpack.c.l.b16 %v152
    %v749 = vunpack.c.h.b16 %v152
    %v750 = vunpack.c.l.b16 %v153
    %v751 = vunpack.c.h.b16 %v153
    %v752 = vunpack.c.l.b16 %v154
    %v753 = vunpack.c.h.b16 %v154
    %v754 = vunpack.c.l.b16 %v155
    %v755 = vunpack.c.h.b16 %v155
    %v756 = vunpack.c.l.b16 %v156
    %v757 = vunpack.c.h.b16 %v156
    %v758 = vunpack.c.l.b16 %v157
    %v759 = vunpack.c.h.b16 %v157
    %v760 = vunpack.c.l.b16 %v158
    %v761 = vunpack.c.h.b16 %v158
    %v762 = vunpack.c.l.b16 %v159
    %v763 = vunpack.c.h.b16 %v159
    %v764 = vunpack.c.l.b16 %v160
    %v765 = vunpack.c.h.b16 %v160
    %v766 = vunpack.c.l.b16 %v161
    %v767 = vunpack.c.h.b16 %v161
    %v768 = vunpack.c.l.b16 %v162
    %v769 = vunpack.c.h.b16 %v162
    %v770 = vunpack.c.l.b16 %v163
    %v771 = vunpack.c.h.b16 %v163
    %v772 = vunpack.c.l.b16 %v164
    %v773 = vunpack.c.h.b16 %v164
    %v774 = vunpack.c.l.b16 %v165
    %v775 = vunpack.c.h.b16 %v165
    %v776 = vunpack.c.l.b16 %v166
    %v777 = vunpack.c.h.b16 %v166
    %v778 = vunpack.c.l.b16 %v167
    %v779 = vunpack.c.h.b16 %v167
    %v780 = vunpack.c.l.b16 %v168
    %v781 = vunpack.c.h.b16 %v168
    %v782 = vunpack.c.l.b16 %v169
    %v783 = vunpack.c.h.b16 %v169
    %v784 = vunpack.c.l.b16 %v170
    %v785 = vunpack.c.h.b16 %v170
    %v786 = vunpack.c.l.b16 %v171
    %v787 = vunpack.c.h.b16 %v171
    %v788 = vunpack.c.l.b16 %v172
    %v789 = vunpack.c.h.b16 %v172
    %v790 = vunpack.c.l.b16 %v173
    %v791 = vunpack.c.h.b16 %v173
    %v792 = vunpack.c.l.b16 %v174
    %v793 = vunpack.c.h.b16 %v174
    %v794 = vunpack.c.l.b16 %v175
    %v795 = vunpack.c.h.b16 %v175
    %v796 = vunpack.c.l.b16 %v176
    %v797 = vunpack.c.h.b16 %v176
    %v798 = vunpack.c.l.b16 %v177
    %v799 = vunpack.c.h.b16 %v177
    %v800 = vunpack.c.l.b16 %v178
    %v801 = vunpack.c.h.b16 %v178
    %v802 = vunpack.c.l.b16 %v179
    %v803 = vunpack.c.h.b16 %v179
    %v804 = vunpack.c.l.b16 %v180
    %v805 = vunpack.c.h.b16 %v180
    %v806 = vunpack.c.l.b16 %v181
    %v807 = vunpack.c.h.b16 %v181
    %v808 = vunpack.c.l.b16 %v182
    %v809 = vunpack.c.h.b16 %v182
    %v810 = vunpack.c.l.b16 %v183
    %v811 = vunpack.c.h.b16 %v183
    %v812 = vunpack.c.l.b16 %v184
    %v813 = vunpack.c.h.b16 %v184
    %v814 = vunpack.c.l.b16 %v185
    %v815 = vunpack.c.h.b16 %v185
    %v816 = vunpack.c.l.b16 %v186
    %v817 = vunpack.c.h.b16 %v186
    %v818 = vunpack.c.l.b16 %v187
    %v819 = vunpack.c.h.b16 %v187
    %v820 = vunpack.c.l.b16 %v188
    %v821 = vunpack.c.h.b16 %v188
    %v822 = vunpack.c.l.b16 %v189
    %v823 = vunpack.c.h.b16 %v189
    %v824 = vunpack.c.l.b16 %v190
    %v825 = vunpack.c.h.b16 %v190
    %v826 = vunpack.c.l.b16 %v191
    %v827 = vunpack.c.h.b16 %v191
    %v828 = vunpack.c.l.b16 %v192
    %v829 = vunpack.c.h.b16 %v192
    %v830 = vunpack.c.l.b16 %v193
    %v831 = vunpack.c.h.b16 %v193
    %v832 = vunpack.c.l.b16 %v194
    %v833 = vunpack.c.h.b16 %v194
    %v834 = vunpack.c.l.b16 %v195
    %v835 = vunpack.c.h.b16 %v195
    %v836 = vunpack.c.l.b16 %v196
    %v837 = vunpack.c.h.b16 %v196
    %v838 = vunpack.c.l.b16 %v197
    %v839 = vunpack.c.h.b16 %v197
    %v840 = vunpack.c.l.b16 %v198
    %v841 = vunpack.c.h.b16 %v198
    %v842 = vunpack.c.l.b16 %v199
    %v843 = vunpack.c.h.b16 %v199
    %v844 = vunpack.c.l.b16 %v200
    %v845 = vunpack.c.h.b16 %v200
    %v846 = vunpack.c.l.b16 %v201
    %v847 = vunpack.c.h.b16 %v201
    %v848 = vunpack.c.l.b16 %v202
    %v849 = vunpack.c.h.b16 %v202
    %v850 = vunpack.c.l.b16 %v203
    %v851 = vunpack.c.h.b16 %v203
    %v852 = vunpack.c.l.b16 %v204
    %v853 = vunpack.c.h.b16 %v204
    %v854 = vunpack.c.l.b16 %v205
    %v855 = vunpack.c.h.b16 %v205
    %v856 = vunpack.c.l.b16 %v206
    %v857 = vunpack.c.h.b16 %v206
    %v858 = vunpack.c.l.b16 %v207
    %v859 = vunpack.c.h.b16 %v207
    %v860 = vunpack.c.l.b16 %v208
    %v861 = vunpack.c.h.b16 %v208
    %v862 = vunpack.c.l.b16 %v209
    %v863 = vunpack.c.h.b16 %v209
    %v864 = vunpack.c.l.b16 %v210
    %v865 = vunpack.c.h.b16 %v210
    %v866 = vunpack.c.l.b16 %v211
    %v867 = vunpack.c.h.b16 %v211
    %v868 = vunpack.c.l.b16 %v212
    %v869 = vunpack.c.h.b16 %v212
    %v870 = vunpack.c.l.b16 %v213
    %v871 = vunpack.c.h.b16 %v213
    %v872 = vunpack.c.l.b16 %v214
    %v873 = vunpack.c.h.b16 %v214
    %v874 = vunpack.c.l.b16 %v215
    %v875 = vunpack.c.h.b16 %v215
    %v876 = vunpack.c.l.b16 %v216
    %v877 = vunpack.c.h.b16 %v216
    %v878 = vunpack.c.l.b16 %v217
    %v879 = vunpack.c.h.b16 %v217
    %v880 = vunpack.c.l.b16 %v218
    %v881 = vunpack.c.h.b16 %v218
    %v882 = vunpack.c.l.b16 %v219
    %v883 = vunpack.c.h.b16 %v219
    %v884 = vunpack.c.l.b16 %v220
    %v885 = vunpack.c.h.b16 %v220
    %v886 = vunpack.c.l.b16 %v221
    %v887 = vunpack.c.h.b16 %v221
    %v888 = vunpack.c.l.b16 %v222
    %v889 = vunpack.c.h.b16 %v222
    %v890 = vunpack.c.l.b16 %v223
    %v891 = vunpack.c.h.b16 %v223
    %v892 = vunpack.c.l.b16 %v224
    %v893 = vunpack.c.h.b16 %v224
    %v894 = vunpack.c.l.b16 %v225
    %v895 = vunpack.c.h.b16 %v225
    %v896 = vunpack.c.l.b16 %v226
    %v897 = vunpack.c.h.b16 %v226
    %v898 = vunpack.c.l.b16 %v227
    %v899 = vunpack.c.h.b16 %v227
    %v900 = vunpack.c.l.b16 %v228
    %v901 = vunpack.c.h.b16 %v228
    %v902 = vunpack.c.l.b16 %v229
    %v903 = vunpack.c.h.b16 %v229
    %v904 = vunpack.c.l.b16 %v230
    %v905 = vunpack.c.h.b16 %v230
    %v906 = vunpack.c.l.b16 %v231
    %v907 = vunpack.c.h.b16 %v231
    %v908 = vunpack.c.l.b16 %v232
    %v909 = vunpack.c.h.b16 %v232
    %v910 = vunpack.c.l.b16 %v233
    %v911 = vunpack.c.h.b16 %v233
    %v912 = vunpack.c.l.b16 %v234
    %v913 = vunpack.c.h.b16 %v234
    %v914 = vunpack.c.l.b16 %v235
    %v915 = vunpack.c.h.b16 %v235
    %v916 = vunpack.c.l.b16 %v236
    %v917 = vunpack.c.h.b16 %v236
    %v918 = vunpack.c.l.b16 %v237
    %v919 = vunpack.c.h.b16 %v237
    %v920 = vunpack.c.l.b16 %v238
    %v921 = vunpack.c.h.b16 %v238
    %v922 = vunpack.c.l.b16 %v239
    %v923 = vunpack.c.h.b16 %v239
    %v924 = vunpack.c.l.b16 %v240
    %v925 = vunpack.c.h.b16 %v240
    %v926 = vunpack.c.l.b16 %v241
    %v927 = vunpack.c.h.b16 %v241
    %v928 = vunpack.c.l.b16 %v242
    %v929 = vunpack.c.h.b16 %v242
    %v930 = vunpack.c.l.b16 %v243
    %v931 = vunpack.c.h.b16 %v243
    %v932 = vunpack.c.l.b16 %v244
    %v933 = vunpack.c.h.b16 %v244
    %v934 = vunpack.c.l.b16 %v245
    %v935 = vunpack.c.h.b16 %v245
    %v936 = vunpack.c.l.b16 %v246
    %v937 = vunpack.c.h.b16 %v246
    %v938 = vunpack.c.l.b16 %v247
    %v939 = vunpack.c.h.b16 %v247
    %v940 = vunpack.c.l.b16 %v248
    %v941 = vunpack.c.h.b16 %v248
    %v942 = vunpack.c.l.b16 %v249
    %v943 = vunpack.c.h.b16 %v249
    %v944 = vunpack.c.l.b16 %v250
    %v945 = vunpack.c.h.b16 %v250
    %v946 = vunpack.c.l.b16 %v251
    %v947 = vunpack.c.h.b16 %v251
    %v948 = vunpack.c.l.b16 %v252
    %v949 = vunpack.c.h.b16 %v252
    %v950 = vunpack.c.l.b16 %v253
    %v951 = vunpack.c.h.b16 %v253
    %v952 = vunpack.c.l.b16 %v254
    %v953 = vunpack.c.h.b16 %v254
    %v954 = vunpack.c.l.b16 %v255
    %v955 = vunpack.c.h.b16 %v255
    %v956 = vunpack.c.l.b16 %v256
    %v957 = vunpack.c.h.b16 %v256
    %v958 = vunpack.c.l.b16 %v257
    %v959 = vunpack.c.h.b16 %v257
    %v960 = vunpack.c.l.b16 %v258
    %v961 = vunpack.c.h.b16 %v258
    %v962 = vunpack.c.l.b16 %v259
    %v963 = vunpack.c.h.b16 %v259
    %v964 = vunpack.c.l.b16 %v260
    %v965 = vunpack.c.h.b16 %v260
    %v966 = vunpack.c.l.b16 %v261
    %v967 = vunpack.c.h.b16 %v261
    %v968 = vunpack.c.l.b16 %v262
    %v969 = vunpack.c.h.b16 %v262
    %v970 = vunpack.c.l.b16 %v263
    %v971 = vunpack.c.h.b16 %v263
    %v972 = vunpack.c.l.b16 %v264
    %v973 = vunpack.c.h.b16 %v264
    %v974 = vunpack.c.l.b16 %v265
    %v975 = vunpack.c.h.b16 %v265
    %v976 = vunpack.c.l.b16 %v266
    %v977 = vunpack.c.h.b16 %v266
    %v978 = vunpack.c.l.b16 %v267
    %v979 = vunpack.c.h.b16 %v267
    %v980 = vunpack.c.l.b16 %v268
    %v981 = vunpack.c.h.b16 %v268
    %v982 = vunpack.c.l.b16 %v269
    %v983 = vunpack.c.h.b16 %v269
    %v984 = vunpack.c.l.b16 %v270
    %v985 = vunpack.c.h.b16 %v270
    %v986 = vunpack.c.l.b16 %v271
    %v987 = vunpack.c.h.b16 %v271
    %v988 = vunpack.c.l.b16 %v272
    %v989 = vunpack.c.h.b16 %v272
    %v990 = vunpack.c.l.b16 %v273
    %v991 = vunpack.c.h.b16 %v273
    %v992 = vpack.c.b16 %v548, %v544
    %v993 = vpack.c.b16 %v549, %v545
    %v994 = vpack.c.b16 %v550, %v546
    %v995 = vpack.c.b16 %v551, %v547
    %v996 = vpack.c.b16 %v556, %v552
    %v997 = vpack.c.b16 %v557, %v553
    %v998 = vpack.c.b16 %v558, %v554
    %v999 = vpack.c.b16 %v559, %v555
    %v1000 = vpack.c.b16 %v564, %v560
    %v1001 = vpack.c.b16 %v565, %v561
    %v1002 = vpack.c.b16 %v566, %v562
    %v1003 = vpack.c.b16 %v567, %v563
    %v1004 = vpack.c.b16 %v572, %v568
    %v1005 = vpack.c.b16 %v573, %v569
    %v1006 = vpack.c.b16 %v574, %v570
    %v1007 = vpack.c.b16 %v575, %v571
    %v1008 = vpack.c.b16 %v580, %v576
    %v1009 = vpack.c.b16 %v581, %v577
    %v1010 = vpack.c.b16 %v582, %v578
    %v1011 = vpack.c.b16 %v583, %v579
    %v1012 = vpack.c.b16 %v588, %v584
    %v1013 = vpack.c.b16 %v589, %v585
    %v1014 = vpack.c.b16 %v590, %v586
    %v1015 = vpack.c.b16 %v591, %v587
    %v1016 = vpack.c.b16 %v596, %v592
    %v1017 = vpack.c.b16 %v597, %v593
    %v1018 = vpack.c.b16 %v598, %v594
    %v1019 = vpack.c.b16 %v599, %v595
    %v1020 = vpack.c.b16 %v604, %v600
    %v1021 = vpack.c.b16 %v605, %v601
    %v1022 = vpack.c.b16 %v606, %v602
    %v1023 = vpack.c.b16 %v607, %v603
    %v1024 = vpack.c.b16 %v612, %v608
    %v1025 = vpack.c.b16 %v613, %v609
    %v1026 = vpack.c.b16 %v614, %v610
    %v1027 = vpack.c.b16 %v615, %v611
    %v1028 = vpack.c.b16 %v620, %v616
    %v1029 = vpack.c.b16 %v621, %v617
    %v1030 = vpack.c.b16 %v622, %v618
    %v1031 = vpack.c.b16 %v623, %v619
    %v1032 = vpack.c.b16 %v628, %v624
    %v1033 = vpack.c.b16 %v629, %v625
    %v1034 = vpack.c.b16 %v630, %v626
    %v1035 = vpack.c.b16 %v631, %v627
    %v1036 = vpack.c.b16 %v636, %v632
    %v1037 = vpack.c.b16 %v637, %v633
    %v1038 = vpack.c.b16 %v638, %v634
    %v1039 = vpack.c.b16 %v639, %v635
    %v1040 = vpack.c.b16 %v644, %v640
    %v1041 = vpack.c.b16 %v645, %v641
    %v1042 = vpack.c.b16 %v646, %v642
    %v1043 = vpack.c.b16 %v647, %v643
    %v1044 = vpack.c.b16 %v652, %v648
    %v1045 = vpack.c.b16 %v653, %v649
    %v1046 = vpack.c.b16 %v654, %v650
    %v1047 = vpack.c.b16 %v655, %v651
    %v1048 = vpack.c.b16 %v660, %v656
    %v1049 = vpack.c.b16 %v661, %v657
    %v1050 = vpack.c.b16 %v662, %v658
    %v1051 = vpack.c.b16 %v663, %v659
    %v1052 = vpack.c.b16 %v668, %v664
    %v1053 = vpack.c.b16 %v669, %v665
    %v1054 = vpack.c.b16 %v670, %v666
    %v1055 = vpack.c.b16 %v671, %v667
    %v1056 = vpack.c.b16 %v676, %v672
    %v1057 = vpack.c.b16 %v677, %v673
    %v1058 = vpack.c.b16 %v678, %v674
    %v1059 = vpack.c.b16 %v679, %v675
    %v1060 = vpack.c.b16 %v684, %v680
    %v1061 = vpack.c.b16 %v685, %v681
    %v1062 = vpack.c.b16 %v686, %v682
    %v1063 = vpack.c.b16 %v687, %v683
    %v1064 = vpack.c.b16 %v692, %v688
    %v1065 = vpack.c.b16 %v693, %v689
    %v1066 = vpack.c.b16 %v694, %v690
    %v1067 = vpack.c.b16 %v695, %v691
    %v1068 = vpack.c.b16 %v700, %v696
    %v1069 = vpack.c.b16 %v701, %v697
    %v1070 = vpack.c.b16 %v702, %v698
    %v1071 = vpack.c.b16 %v703, %v699
    %v1072 = vpack.c.b16 %v708, %v704
    %v1073 = vpack.c.b16 %v709, %v705
    %v1074 = vpack.c.b16 %v710, %v706
    %v1075 = vpack.c.b16 %v711, %v707
    %v1076 = vpack.c.b16 %v716, %v712
    %v1077 = vpack.c.b16 %v717, %v713
    %v1078 = vpack.c.b16 %v718, %v714
    %v1079 = vpack.c.b16 %v719, %v715
    %v1080 = vpack.c.b16 %v724, %v720
    %v1081 = vpack.c.b16 %v725, %v721
    %v1082 = vpack.c.b16 %v726, %v722
    %v1083 = vpack.c.b16 %v727, %v723
    %v1084 = vpack.c.b16 %v732, %v728
    %v1085 = vpack.c.b16 %v733, %v729
    %v1086 = vpack.c.b16 %v734, %v730
    %v1087 = vpack.c.b16 %v735, %v731
    %v1088 = vpack.c.b16 %v740, %v736
    %v1089 = vpack.c.b16 %v741, %v737
    %v1090 = vpack.c.b16 %v742, %v738
    %v1091 = vpack.c.b16 %v743, %v739
    %v1092 = vpack.c.b16 %v748, %v744
    %v1093 = vpack.c.b16 %v749, %v745
    %v1094 = vpack.c.b16 %v750, %v746
    %v1095 = vpack.c.b16 %v751, %v747
    %v1096 = vpack.c.b16 %v756, %v752
    %v1097 = vpack.c.b16 %v757, %v753
    %v1098 = vpack.c.b16 %v758, %v754
    %v1099 = vpack.c.b16 %v759, %v755
    %v1100 = vpack.c.b16 %v764, %v760
    %v1101 = vpack.c.b16 %v765, %v761
    %v1102 = vpack.c.b16 %v766, %v762
    %v1103 = vpack.c.b16 %v767, %v763
    %v1104 = vpack.c.b16 %v772, %v768
    %v1105 = vpack.c.b16 %v773, %v769
    %v1106 = vpack.c.b16 %v774, %v770
    %v1107 = vpack.c.b16 %v775, %v771
    %v1108 = vpack.c.b16 %v780, %v776
    %v1109 = vpack.c.b16 %v781, %v777
    %v1110 = vpack.c.b16 %v782, %v778
    %v1111 = vpack.c.b16 %v783, %v779
    %v1112 = vpack.c.b16 %v788, %v784
    %v1113 = vpack.c.b16 %v789, %v785
    %v1114 = vpack.c.b16 %v790, %v786
    %v1115 = vpack.c.b16 %v791, %v787
    %v1116 = vpack.c.b16 %v796, %v792
    %v1117 = vpack.c.b16 %v797, %v793
    %v1118 = vpack.c.b16 %v798, %v794
    %v1119 = vpack.c.b16 %v799, %v795
    %v1120 = vpack.c.b16 %v804, %v800
    %v1121 = vpack.c.b16 %v805, %v801
    %v1122 = vpack.c.b16 %v806, %v802
    %v1123 = vpack.c.b16 %v807, %v803
    %v1124 = vpack.c.b16 %v812, %v808
    %v1125 = vpack.c.b16 %v813, %v809
    %v1126 = vpack.c.b16 %v814, %v810
    %v1127 = vpack.c.b16 %v815, %v811
    %v1128 = vpack.c.b16 %v820, %v816
    %v1129 = vpack.c.b16 %v821, %v817
    %v1130 = vpack.c.b16 %v822, %v818
    %v1131 = vpack.c.b16 %v823, %v819
    %v1132 = vpack.c.b16 %v828, %v824
    %v1133 = vpack.c.b16 %v829, %v825
    %v1134 = vpack.c.b16 %v830, %v826
    %v1135 = vpack.c.b16 %v831, %v827
    %v1136 = vpack.c.b16 %v836, %v832
    %v1137 = vpack.c.b16 %v837, %v833
    %v1138 = vpack.c.b16 %v838, %v834
    %v1139 = vpack.c.b16 %v839, %v835
    %v1140 = vpack.c.b16 %v844, %v840
    %v1141 = vpack.c.b16 %v845, %v841
    %v1142 = vpack.c.b16 %v846, %v842
    %v1143 = vpack.c.b16 %v847, %v843
    %v1144 = vpack.c.b16 %v852, %v848
    %v1145 = vpack.c.b16 %v853, %v849
    %v1146 = vpack.c.b16 %v854, %v850
    %v1147 = vpack.c.b16 %v855, %v851
    %v1148 = vpack.c.b16 %v860, %v856
    %v1149 = vpack.c.b16 %v861, %v857
    %v1150 = vpack.c.b16 %v862, %v858
    %v1151 = vpack.c.b16 %v863, %v859
    %v1152 = vpack.c.b16 %v868, %v864
    %v1153 = vpack.c.b16 %v869, %v865
    %v1154 = vpack.c.b16 %v870, %v866
    %v1155 = vpack.c.b16 %v871, %v867
    %v1156 = vpack.c.b16 %v876, %v872
    %v1157 = vpack.c.b16 %v877, %v873
    %v1158 = vpack.c.b16 %v878, %v874
    %v1159 = vpack.c.b16 %v879, %v875
    %v1160 = vpack.c.b16 %v884, %v880
    %v1161 = vpack.c.b16 %v885, %v881
    %v1162 = vpack.c.b16 %v886, %v882
    %v1163 = vpack.c.b16 %v887, %v883
    %v1164 = vpack.c.b16 %v892, %v888
    %v1165 = vpack.c.b16 %v893, %v889
    %v1166 = vpack.c.b16 %v894, %v890
    %v1167 = vpack.c.b16 %v895, %v891
    %v1168 = vpack.c.b16 %v900, %v896
    %v1169 = vpack.c.b16 %v901, %v897
    %v1170 = vpack.c.b16 %v902, %v898
    %v1171 = vpack.c.b16 %v903, %v899
    %v1172 = vpack.c.b16 %v908, %v904
    %v1173 = vpack.c.b16 %v909, %v905
    %v1174 = vpack.c.b16 %v910, %v906
    %v1175 = vpack.c.b16 %v911, %v907
    %v1176 = vpack.c.b16 %v916, %v912
    %v1177 = vpack.c.b16 %v917, %v913
    %v1178 = vpack.c.b16 %v918, %v914
    %v1179 = vpack.c.b16 %v919, %v915
    %v1180 = vpack.c.b16 %v924, %v920
    %v1181 = vpack.c.b16 %v925, %v921
    %v1182 = vpack.c.b16 %v926, %v922
    %v1183 = vpack.c.b16 %v927, %v923
    %v1184 = vpack.c.b16 %v932, %v928
    %v1185 = vpack.c.b16 %v933, %v929
    %v1186 = vpack.c.b16 %v934, %v930
    %v1187 = vpack.c.b16 %v935, %v931
    %v1188 = vpack.c.b16 %v940, %v936
    %v1189 = vpack.c.b16 %v941, %v937
    %v1190 = vpack.c.b16 %v942, %v938
    %v1191 = vpack.c.b16 %v943, %v939
    %v1192 = vpack.c.b16 %v948, %v944
    %v1193 = vpack.c.b16 %v949, %v945
    %v1194 = vpack.c.b16 %v950, %v946
    %v1195 = vpack.c.b16 %v951, %v947
    %v1196 = vpack.c.b16 %v956, %v952
    %v1197 = vpack.c.b16 %v957, %v953
    %v1198 = vpack.c.b16 %v958, %v954
    %v1199 = vpack.c.b16 %v959, %v955
    %v1200 = vpack.c.b16 %v964, %v960
    %v1201 = vpack.c.b16 %v965, %v961
    %v1202 = vpack.c.b16 %v966, %v962
    %v1203 = vpack.c.b16 %v967, %v963
    %v1204 = vpack.c.b16 %v972, %v968
    %v1205 = vpack.c.b16 %v973, %v969
    %v1206 = vpack.c.b16 %v974, %v970
    %v1207 = vpack.c.b16 %v975, %v971
    %v1208 = vpack.c.b16 %v980, %v976
    %v1209 = vpack.c.b16 %v981, %v977
    %v1210 = vpack.c.b16 %v982, %v978
    %v1211 = vpack.c.b16 %v983, %v979
    %v1212 = vpack.c.b16 %v988, %v984
    %v1213 = vpack.c.b16 %v989, %v985
    %v1214 = vpack.c.b16 %v990, %v986
    %v1215 = vpack.c.b16 %v991, %v987
    %1440 = vmatpush.bf16.msra.mxu0 %v1020
    %1441 = vmatpush.bf16.msra.mxu0 %v1016
    %1442 = vmatpush.bf16.msra.mxu0 %v1012
    %1443 = vmatpush.bf16.msra.mxu0 %v1008
    %1444 = vmatpush.bf16.msra.mxu0 %v1004
    %1445 = vmatpush.bf16.msra.mxu0 %v1000
    %1446 = vmatpush.bf16.msra.mxu0 %v996
    %1447 = vmatpush.bf16.msra.mxu0 %v992
    %1448 = vmatmul.bf16.gmra.mxu0 %v306
    %v1449 = vpop.f32.mrf.mxu0
    %v1450 = vadd.f32 %v276, %v1449
    %v1451 = vpop.f32.mrf.mxu0
    %v1452 = vadd.f32 %v276, %v1451
    %1453 = vdwg.mxu0
    %1454 = vmatpush.bf16.msra.mxu0 %v1052
    %1455 = vmatpush.bf16.msra.mxu0 %v1048
    %1456 = vmatpush.bf16.msra.mxu0 %v1044
    %1457 = vmatpush.bf16.msra.mxu0 %v1040
    %1458 = vmatpush.bf16.msra.mxu0 %v1036
    %1459 = vmatpush.bf16.msra.mxu0 %v1032
    %1460 = vmatpush.bf16.msra.mxu0 %v1028
    %1461 = vmatpush.bf16.msra.mxu0 %v1024
    %1462 = vmatmul.bf16.gmra.mxu0 %v307
    %v1463 = vpop.f32.mrf.mxu0
    %v1464 = vadd.f32 %v1450, %v1463
    %v1465 = vpop.f32.mrf.mxu0
    %v1466 = vadd.f32 %v1452, %v1465
    %1467 = vdwg.mxu0
    %1468 = vmatpush.bf16.msra.mxu0 %v1084
    %1469 = vmatpush.bf16.msra.mxu0 %v1080
    %1470 = vmatpush.bf16.msra.mxu0 %v1076
    %1471 = vmatpush.bf16.msra.mxu0 %v1072
    %1472 = vmatpush.bf16.msra.mxu0 %v1068
    %1473 = vmatpush.bf16.msra.mxu0 %v1064
    %1474 = vmatpush.bf16.msra.mxu0 %v1060
    %1475 = vmatpush.bf16.msra.mxu0 %v1056
    %1476 = vmatmul.bf16.gmra.mxu0 %v308
    %v1477 = vpop.f32.mrf.mxu0
    %v1478 = vadd.f32 %v1464, %v1477
    %v1479 = vpop.f32.mrf.mxu0
    %v1480 = vadd.f32 %v1466, %v1479
    %1481 = vdwg.mxu0
    %1482 = vmatpush.bf16.msra.mxu0 %v1116
    %1483 = vmatpush.bf16.msra.mxu0 %v1112
    %1484 = vmatpush.bf16.msra.mxu0 %v1108
    %1485 = vmatpush.bf16.msra.mxu0 %v1104
    %1486 = vmatpush.bf16.msra.mxu0 %v1100
    %1487 = vmatpush.bf16.msra.mxu0 %v1096
    %1488 = vmatpush.bf16.msra.mxu0 %v1092
    %1489 = vmatpush.bf16.msra.mxu0 %v1088
    %1490 = vmatmul.bf16.gmra.mxu0 %v309
    %v1491 = vpop.f32.mrf.mxu0
    %v1492 = vadd.f32 %v1478, %v1491
    %v1493 = vpop.f32.mrf.mxu0
    %v1494 = vadd.f32 %v1480, %v1493
    %1495 = vdwg.mxu0
    %1496 = vmatpush.bf16.msra.mxu0 %v1148
    %1497 = vmatpush.bf16.msra.mxu0 %v1144
    %1498 = vmatpush.bf16.msra.mxu0 %v1140
    %1499 = vmatpush.bf16.msra.mxu0 %v1136
    %1500 = vmatpush.bf16.msra.mxu0 %v1132
    %1501 = vmatpush.bf16.msra.mxu0 %v1128
    %1502 = vmatpush.bf16.msra.mxu0 %v1124
    %1503 = vmatpush.bf16.msra.mxu0 %v1120
    %1504 = vmatmul.bf16.gmra.mxu0 %v310
    %v1505 = vpop.f32.mrf.mxu0
    %v1506 = vadd.f32 %v1492, %v1505
    %v1507 = vpop.f32.mrf.mxu0
    %v1508 = vadd.f32 %v1494, %v1507
    %1509 = vdwg.mxu0
    %1510 = vmatpush.bf16.msra.mxu0 %v1180
    %1511 = vmatpush.bf16.msra.mxu0 %v1176
    %1512 = vmatpush.bf16.msra.mxu0 %v1172
    %1513 = vmatpush.bf16.msra.mxu0 %v1168
    %1514 = vmatpush.bf16.msra.mxu0 %v1164
    %1515 = vmatpush.bf16.msra.mxu0 %v1160
    %1516 = vmatpush.bf16.msra.mxu0 %v1156
    %1517 = vmatpush.bf16.msra.mxu0 %v1152
    %1518 = vmatmul.bf16.gmra.mxu0 %v311
    %v1519 = vpop.f32.mrf.mxu0
    %v1520 = vadd.f32 %v1506, %v1519
    %v1521 = vpop.f32.mrf.mxu0
    %v1522 = vadd.f32 %v1508, %v1521
    %1523 = vdwg.mxu0
    %1524 = vmatpush.bf16.msra.mxu0 %v1212
    %1525 = vmatpush.bf16.msra.mxu0 %v1208
    %1526 = vmatpush.bf16.msra.mxu0 %v1204
    %1527 = vmatpush.bf16.msra.mxu0 %v1200
    %1528 = vmatpush.bf16.msra.mxu0 %v1196
    %1529 = vmatpush.bf16.msra.mxu0 %v1192
    %1530 = vmatpush.bf16.msra.mxu0 %v1188
    %1531 = vmatpush.bf16.msra.mxu0 %v1184
    %1532 = vmatmul.bf16.gmra.mxu0 %v312
    %v1533 = vpop.f32.mrf.mxu0
    %v1534 = vadd.f32 %v1520, %v1533
    %v1535 = vpop.f32.mrf.mxu0
    %v1536 = vadd.f32 %v1522, %v1535
    %1537 = vdwg.mxu0
    %1538 = vmatpush.bf16.msra.mxu0 %v1021
    %1539 = vmatpush.bf16.msra.mxu0 %v1017
    %1540 = vmatpush.bf16.msra.mxu0 %v1013
    %1541 = vmatpush.bf16.msra.mxu0 %v1009
    %1542 = vmatpush.bf16.msra.mxu0 %v1005
    %1543 = vmatpush.bf16.msra.mxu0 %v1001
    %1544 = vmatpush.bf16.msra.mxu0 %v997
    %1545 = vmatpush.bf16.msra.mxu0 %v993
    %1546 = vmatmul.bf16.gmra.mxu0 %v306
    %v1547 = vpop.f32.mrf.mxu0
    %v1548 = vadd.f32 %v277, %v1547
    %v1549 = vpop.f32.mrf.mxu0
    %v1550 = vadd.f32 %v277, %v1549
    %1551 = vdwg.mxu0
    %1552 = vmatpush.bf16.msra.mxu0 %v1053
    %1553 = vmatpush.bf16.msra.mxu0 %v1049
    %1554 = vmatpush.bf16.msra.mxu0 %v1045
    %1555 = vmatpush.bf16.msra.mxu0 %v1041
    %1556 = vmatpush.bf16.msra.mxu0 %v1037
    %1557 = vmatpush.bf16.msra.mxu0 %v1033
    %1558 = vmatpush.bf16.msra.mxu0 %v1029
    %1559 = vmatpush.bf16.msra.mxu0 %v1025
    %1560 = vmatmul.bf16.gmra.mxu0 %v307
    %v1561 = vpop.f32.mrf.mxu0
    %v1562 = vadd.f32 %v1548, %v1561
    %v1563 = vpop.f32.mrf.mxu0
    %v1564 = vadd.f32 %v1550, %v1563
    %1565 = vdwg.mxu0
    %1566 = vmatpush.bf16.msra.mxu0 %v1085
    %1567 = vmatpush.bf16.msra.mxu0 %v1081
    %1568 = vmatpush.bf16.msra.mxu0 %v1077
    %1569 = vmatpush.bf16.msra.mxu0 %v1073
    %1570 = vmatpush.bf16.msra.mxu0 %v1069
    %1571 = vmatpush.bf16.msra.mxu0 %v1065
    %1572 = vmatpush.bf16.msra.mxu0 %v1061
    %1573 = vmatpush.bf16.msra.mxu0 %v1057
    %1574 = vmatmul.bf16.gmra.mxu0 %v308
    %v1575 = vpop.f32.mrf.mxu0
    %v1576 = vadd.f32 %v1562, %v1575
    %v1577 = vpop.f32.mrf.mxu0
    %v1578 = vadd.f32 %v1564, %v1577
    %1579 = vdwg.mxu0
    %1580 = vmatpush.bf16.msra.mxu0 %v1117
    %1581 = vmatpush.bf16.msra.mxu0 %v1113
    %1582 = vmatpush.bf16.msra.mxu0 %v1109
    %1583 = vmatpush.bf16.msra.mxu0 %v1105
    %1584 = vmatpush.bf16.msra.mxu0 %v1101
    %1585 = vmatpush.bf16.msra.mxu0 %v1097
    %1586 = vmatpush.bf16.msra.mxu0 %v1093
    %1587 = vmatpush.bf16.msra.mxu0 %v1089
    %1588 = vmatmul.bf16.gmra.mxu0 %v309
    %v1589 = vpop.f32.mrf.mxu0
    %v1590 = vadd.f32 %v1576, %v1589
    %v1591 = vpop.f32.mrf.mxu0
    %v1592 = vadd.f32 %v1578, %v1591
    %1593 = vdwg.mxu0
    %1594 = vmatpush.bf16.msra.mxu0 %v1149
    %1595 = vmatpush.bf16.msra.mxu0 %v1145
    %1596 = vmatpush.bf16.msra.mxu0 %v1141
    %1597 = vmatpush.bf16.msra.mxu0 %v1137
    %1598 = vmatpush.bf16.msra.mxu0 %v1133
    %1599 = vmatpush.bf16.msra.mxu0 %v1129
    %1600 = vmatpush.bf16.msra.mxu0 %v1125
    %1601 = vmatpush.bf16.msra.mxu0 %v1121
    %1602 = vmatmul.bf16.gmra.mxu0 %v310
    %v1603 = vpop.f32.mrf.mxu0
    %v1604 = vadd.f32 %v1590, %v1603
    %v1605 = vpop.f32.mrf.mxu0
    %v1606 = vadd.f32 %v1592, %v1605
    %1607 = vdwg.mxu0
    %1608 = vmatpush.bf16.msra.mxu0 %v1181
    %1609 = vmatpush.bf16.msra.mxu0 %v1177
    %1610 = vmatpush.bf16.msra.mxu0 %v1173
    %1611 = vmatpush.bf16.msra.mxu0 %v1169
    %1612 = vmatpush.bf16.msra.mxu0 %v1165
    %1613 = vmatpush.bf16.msra.mxu0 %v1161
    %1614 = vmatpush.bf16.msra.mxu0 %v1157
    %1615 = vmatpush.bf16.msra.mxu0 %v1153
    %1616 = vmatmul.bf16.gmra.mxu0 %v311
    %v1617 = vpop.f32.mrf.mxu0
    %v1618 = vadd.f32 %v1604, %v1617
    %v1619 = vpop.f32.mrf.mxu0
    %v1620 = vadd.f32 %v1606, %v1619
    %1621 = vdwg.mxu0
    %1622 = vmatpush.bf16.msra.mxu0 %v1213
    %1623 = vmatpush.bf16.msra.mxu0 %v1209
    %1624 = vmatpush.bf16.msra.mxu0 %v1205
    %1625 = vmatpush.bf16.msra.mxu0 %v1201
    %1626 = vmatpush.bf16.msra.mxu0 %v1197
    %1627 = vmatpush.bf16.msra.mxu0 %v1193
    %1628 = vmatpush.bf16.msra.mxu0 %v1189
    %1629 = vmatpush.bf16.msra.mxu0 %v1185
    %1630 = vmatmul.bf16.gmra.mxu0 %v312
    %v1631 = vpop.f32.mrf.mxu0
    %v1632 = vadd.f32 %v1618, %v1631
    %v1633 = vpop.f32.mrf.mxu0
    %v1634 = vadd.f32 %v1620, %v1633
    %1635 = vdwg.mxu0
    %1636 = vmatpush.bf16.msra.mxu0 %v1022
    %1637 = vmatpush.bf16.msra.mxu0 %v1018
    %1638 = vmatpush.bf16.msra.mxu0 %v1014
    %1639 = vmatpush.bf16.msra.mxu0 %v1010
    %1640 = vmatpush.bf16.msra.mxu0 %v1006
    %1641 = vmatpush.bf16.msra.mxu0 %v1002
    %1642 = vmatpush.bf16.msra.mxu0 %v998
    %1643 = vmatpush.bf16.msra.mxu0 %v994
    %1644 = vmatmul.bf16.gmra.mxu0 %v306
    %v1645 = vpop.f32.mrf.mxu0
    %v1646 = vadd.f32 %v278, %v1645
    %v1647 = vpop.f32.mrf.mxu0
    %v1648 = vadd.f32 %v278, %v1647
    %1649 = vdwg.mxu0
    %1650 = vmatpush.bf16.msra.mxu0 %v1054
    %1651 = vmatpush.bf16.msra.mxu0 %v1050
    %1652 = vmatpush.bf16.msra.mxu0 %v1046
    %1653 = vmatpush.bf16.msra.mxu0 %v1042
    %1654 = vmatpush.bf16.msra.mxu0 %v1038
    %1655 = vmatpush.bf16.msra.mxu0 %v1034
    %1656 = vmatpush.bf16.msra.mxu0 %v1030
    %1657 = vmatpush.bf16.msra.mxu0 %v1026
    %1658 = vmatmul.bf16.gmra.mxu0 %v307
    %v1659 = vpop.f32.mrf.mxu0
    %v1660 = vadd.f32 %v1646, %v1659
    %v1661 = vpop.f32.mrf.mxu0
    %v1662 = vadd.f32 %v1648, %v1661
    %1663 = vdwg.mxu0
    %1664 = vmatpush.bf16.msra.mxu0 %v1086
    %1665 = vmatpush.bf16.msra.mxu0 %v1082
    %1666 = vmatpush.bf16.msra.mxu0 %v1078
    %1667 = vmatpush.bf16.msra.mxu0 %v1074
    %1668 = vmatpush.bf16.msra.mxu0 %v1070
    %1669 = vmatpush.bf16.msra.mxu0 %v1066
    %1670 = vmatpush.bf16.msra.mxu0 %v1062
    %1671 = vmatpush.bf16.msra.mxu0 %v1058
    %1672 = vmatmul.bf16.gmra.mxu0 %v308
    %v1673 = vpop.f32.mrf.mxu0
    %v1674 = vadd.f32 %v1660, %v1673
    %v1675 = vpop.f32.mrf.mxu0
    %v1676 = vadd.f32 %v1662, %v1675
    %1677 = vdwg.mxu0
    %1678 = vmatpush.bf16.msra.mxu0 %v1118
    %1679 = vmatpush.bf16.msra.mxu0 %v1114
    %1680 = vmatpush.bf16.msra.mxu0 %v1110
    %1681 = vmatpush.bf16.msra.mxu0 %v1106
    %1682 = vmatpush.bf16.msra.mxu0 %v1102
    %1683 = vmatpush.bf16.msra.mxu0 %v1098
    %1684 = vmatpush.bf16.msra.mxu0 %v1094
    %1685 = vmatpush.bf16.msra.mxu0 %v1090
    %1686 = vmatmul.bf16.gmra.mxu0 %v309
    %v1687 = vpop.f32.mrf.mxu0
    %v1688 = vadd.f32 %v1674, %v1687
    %v1689 = vpop.f32.mrf.mxu0
    %v1690 = vadd.f32 %v1676, %v1689
    %1691 = vdwg.mxu0
    %1692 = vmatpush.bf16.msra.mxu0 %v1150
    %1693 = vmatpush.bf16.msra.mxu0 %v1146
    %1694 = vmatpush.bf16.msra.mxu0 %v1142
    %1695 = vmatpush.bf16.msra.mxu0 %v1138
    %1696 = vmatpush.bf16.msra.mxu0 %v1134
    %1697 = vmatpush.bf16.msra.mxu0 %v1130
    %1698 = vmatpush.bf16.msra.mxu0 %v1126
    %1699 = vmatpush.bf16.msra.mxu0 %v1122
    %1700 = vmatmul.bf16.gmra.mxu0 %v310
    %v1701 = vpop.f32.mrf.mxu0
    %v1702 = vadd.f32 %v1688, %v1701
    %v1703 = vpop.f32.mrf.mxu0
    %v1704 = vadd.f32 %v1690, %v1703
    %1705 = vdwg.mxu0
    %1706 = vmatpush.bf16.msra.mxu0 %v1182
    %1707 = vmatpush.bf16.msra.mxu0 %v1178
    %1708 = vmatpush.bf16.msra.mxu0 %v1174
    %1709 = vmatpush.bf16.msra.mxu0 %v1170
    %1710 = vmatpush.bf16.msra.mxu0 %v1166
    %1711 = vmatpush.bf16.msra.mxu0 %v1162
    %1712 = vmatpush.bf16.msra.mxu0 %v1158
    %1713 = vmatpush.bf16.msra.mxu0 %v1154
    %1714 = vmatmul.bf16.gmra.mxu0 %v311
    %v1715 = vpop.f32.mrf.mxu0
    %v1716 = vadd.f32 %v1702, %v1715
    %v1717 = vpop.f32.mrf.mxu0
    %v1718 = vadd.f32 %v1704, %v1717
    %1719 = vdwg.mxu0
    %1720 = vmatpush.bf16.msra.mxu0 %v1214
    %1721 = vmatpush.bf16.msra.mxu0 %v1210
    %1722 = vmatpush.bf16.msra.mxu0 %v1206
    %1723 = vmatpush.bf16.msra.mxu0 %v1202
    %1724 = vmatpush.bf16.msra.mxu0 %v1198
    %1725 = vmatpush.bf16.msra.mxu0 %v1194
    %1726 = vmatpush.bf16.msra.mxu0 %v1190
    %1727 = vmatpush.bf16.msra.mxu0 %v1186
    %1728 = vmatmul.bf16.gmra.mxu0 %v312
    %v1729 = vpop.f32.mrf.mxu0
    %v1730 = vadd.f32 %v1716, %v1729
    %v1731 = vpop.f32.mrf.mxu0
    %v1732 = vadd.f32 %v1718, %v1731
    %1733 = vdwg.mxu0
    %1734 = vmatpush.bf16.msra.mxu0 %v1023
    %1735 = vmatpush.bf16.msra.mxu0 %v1019
    %1736 = vmatpush.bf16.msra.mxu0 %v1015
    %1737 = vmatpush.bf16.msra.mxu0 %v1011
    %1738 = vmatpush.bf16.msra.mxu0 %v1007
    %1739 = vmatpush.bf16.msra.mxu0 %v1003
    %1740 = vmatpush.bf16.msra.mxu0 %v999
    %1741 = vmatpush.bf16.msra.mxu0 %v995
    %1742 = vmatmul.bf16.gmra.mxu0 %v306
    %v1743 = vpop.f32.mrf.mxu0
    %v1744 = vadd.f32 %v279, %v1743
    %v1745 = vpop.f32.mrf.mxu0
    %v1746 = vadd.f32 %v279, %v1745
    %1747 = vdwg.mxu0
    %1748 = vmatpush.bf16.msra.mxu0 %v1055
    %1749 = vmatpush.bf16.msra.mxu0 %v1051
    %1750 = vmatpush.bf16.msra.mxu0 %v1047
    %1751 = vmatpush.bf16.msra.mxu0 %v1043
    %1752 = vmatpush.bf16.msra.mxu0 %v1039
    %1753 = vmatpush.bf16.msra.mxu0 %v1035
    %1754 = vmatpush.bf16.msra.mxu0 %v1031
    %1755 = vmatpush.bf16.msra.mxu0 %v1027
    %1756 = vmatmul.bf16.gmra.mxu0 %v307
    %v1757 = vpop.f32.mrf.mxu0
    %v1758 = vadd.f32 %v1744, %v1757
    %v1759 = vpop.f32.mrf.mxu0
    %v1760 = vadd.f32 %v1746, %v1759
    %1761 = vdwg.mxu0
    %1762 = vmatpush.bf16.msra.mxu0 %v1087
    %1763 = vmatpush.bf16.msra.mxu0 %v1083
    %1764 = vmatpush.bf16.msra.mxu0 %v1079
    %1765 = vmatpush.bf16.msra.mxu0 %v1075
    %1766 = vmatpush.bf16.msra.mxu0 %v1071
    %1767 = vmatpush.bf16.msra.mxu0 %v1067
    %1768 = vmatpush.bf16.msra.mxu0 %v1063
    %1769 = vmatpush.bf16.msra.mxu0 %v1059
    %1770 = vmatmul.bf16.gmra.mxu0 %v308
    %v1771 = vpop.f32.mrf.mxu0
    %v1772 = vadd.f32 %v1758, %v1771
    %v1773 = vpop.f32.mrf.mxu0
    %v1774 = vadd.f32 %v1760, %v1773
    %1775 = vdwg.mxu0
    %1776 = vmatpush.bf16.msra.mxu0 %v1119
    %1777 = vmatpush.bf16.msra.mxu0 %v1115
    %1778 = vmatpush.bf16.msra.mxu0 %v1111
    %1779 = vmatpush.bf16.msra.mxu0 %v1107
    %1780 = vmatpush.bf16.msra.mxu0 %v1103
    %1781 = vmatpush.bf16.msra.mxu0 %v1099
    %1782 = vmatpush.bf16.msra.mxu0 %v1095
    %1783 = vmatpush.bf16.msra.mxu0 %v1091
    %1784 = vmatmul.bf16.gmra.mxu0 %v309
    %v1785 = vpop.f32.mrf.mxu0
    %v1786 = vadd.f32 %v1772, %v1785
    %v1787 = vpop.f32.mrf.mxu0
    %v1788 = vadd.f32 %v1774, %v1787
    %1789 = vdwg.mxu0
    %1790 = vmatpush.bf16.msra.mxu0 %v1151
    %1791 = vmatpush.bf16.msra.mxu0 %v1147
    %1792 = vmatpush.bf16.msra.mxu0 %v1143
    %1793 = vmatpush.bf16.msra.mxu0 %v1139
    %1794 = vmatpush.bf16.msra.mxu0 %v1135
    %1795 = vmatpush.bf16.msra.mxu0 %v1131
    %1796 = vmatpush.bf16.msra.mxu0 %v1127
    %1797 = vmatpush.bf16.msra.mxu0 %v1123
    %1798 = vmatmul.bf16.gmra.mxu0 %v310
    %v1799 = vpop.f32.mrf.mxu0
    %v1800 = vadd.f32 %v1786, %v1799
    %v1801 = vpop.f32.mrf.mxu0
    %v1802 = vadd.f32 %v1788, %v1801
    %1803 = vdwg.mxu0
    %1804 = vmatpush.bf16.msra.mxu0 %v1183
    %1805 = vmatpush.bf16.msra.mxu0 %v1179
    %1806 = vmatpush.bf16.msra.mxu0 %v1175
    %1807 = vmatpush.bf16.msra.mxu0 %v1171
    %1808 = vmatpush.bf16.msra.mxu0 %v1167
    %1809 = vmatpush.bf16.msra.mxu0 %v1163
    %1810 = vmatpush.bf16.msra.mxu0 %v1159
    %1811 = vmatpush.bf16.msra.mxu0 %v1155
    %1812 = vmatmul.bf16.gmra.mxu0 %v311
    %v1813 = vpop.f32.mrf.mxu0
    %v1814 = vadd.f32 %v1800, %v1813
    %v1815 = vpop.f32.mrf.mxu0
    %v1816 = vadd.f32 %v1802, %v1815
    %1817 = vdwg.mxu0
    %1818 = vmatpush.bf16.msra.mxu0 %v1215
    %1819 = vmatpush.bf16.msra.mxu0 %v1211
    %1820 = vmatpush.bf16.msra.mxu0 %v1207
    %1821 = vmatpush.bf16.msra.mxu0 %v1203
    %1822 = vmatpush.bf16.msra.mxu0 %v1199
    %1823 = vmatpush.bf16.msra.mxu0 %v1195
    %1824 = vmatpush.bf16.msra.mxu0 %v1191
    %1825 = vmatpush.bf16.msra.mxu0 %v1187
    %1826 = vmatmul.bf16.gmra.mxu0 %v312
    %v1827 = vpop.f32.mrf.mxu0
    %v1828 = vadd.f32 %v1814, %v1827
    %v1829 = vpop.f32.mrf.mxu0
    %v1830 = vadd.f32 %v1816, %v1829
    %1831 = vdwg.mxu0
    %v1832 = vmax.f32 %v1534, 0.0
    %v1833 = vmax.f32 %v1632, 0.0
    %v1834 = vmax.f32 %v1730, 0.0
    %v1835 = vmax.f32 %v1828, 0.0
    %v1836 = vmax.f32 %v1536, 0.0
    %v1837 = vmax.f32 %v1634, 0.0
    %v1838 = vmax.f32 %v1732, 0.0
    %v1839 = vmax.f32 %v1830, 0.0
    %v1840 = vpack.c.bf16 %v1836, %v1832
    %v1841 = vpack.c.bf16 %v1837, %v1833
    %v1842 = vpack.c.bf16 %v1838, %v1834
    %v1843 = vpack.c.bf16 %v1839, %v1835
    %v1844 = vld [vmem:[%s3] sm:$0xff]
    %v1845 = vld [vmem:[%s3 + $0x8] sm:$0xff]
    %v1846 = vld [vmem:[%s3 + $0x10] sm:$0xff]
    %v1847 = vld [vmem:[%s3 + $0x18] sm:$0xff]
    %v1848 = vld [vmem:[%s3 + $0x20] sm:$0xff]
    %v1849 = vld [vmem:[%s3 + $0x28] sm:$0xff]
    %v1850 = vld [vmem:[%s3 + $0x30] sm:$0xff]
    %v1851 = vld [vmem:[%s3 + $0x38] sm:$0xff]
    %v1852 = vld [vmem:[%s3 + $0x40] sm:$0xff]
    %v1853 = vld [vmem:[%s3 + $0x48] sm:$0xff]
    %v1854 = vld [vmem:[%s3 + $0x50] sm:$0xff]
    %v1855 = vld [vmem:[%s3 + $0x58] sm:$0xff]
    %v1856 = vld [vmem:[%s3 + $0x60] sm:$0xff]
    %v1857 = vld [vmem:[%s3 + $0x68] sm:$0xff]
    %v1858 = vld [vmem:[%s3 + $0x70] sm:$0xff]
    %v1859 = vld [vmem:[%s3 + $0x78] sm:$0xff]
    %v1860 = vld [vmem:[%s3 + $0x80] sm:$0xff]
    %v1861 = vld [vmem:[%s3 + $0x88] sm:$0xff]
    %v1862 = vld [vmem:[%s3 + $0x90] sm:$0xff]
    %v1863 = vld [vmem:[%s3 + $0x98] sm:$0xff]
    %v1864 = vld [vmem:[%s3 + $0xa0] sm:$0xff]
    %v1865 = vld [vmem:[%s3 + $0xa8] sm:$0xff]
    %v1866 = vld [vmem:[%s3 + $0xb0] sm:$0xff]
    %v1867 = vld [vmem:[%s3 + $0xb8] sm:$0xff]
    %v1868 = vld [vmem:[%s3 + $0xc0] sm:$0xff]
    %v1869 = vld [vmem:[%s3 + $0xc8] sm:$0xff]
    %v1870 = vld [vmem:[%s3 + $0xd0] sm:$0xff]
    %v1871 = vld [vmem:[%s3 + $0xd8] sm:$0xff]
    %v1872 = vld [vmem:[%s3 + $0xe0] sm:$0xff]
    %v1873 = vld [vmem:[%s3 + $0xe8] sm:$0xff]
    %v1874 = vld [vmem:[%s3 + $0xf0] sm:$0xff]
    %v1875 = vld [vmem:[%s3 + $0xf8] sm:$0xff]
    %v1876 = vld [vmem:[%s3 + $0x100] sm:$0xff]
    %v1877 = vld [vmem:[%s3 + $0x108] sm:$0xff]
    %v1878 = vld [vmem:[%s3 + $0x110] sm:$0xff]
    %v1879 = vld [vmem:[%s3 + $0x118] sm:$0xff]
    %v1880 = vld [vmem:[%s3 + $0x120] sm:$0xff]
    %v1881 = vld [vmem:[%s3 + $0x128] sm:$0xff]
    %v1882 = vld [vmem:[%s3 + $0x130] sm:$0xff]
    %v1883 = vld [vmem:[%s3 + $0x138] sm:$0xff]
    %v1884 = vld [vmem:[%s3 + $0x140] sm:$0xff]
    %v1885 = vld [vmem:[%s3 + $0x148] sm:$0xff]
    %v1886 = vld [vmem:[%s3 + $0x150] sm:$0xff]
    %v1887 = vld [vmem:[%s3 + $0x158] sm:$0xff]
    %v1888 = vld [vmem:[%s3 + $0x160] sm:$0xff]
    %v1889 = vld [vmem:[%s3 + $0x168] sm:$0xff]
    %v1890 = vld [vmem:[%s3 + $0x170] sm:$0xff]
    %v1891 = vld [vmem:[%s3 + $0x178] sm:$0xff]
    %v1892 = vld [vmem:[%s3 + $0x180] sm:$0xff]
    %v1893 = vld [vmem:[%s3 + $0x188] sm:$0xff]
    %v1894 = vld [vmem:[%s3 + $0x190] sm:$0xff]
    %v1895 = vld [vmem:[%s3 + $0x198] sm:$0xff]
    %v1896 = vld [vmem:[%s3 + $0x1a0] sm:$0xff]
    %v1897 = vld [vmem:[%s3 + $0x1a8] sm:$0xff]
    %v1898 = vld [vmem:[%s3 + $0x1b0] sm:$0xff]
    %v1899 = vld [vmem:[%s3 + $0x1b8] sm:$0xff]
    %v1900 = vld [vmem:[%s3 + $0x1c0] sm:$0xff]
    %v1901 = vld [vmem:[%s3 + $0x1c8] sm:$0xff]
    %v1902 = vld [vmem:[%s3 + $0x1d0] sm:$0xff]
    %v1903 = vld [vmem:[%s3 + $0x1d8] sm:$0xff]
    %v1904 = vld [vmem:[%s3 + $0x1e0] sm:$0xff]
    %v1905 = vld [vmem:[%s3 + $0x1e8] sm:$0xff]
    %v1906 = vld [vmem:[%s3 + $0x1f0] sm:$0xff]
    %v1907 = vld [vmem:[%s3 + $0x1f8] sm:$0xff]
    %v1908 = vld [vmem:[%s3 + $0x200] sm:$0xff]
    %v1909 = vld [vmem:[%s3 + $0x208] sm:$0xff]
    %v1910 = vld [vmem:[%s3 + $0x210] sm:$0xff]
    %v1911 = vld [vmem:[%s3 + $0x218] sm:$0xff]
    %v1912 = vld [vmem:[%s3 + $0x220] sm:$0xff]
    %v1913 = vld [vmem:[%s3 + $0x228] sm:$0xff]
    %v1914 = vld [vmem:[%s3 + $0x230] sm:$0xff]
    %v1915 = vld [vmem:[%s3 + $0x238] sm:$0xff]
    %v1916 = vld [vmem:[%s3 + $0x240] sm:$0xff]
    %v1917 = vld [vmem:[%s3 + $0x248] sm:$0xff]
    %v1918 = vld [vmem:[%s3 + $0x250] sm:$0xff]
    %v1919 = vld [vmem:[%s3 + $0x258] sm:$0xff]
    %v1920 = vld [vmem:[%s3 + $0x260] sm:$0xff]
    %v1921 = vld [vmem:[%s3 + $0x268] sm:$0xff]
    %v1922 = vld [vmem:[%s3 + $0x270] sm:$0xff]
    %v1923 = vld [vmem:[%s3 + $0x278] sm:$0xff]
    %v1924 = vld [vmem:[%s3 + $0x280] sm:$0xff]
    %v1925 = vld [vmem:[%s3 + $0x288] sm:$0xff]
    %v1926 = vld [vmem:[%s3 + $0x290] sm:$0xff]
    %v1927 = vld [vmem:[%s3 + $0x298] sm:$0xff]
    %v1928 = vld [vmem:[%s3 + $0x2a0] sm:$0xff]
    %v1929 = vld [vmem:[%s3 + $0x2a8] sm:$0xff]
    %v1930 = vld [vmem:[%s3 + $0x2b0] sm:$0xff]
    %v1931 = vld [vmem:[%s3 + $0x2b8] sm:$0xff]
    %v1932 = vld [vmem:[%s3 + $0x2c0] sm:$0xff]
    %v1933 = vld [vmem:[%s3 + $0x2c8] sm:$0xff]
    %v1934 = vld [vmem:[%s3 + $0x2d0] sm:$0xff]
    %v1935 = vld [vmem:[%s3 + $0x2d8] sm:$0xff]
    %v1936 = vld [vmem:[%s3 + $0x2e0] sm:$0xff]
    %v1937 = vld [vmem:[%s3 + $0x2e8] sm:$0xff]
    %v1938 = vld [vmem:[%s3 + $0x2f0] sm:$0xff]
    %v1939 = vld [vmem:[%s3 + $0x2f8] sm:$0xff]
    %v1940 = vld [vmem:[%s3 + $0x300] sm:$0xff]
    %v1941 = vld [vmem:[%s3 + $0x308] sm:$0xff]
    %v1942 = vld [vmem:[%s3 + $0x310] sm:$0xff]
    %v1943 = vld [vmem:[%s3 + $0x318] sm:$0xff]
    %v1944 = vld [vmem:[%s3 + $0x320] sm:$0xff]
    %v1945 = vld [vmem:[%s3 + $0x328] sm:$0xff]
    %v1946 = vld [vmem:[%s3 + $0x330] sm:$0xff]
    %v1947 = vld [vmem:[%s3 + $0x338] sm:$0xff]
    %v1948 = vld [vmem:[%s3 + $0x340] sm:$0xff]
    %v1949 = vld [vmem:[%s3 + $0x348] sm:$0xff]
    %v1950 = vld [vmem:[%s3 + $0x350] sm:$0xff]
    %v1951 = vld [vmem:[%s3 + $0x358] sm:$0xff]
    %v1952 = vld [vmem:[%s3 + $0x360] sm:$0xff]
    %v1953 = vld [vmem:[%s3 + $0x368] sm:$0xff]
    %v1954 = vld [vmem:[%s3 + $0x370] sm:$0xff]
    %v1955 = vld [vmem:[%s3 + $0x378] sm:$0xff]
    %v1956 = vld [vmem:[%s3 + $0x380] sm:$0xff]
    %v1957 = vld [vmem:[%s3 + $0x388] sm:$0xff]
    %v1958 = vld [vmem:[%s3 + $0x390] sm:$0xff]
    %v1959 = vld [vmem:[%s3 + $0x398] sm:$0xff]
    %v1960 = vld [vmem:[%s3 + $0x3a0] sm:$0xff]
    %v1961 = vld [vmem:[%s3 + $0x3a8] sm:$0xff]
    %v1962 = vld [vmem:[%s3 + $0x3b0] sm:$0xff]
    %v1963 = vld [vmem:[%s3 + $0x3b8] sm:$0xff]
    %v1964 = vld [vmem:[%s3 + $0x3c0] sm:$0xff]
    %v1965 = vld [vmem:[%s3 + $0x3c8] sm:$0xff]
    %v1966 = vld [vmem:[%s3 + $0x3d0] sm:$0xff]
    %v1967 = vld [vmem:[%s3 + $0x3d8] sm:$0xff]
    %v1968 = vld [vmem:[%s3 + $0x3e0] sm:$0xff]
    %v1969 = vld [vmem:[%s3 + $0x3e8] sm:$0xff]
    %v1970 = vld [vmem:[%s3 + $0x3f0] sm:$0xff]
    %v1971 = vld [vmem:[%s3 + $0x3f8] sm:$0xff]
    %v1972 = vld [vmem:[%s4] sm:$0xf]
    %v1974 = vperm.slane %v1972, 0
    %v1975 = vperm.slane %v1972, 1
    %v1976 = vperm.slane %v1972, 2
    %v1977 = vperm.slane %v1972, 3
    %v2110 = vunpack.c.l.b16 %v1844
    %v2111 = vunpack.c.h.b16 %v1844
    %v2112 = vunpack.c.l.b16 %v1845
    %v2113 = vunpack.c.h.b16 %v1845
    %v2114 = vunpack.c.l.b16 %v1846
    %v2115 = vunpack.c.h.b16 %v1846
    %v2116 = vunpack.c.l.b16 %v1847
    %v2117 = vunpack.c.h.b16 %v1847
    %v2118 = vunpack.c.l.b16 %v1848
    %v2119 = vunpack.c.h.b16 %v1848
    %v2120 = vunpack.c.l.b16 %v1849
    %v2121 = vunpack.c.h.b16 %v1849
    %v2122 = vunpack.c.l.b16 %v1850
    %v2123 = vunpack.c.h.b16 %v1850
    %v2124 = vunpack.c.l.b16 %v1851
    %v2125 = vunpack.c.h.b16 %v1851
    %v2126 = vunpack.c.l.b16 %v1852
    %v2127 = vunpack.c.h.b16 %v1852
    %v2128 = vunpack.c.l.b16 %v1853
    %v2129 = vunpack.c.h.b16 %v1853
    %v2130 = vunpack.c.l.b16 %v1854
    %v2131 = vunpack.c.h.b16 %v1854
    %v2132 = vunpack.c.l.b16 %v1855
    %v2133 = vunpack.c.h.b16 %v1855
    %v2134 = vunpack.c.l.b16 %v1856
    %v2135 = vunpack.c.h.b16 %v1856
    %v2136 = vunpack.c.l.b16 %v1857
    %v2137 = vunpack.c.h.b16 %v1857
    %v2138 = vunpack.c.l.b16 %v1858
    %v2139 = vunpack.c.h.b16 %v1858
    %v2140 = vunpack.c.l.b16 %v1859
    %v2141 = vunpack.c.h.b16 %v1859
    %v2142 = vunpack.c.l.b16 %v1860
    %v2143 = vunpack.c.h.b16 %v1860
    %v2144 = vunpack.c.l.b16 %v1861
    %v2145 = vunpack.c.h.b16 %v1861
    %v2146 = vunpack.c.l.b16 %v1862
    %v2147 = vunpack.c.h.b16 %v1862
    %v2148 = vunpack.c.l.b16 %v1863
    %v2149 = vunpack.c.h.b16 %v1863
    %v2150 = vunpack.c.l.b16 %v1864
    %v2151 = vunpack.c.h.b16 %v1864
    %v2152 = vunpack.c.l.b16 %v1865
    %v2153 = vunpack.c.h.b16 %v1865
    %v2154 = vunpack.c.l.b16 %v1866
    %v2155 = vunpack.c.h.b16 %v1866
    %v2156 = vunpack.c.l.b16 %v1867
    %v2157 = vunpack.c.h.b16 %v1867
    %v2158 = vunpack.c.l.b16 %v1868
    %v2159 = vunpack.c.h.b16 %v1868
    %v2160 = vunpack.c.l.b16 %v1869
    %v2161 = vunpack.c.h.b16 %v1869
    %v2162 = vunpack.c.l.b16 %v1870
    %v2163 = vunpack.c.h.b16 %v1870
    %v2164 = vunpack.c.l.b16 %v1871
    %v2165 = vunpack.c.h.b16 %v1871
    %v2166 = vunpack.c.l.b16 %v1872
    %v2167 = vunpack.c.h.b16 %v1872
    %v2168 = vunpack.c.l.b16 %v1873
    %v2169 = vunpack.c.h.b16 %v1873
    %v2170 = vunpack.c.l.b16 %v1874
    %v2171 = vunpack.c.h.b16 %v1874
    %v2172 = vunpack.c.l.b16 %v1875
    %v2173 = vunpack.c.h.b16 %v1875
    %v2174 = vunpack.c.l.b16 %v1876
    %v2175 = vunpack.c.h.b16 %v1876
    %v2176 = vunpack.c.l.b16 %v1877
    %v2177 = vunpack.c.h.b16 %v1877
    %v2178 = vunpack.c.l.b16 %v1878
    %v2179 = vunpack.c.h.b16 %v1878
    %v2180 = vunpack.c.l.b16 %v1879
    %v2181 = vunpack.c.h.b16 %v1879
    %v2182 = vunpack.c.l.b16 %v1880
    %v2183 = vunpack.c.h.b16 %v1880
    %v2184 = vunpack.c.l.b16 %v1881
    %v2185 = vunpack.c.h.b16 %v1881
    %v2186 = vunpack.c.l.b16 %v1882
    %v2187 = vunpack.c.h.b16 %v1882
    %v2188 = vunpack.c.l.b16 %v1883
    %v2189 = vunpack.c.h.b16 %v1883
    %v2190 = vunpack.c.l.b16 %v1884
    %v2191 = vunpack.c.h.b16 %v1884
    %v2192 = vunpack.c.l.b16 %v1885
    %v2193 = vunpack.c.h.b16 %v1885
    %v2194 = vunpack.c.l.b16 %v1886
    %v2195 = vunpack.c.h.b16 %v1886
    %v2196 = vunpack.c.l.b16 %v1887
    %v2197 = vunpack.c.h.b16 %v1887
    %v2198 = vunpack.c.l.b16 %v1888
    %v2199 = vunpack.c.h.b16 %v1888
    %v2200 = vunpack.c.l.b16 %v1889
    %v2201 = vunpack.c.h.b16 %v1889
    %v2202 = vunpack.c.l.b16 %v1890
    %v2203 = vunpack.c.h.b16 %v1890
    %v2204 = vunpack.c.l.b16 %v1891
    %v2205 = vunpack.c.h.b16 %v1891
    %v2206 = vunpack.c.l.b16 %v1892
    %v2207 = vunpack.c.h.b16 %v1892
    %v2208 = vunpack.c.l.b16 %v1893
    %v2209 = vunpack.c.h.b16 %v1893
    %v2210 = vunpack.c.l.b16 %v1894
    %v2211 = vunpack.c.h.b16 %v1894
    %v2212 = vunpack.c.l.b16 %v1895
    %v2213 = vunpack.c.h.b16 %v1895
    %v2214 = vunpack.c.l.b16 %v1896
    %v2215 = vunpack.c.h.b16 %v1896
    %v2216 = vunpack.c.l.b16 %v1897
    %v2217 = vunpack.c.h.b16 %v1897
    %v2218 = vunpack.c.l.b16 %v1898
    %v2219 = vunpack.c.h.b16 %v1898
    %v2220 = vunpack.c.l.b16 %v1899
    %v2221 = vunpack.c.h.b16 %v1899
    %v2222 = vunpack.c.l.b16 %v1900
    %v2223 = vunpack.c.h.b16 %v1900
    %v2224 = vunpack.c.l.b16 %v1901
    %v2225 = vunpack.c.h.b16 %v1901
    %v2226 = vunpack.c.l.b16 %v1902
    %v2227 = vunpack.c.h.b16 %v1902
    %v2228 = vunpack.c.l.b16 %v1903
    %v2229 = vunpack.c.h.b16 %v1903
    %v2230 = vunpack.c.l.b16 %v1904
    %v2231 = vunpack.c.h.b16 %v1904
    %v2232 = vunpack.c.l.b16 %v1905
    %v2233 = vunpack.c.h.b16 %v1905
    %v2234 = vunpack.c.l.b16 %v1906
    %v2235 = vunpack.c.h.b16 %v1906
    %v2236 = vunpack.c.l.b16 %v1907
    %v2237 = vunpack.c.h.b16 %v1907
    %v2238 = vunpack.c.l.b16 %v1908
    %v2239 = vunpack.c.h.b16 %v1908
    %v2240 = vunpack.c.l.b16 %v1909
    %v2241 = vunpack.c.h.b16 %v1909
    %v2242 = vunpack.c.l.b16 %v1910
    %v2243 = vunpack.c.h.b16 %v1910
    %v2244 = vunpack.c.l.b16 %v1911
    %v2245 = vunpack.c.h.b16 %v1911
    %v2246 = vunpack.c.l.b16 %v1912
    %v2247 = vunpack.c.h.b16 %v1912
    %v2248 = vunpack.c.l.b16 %v1913
    %v2249 = vunpack.c.h.b16 %v1913
    %v2250 = vunpack.c.l.b16 %v1914
    %v2251 = vunpack.c.h.b16 %v1914
    %v2252 = vunpack.c.l.b16 %v1915
    %v2253 = vunpack.c.h.b16 %v1915
    %v2254 = vunpack.c.l.b16 %v1916
    %v2255 = vunpack.c.h.b16 %v1916
    %v2256 = vunpack.c.l.b16 %v1917
    %v2257 = vunpack.c.h.b16 %v1917
    %v2258 = vunpack.c.l.b16 %v1918
    %v2259 = vunpack.c.h.b16 %v1918
    %v2260 = vunpack.c.l.b16 %v1919
    %v2261 = vunpack.c.h.b16 %v1919
    %v2262 = vunpack.c.l.b16 %v1920
    %v2263 = vunpack.c.h.b16 %v1920
    %v2264 = vunpack.c.l.b16 %v1921
    %v2265 = vunpack.c.h.b16 %v1921
    %v2266 = vunpack.c.l.b16 %v1922
    %v2267 = vunpack.c.h.b16 %v1922
    %v2268 = vunpack.c.l.b16 %v1923
    %v2269 = vunpack.c.h.b16 %v1923
    %v2270 = vunpack.c.l.b16 %v1924
    %v2271 = vunpack.c.h.b16 %v1924
    %v2272 = vunpack.c.l.b16 %v1925
    %v2273 = vunpack.c.h.b16 %v1925
    %v2274 = vunpack.c.l.b16 %v1926
    %v2275 = vunpack.c.h.b16 %v1926
    %v2276 = vunpack.c.l.b16 %v1927
    %v2277 = vunpack.c.h.b16 %v1927
    %v2278 = vunpack.c.l.b16 %v1928
    %v2279 = vunpack.c.h.b16 %v1928
    %v2280 = vunpack.c.l.b16 %v1929
    %v2281 = vunpack.c.h.b16 %v1929
    %v2282 = vunpack.c.l.b16 %v1930
    %v2283 = vunpack.c.h.b16 %v1930
    %v2284 = vunpack.c.l.b16 %v1931
    %v2285 = vunpack.c.h.b16 %v1931
    %v2286 = vunpack.c.l.b16 %v1932
    %v2287 = vunpack.c.h.b16 %v1932
    %v2288 = vunpack.c.l.b16 %v1933
    %v2289 = vunpack.c.h.b16 %v1933
    %v2290 = vunpack.c.l.b16 %v1934
    %v2291 = vunpack.c.h.b16 %v1934
    %v2292 = vunpack.c.l.b16 %v1935
    %v2293 = vunpack.c.h.b16 %v1935
    %v2294 = vunpack.c.l.b16 %v1936
    %v2295 = vunpack.c.h.b16 %v1936
    %v2296 = vunpack.c.l.b16 %v1937
    %v2297 = vunpack.c.h.b16 %v1937
    %v2298 = vunpack.c.l.b16 %v1938
    %v2299 = vunpack.c.h.b16 %v1938
    %v2300 = vunpack.c.l.b16 %v1939
    %v2301 = vunpack.c.h.b16 %v1939
    %v2302 = vunpack.c.l.b16 %v1940
    %v2303 = vunpack.c.h.b16 %v1940
    %v2304 = vunpack.c.l.b16 %v1941
    %v2305 = vunpack.c.h.b16 %v1941
    %v2306 = vunpack.c.l.b16 %v1942
    %v2307 = vunpack.c.h.b16 %v1942
    %v2308 = vunpack.c.l.b16 %v1943
    %v2309 = vunpack.c.h.b16 %v1943
    %v2310 = vunpack.c.l.b16 %v1944
    %v2311 = vunpack.c.h.b16 %v1944
    %v2312 = vunpack.c.l.b16 %v1945
    %v2313 = vunpack.c.h.b16 %v1945
    %v2314 = vunpack.c.l.b16 %v1946
    %v2315 = vunpack.c.h.b16 %v1946
    %v2316 = vunpack.c.l.b16 %v1947
    %v2317 = vunpack.c.h.b16 %v1947
    %v2318 = vunpack.c.l.b16 %v1948
    %v2319 = vunpack.c.h.b16 %v1948
    %v2320 = vunpack.c.l.b16 %v1949
    %v2321 = vunpack.c.h.b16 %v1949
    %v2322 = vunpack.c.l.b16 %v1950
    %v2323 = vunpack.c.h.b16 %v1950
    %v2324 = vunpack.c.l.b16 %v1951
    %v2325 = vunpack.c.h.b16 %v1951
    %v2326 = vunpack.c.l.b16 %v1952
    %v2327 = vunpack.c.h.b16 %v1952
    %v2328 = vunpack.c.l.b16 %v1953
    %v2329 = vunpack.c.h.b16 %v1953
    %v2330 = vunpack.c.l.b16 %v1954
    %v2331 = vunpack.c.h.b16 %v1954
    %v2332 = vunpack.c.l.b16 %v1955
    %v2333 = vunpack.c.h.b16 %v1955
    %v2334 = vunpack.c.l.b16 %v1956
    %v2335 = vunpack.c.h.b16 %v1956
    %v2336 = vunpack.c.l.b16 %v1957
    %v2337 = vunpack.c.h.b16 %v1957
    %v2338 = vunpack.c.l.b16 %v1958
    %v2339 = vunpack.c.h.b16 %v1958
    %v2340 = vunpack.c.l.b16 %v1959
    %v2341 = vunpack.c.h.b16 %v1959
    %v2342 = vunpack.c.l.b16 %v1960
    %v2343 = vunpack.c.h.b16 %v1960
    %v2344 = vunpack.c.l.b16 %v1961
    %v2345 = vunpack.c.h.b16 %v1961
    %v2346 = vunpack.c.l.b16 %v1962
    %v2347 = vunpack.c.h.b16 %v1962
    %v2348 = vunpack.c.l.b16 %v1963
    %v2349 = vunpack.c.h.b16 %v1963
    %v2350 = vunpack.c.l.b16 %v1964
    %v2351 = vunpack.c.h.b16 %v1964
    %v2352 = vunpack.c.l.b16 %v1965
    %v2353 = vunpack.c.h.b16 %v1965
    %v2354 = vunpack.c.l.b16 %v1966
    %v2355 = vunpack.c.h.b16 %v1966
    %v2356 = vunpack.c.l.b16 %v1967
    %v2357 = vunpack.c.h.b16 %v1967
    %v2358 = vunpack.c.l.b16 %v1968
    %v2359 = vunpack.c.h.b16 %v1968
    %v2360 = vunpack.c.l.b16 %v1969
    %v2361 = vunpack.c.h.b16 %v1969
    %v2362 = vunpack.c.l.b16 %v1970
    %v2363 = vunpack.c.h.b16 %v1970
    %v2364 = vunpack.c.l.b16 %v1971
    %v2365 = vunpack.c.h.b16 %v1971
    %v2366 = vpack.c.b16 %v2114, %v2110
    %v2367 = vpack.c.b16 %v2115, %v2111
    %v2368 = vpack.c.b16 %v2116, %v2112
    %v2369 = vpack.c.b16 %v2117, %v2113
    %v2370 = vpack.c.b16 %v2122, %v2118
    %v2371 = vpack.c.b16 %v2123, %v2119
    %v2372 = vpack.c.b16 %v2124, %v2120
    %v2373 = vpack.c.b16 %v2125, %v2121
    %v2374 = vpack.c.b16 %v2130, %v2126
    %v2375 = vpack.c.b16 %v2131, %v2127
    %v2376 = vpack.c.b16 %v2132, %v2128
    %v2377 = vpack.c.b16 %v2133, %v2129
    %v2378 = vpack.c.b16 %v2138, %v2134
    %v2379 = vpack.c.b16 %v2139, %v2135
    %v2380 = vpack.c.b16 %v2140, %v2136
    %v2381 = vpack.c.b16 %v2141, %v2137
    %v2382 = vpack.c.b16 %v2146, %v2142
    %v2383 = vpack.c.b16 %v2147, %v2143
    %v2384 = vpack.c.b16 %v2148, %v2144
    %v2385 = vpack.c.b16 %v2149, %v2145
    %v2386 = vpack.c.b16 %v2154, %v2150
    %v2387 = vpack.c.b16 %v2155, %v2151
    %v2388 = vpack.c.b16 %v2156, %v2152
    %v2389 = vpack.c.b16 %v2157, %v2153
    %v2390 = vpack.c.b16 %v2162, %v2158
    %v2391 = vpack.c.b16 %v2163, %v2159
    %v2392 = vpack.c.b16 %v2164, %v2160
    %v2393 = vpack.c.b16 %v2165, %v2161
    %v2394 = vpack.c.b16 %v2170, %v2166
    %v2395 = vpack.c.b16 %v2171, %v2167
    %v2396 = vpack.c.b16 %v2172, %v2168
    %v2397 = vpack.c.b16 %v2173, %v2169
    %v2398 = vpack.c.b16 %v2178, %v2174
    %v2399 = vpack.c.b16 %v2179, %v2175
    %v2400 = vpack.c.b16 %v2180, %v2176
    %v2401 = vpack.c.b16 %v2181, %v2177
    %v2402 = vpack.c.b16 %v2186, %v2182
    %v2403 = vpack.c.b16 %v2187, %v2183
    %v2404 = vpack.c.b16 %v2188, %v2184
    %v2405 = vpack.c.b16 %v2189, %v2185
    %v2406 = vpack.c.b16 %v2194, %v2190
    %v2407 = vpack.c.b16 %v2195, %v2191
    %v2408 = vpack.c.b16 %v2196, %v2192
    %v2409 = vpack.c.b16 %v2197, %v2193
    %v2410 = vpack.c.b16 %v2202, %v2198
    %v2411 = vpack.c.b16 %v2203, %v2199
    %v2412 = vpack.c.b16 %v2204, %v2200
    %v2413 = vpack.c.b16 %v2205, %v2201
    %v2414 = vpack.c.b16 %v2210, %v2206
    %v2415 = vpack.c.b16 %v2211, %v2207
    %v2416 = vpack.c.b16 %v2212, %v2208
    %v2417 = vpack.c.b16 %v2213, %v2209
    %v2418 = vpack.c.b16 %v2218, %v2214
    %v2419 = vpack.c.b16 %v2219, %v2215
    %v2420 = vpack.c.b16 %v2220, %v2216
    %v2421 = vpack.c.b16 %v2221, %v2217
    %v2422 = vpack.c.b16 %v2226, %v2222
    %v2423 = vpack.c.b16 %v2227, %v2223
    %v2424 = vpack.c.b16 %v2228, %v2224
    %v2425 = vpack.c.b16 %v2229, %v2225
    %v2426 = vpack.c.b16 %v2234, %v2230
    %v2427 = vpack.c.b16 %v2235, %v2231
    %v2428 = vpack.c.b16 %v2236, %v2232
    %v2429 = vpack.c.b16 %v2237, %v2233
    %v2430 = vpack.c.b16 %v2242, %v2238
    %v2431 = vpack.c.b16 %v2243, %v2239
    %v2432 = vpack.c.b16 %v2244, %v2240
    %v2433 = vpack.c.b16 %v2245, %v2241
    %v2434 = vpack.c.b16 %v2250, %v2246
    %v2435 = vpack.c.b16 %v2251, %v2247
    %v2436 = vpack.c.b16 %v2252, %v2248
    %v2437 = vpack.c.b16 %v2253, %v2249
    %v2438 = vpack.c.b16 %v2258, %v2254
    %v2439 = vpack.c.b16 %v2259, %v2255
    %v2440 = vpack.c.b16 %v2260, %v2256
    %v2441 = vpack.c.b16 %v2261, %v2257
    %v2442 = vpack.c.b16 %v2266, %v2262
    %v2443 = vpack.c.b16 %v2267, %v2263
    %v2444 = vpack.c.b16 %v2268, %v2264
    %v2445 = vpack.c.b16 %v2269, %v2265
    %v2446 = vpack.c.b16 %v2274, %v2270
    %v2447 = vpack.c.b16 %v2275, %v2271
    %v2448 = vpack.c.b16 %v2276, %v2272
    %v2449 = vpack.c.b16 %v2277, %v2273
    %v2450 = vpack.c.b16 %v2282, %v2278
    %v2451 = vpack.c.b16 %v2283, %v2279
    %v2452 = vpack.c.b16 %v2284, %v2280
    %v2453 = vpack.c.b16 %v2285, %v2281
    %v2454 = vpack.c.b16 %v2290, %v2286
    %v2455 = vpack.c.b16 %v2291, %v2287
    %v2456 = vpack.c.b16 %v2292, %v2288
    %v2457 = vpack.c.b16 %v2293, %v2289
    %v2458 = vpack.c.b16 %v2298, %v2294
    %v2459 = vpack.c.b16 %v2299, %v2295
    %v2460 = vpack.c.b16 %v2300, %v2296
    %v2461 = vpack.c.b16 %v2301, %v2297
    %v2462 = vpack.c.b16 %v2306, %v2302
    %v2463 = vpack.c.b16 %v2307, %v2303
    %v2464 = vpack.c.b16 %v2308, %v2304
    %v2465 = vpack.c.b16 %v2309, %v2305
    %v2466 = vpack.c.b16 %v2314, %v2310
    %v2467 = vpack.c.b16 %v2315, %v2311
    %v2468 = vpack.c.b16 %v2316, %v2312
    %v2469 = vpack.c.b16 %v2317, %v2313
    %v2470 = vpack.c.b16 %v2322, %v2318
    %v2471 = vpack.c.b16 %v2323, %v2319
    %v2472 = vpack.c.b16 %v2324, %v2320
    %v2473 = vpack.c.b16 %v2325, %v2321
    %v2474 = vpack.c.b16 %v2330, %v2326
    %v2475 = vpack.c.b16 %v2331, %v2327
    %v2476 = vpack.c.b16 %v2332, %v2328
    %v2477 = vpack.c.b16 %v2333, %v2329
    %v2478 = vpack.c.b16 %v2338, %v2334
    %v2479 = vpack.c.b16 %v2339, %v2335
    %v2480 = vpack.c.b16 %v2340, %v2336
    %v2481 = vpack.c.b16 %v2341, %v2337
    %v2482 = vpack.c.b16 %v2346, %v2342
    %v2483 = vpack.c.b16 %v2347, %v2343
    %v2484 = vpack.c.b16 %v2348, %v2344
    %v2485 = vpack.c.b16 %v2349, %v2345
    %v2486 = vpack.c.b16 %v2354, %v2350
    %v2487 = vpack.c.b16 %v2355, %v2351
    %v2488 = vpack.c.b16 %v2356, %v2352
    %v2489 = vpack.c.b16 %v2357, %v2353
    %v2490 = vpack.c.b16 %v2362, %v2358
    %v2491 = vpack.c.b16 %v2363, %v2359
    %v2492 = vpack.c.b16 %v2364, %v2360
    %v2493 = vpack.c.b16 %v2365, %v2361
    %2622 = vmatpush.bf16.msra.mxu0 %v2394
    %2623 = vmatpush.bf16.msra.mxu0 %v2390
    %2624 = vmatpush.bf16.msra.mxu0 %v2386
    %2625 = vmatpush.bf16.msra.mxu0 %v2382
    %2626 = vmatpush.bf16.msra.mxu0 %v2378
    %2627 = vmatpush.bf16.msra.mxu0 %v2374
    %2628 = vmatpush.bf16.msra.mxu0 %v2370
    %2629 = vmatpush.bf16.msra.mxu0 %v2366
    %2630 = vmatmul.bf16.gmra.mxu0 %v1840
    %v2631 = vpop.f32.mrf.mxu0
    %v2632 = vadd.f32 %v1974, %v2631
    %v2633 = vpop.f32.mrf.mxu0
    %v2634 = vadd.f32 %v1974, %v2633
    %2635 = vdwg.mxu0
    %2636 = vmatpush.bf16.msra.mxu0 %v2426
    %2637 = vmatpush.bf16.msra.mxu0 %v2422
    %2638 = vmatpush.bf16.msra.mxu0 %v2418
    %2639 = vmatpush.bf16.msra.mxu0 %v2414
    %2640 = vmatpush.bf16.msra.mxu0 %v2410
    %2641 = vmatpush.bf16.msra.mxu0 %v2406
    %2642 = vmatpush.bf16.msra.mxu0 %v2402
    %2643 = vmatpush.bf16.msra.mxu0 %v2398
    %2644 = vmatmul.bf16.gmra.mxu0 %v1841
    %v2645 = vpop.f32.mrf.mxu0
    %v2646 = vadd.f32 %v2632, %v2645
    %v2647 = vpop.f32.mrf.mxu0
    %v2648 = vadd.f32 %v2634, %v2647
    %2649 = vdwg.mxu0
    %2650 = vmatpush.bf16.msra.mxu0 %v2458
    %2651 = vmatpush.bf16.msra.mxu0 %v2454
    %2652 = vmatpush.bf16.msra.mxu0 %v2450
    %2653 = vmatpush.bf16.msra.mxu0 %v2446
    %2654 = vmatpush.bf16.msra.mxu0 %v2442
    %2655 = vmatpush.bf16.msra.mxu0 %v2438
    %2656 = vmatpush.bf16.msra.mxu0 %v2434
    %2657 = vmatpush.bf16.msra.mxu0 %v2430
    %2658 = vmatmul.bf16.gmra.mxu0 %v1842
    %v2659 = vpop.f32.mrf.mxu0
    %v2660 = vadd.f32 %v2646, %v2659
    %v2661 = vpop.f32.mrf.mxu0
    %v2662 = vadd.f32 %v2648, %v2661
    %2663 = vdwg.mxu0
    %2664 = vmatpush.bf16.msra.mxu0 %v2490
    %2665 = vmatpush.bf16.msra.mxu0 %v2486
    %2666 = vmatpush.bf16.msra.mxu0 %v2482
    %2667 = vmatpush.bf16.msra.mxu0 %v2478
    %2668 = vmatpush.bf16.msra.mxu0 %v2474
    %2669 = vmatpush.bf16.msra.mxu0 %v2470
    %2670 = vmatpush.bf16.msra.mxu0 %v2466
    %2671 = vmatpush.bf16.msra.mxu0 %v2462
    %2672 = vmatmul.bf16.gmra.mxu0 %v1843
    %v2673 = vpop.f32.mrf.mxu0
    %v2674 = vadd.f32 %v2660, %v2673
    %v2675 = vpop.f32.mrf.mxu0
    %v2676 = vadd.f32 %v2662, %v2675
    %2677 = vdwg.mxu0
    %2678 = vmatpush.bf16.msra.mxu0 %v2395
    %2679 = vmatpush.bf16.msra.mxu0 %v2391
    %2680 = vmatpush.bf16.msra.mxu0 %v2387
    %2681 = vmatpush.bf16.msra.mxu0 %v2383
    %2682 = vmatpush.bf16.msra.mxu0 %v2379
    %2683 = vmatpush.bf16.msra.mxu0 %v2375
    %2684 = vmatpush.bf16.msra.mxu0 %v2371
    %2685 = vmatpush.bf16.msra.mxu0 %v2367
    %2686 = vmatmul.bf16.gmra.mxu0 %v1840
    %v2687 = vpop.f32.mrf.mxu0
    %v2688 = vadd.f32 %v1975, %v2687
    %v2689 = vpop.f32.mrf.mxu0
    %v2690 = vadd.f32 %v1975, %v2689
    %2691 = vdwg.mxu0
    %2692 = vmatpush.bf16.msra.mxu0 %v2427
    %2693 = vmatpush.bf16.msra.mxu0 %v2423
    %2694 = vmatpush.bf16.msra.mxu0 %v2419
    %2695 = vmatpush.bf16.msra.mxu0 %v2415
    %2696 = vmatpush.bf16.msra.mxu0 %v2411
    %2697 = vmatpush.bf16.msra.mxu0 %v2407
    %2698 = vmatpush.bf16.msra.mxu0 %v2403
    %2699 = vmatpush.bf16.msra.mxu0 %v2399
    %2700 = vmatmul.bf16.gmra.mxu0 %v1841
    %v2701 = vpop.f32.mrf.mxu0
    %v2702 = vadd.f32 %v2688, %v2701
    %v2703 = vpop.f32.mrf.mxu0
    %v2704 = vadd.f32 %v2690, %v2703
    %2705 = vdwg.mxu0
    %2706 = vmatpush.bf16.msra.mxu0 %v2459
    %2707 = vmatpush.bf16.msra.mxu0 %v2455
    %2708 = vmatpush.bf16.msra.mxu0 %v2451
    %2709 = vmatpush.bf16.msra.mxu0 %v2447
    %2710 = vmatpush.bf16.msra.mxu0 %v2443
    %2711 = vmatpush.bf16.msra.mxu0 %v2439
    %2712 = vmatpush.bf16.msra.mxu0 %v2435
    %2713 = vmatpush.bf16.msra.mxu0 %v2431
    %2714 = vmatmul.bf16.gmra.mxu0 %v1842
    %v2715 = vpop.f32.mrf.mxu0
    %v2716 = vadd.f32 %v2702, %v2715
    %v2717 = vpop.f32.mrf.mxu0
    %v2718 = vadd.f32 %v2704, %v2717
    %2719 = vdwg.mxu0
    %2720 = vmatpush.bf16.msra.mxu0 %v2491
    %2721 = vmatpush.bf16.msra.mxu0 %v2487
    %2722 = vmatpush.bf16.msra.mxu0 %v2483
    %2723 = vmatpush.bf16.msra.mxu0 %v2479
    %2724 = vmatpush.bf16.msra.mxu0 %v2475
    %2725 = vmatpush.bf16.msra.mxu0 %v2471
    %2726 = vmatpush.bf16.msra.mxu0 %v2467
    %2727 = vmatpush.bf16.msra.mxu0 %v2463
    %2728 = vmatmul.bf16.gmra.mxu0 %v1843
    %v2729 = vpop.f32.mrf.mxu0
    %v2730 = vadd.f32 %v2716, %v2729
    %v2731 = vpop.f32.mrf.mxu0
    %v2732 = vadd.f32 %v2718, %v2731
    %2733 = vdwg.mxu0
    %2734 = vmatpush.bf16.msra.mxu0 %v2396
    %2735 = vmatpush.bf16.msra.mxu0 %v2392
    %2736 = vmatpush.bf16.msra.mxu0 %v2388
    %2737 = vmatpush.bf16.msra.mxu0 %v2384
    %2738 = vmatpush.bf16.msra.mxu0 %v2380
    %2739 = vmatpush.bf16.msra.mxu0 %v2376
    %2740 = vmatpush.bf16.msra.mxu0 %v2372
    %2741 = vmatpush.bf16.msra.mxu0 %v2368
    %2742 = vmatmul.bf16.gmra.mxu0 %v1840
    %v2743 = vpop.f32.mrf.mxu0
    %v2744 = vadd.f32 %v1976, %v2743
    %v2745 = vpop.f32.mrf.mxu0
    %v2746 = vadd.f32 %v1976, %v2745
    %2747 = vdwg.mxu0
    %2748 = vmatpush.bf16.msra.mxu0 %v2428
    %2749 = vmatpush.bf16.msra.mxu0 %v2424
    %2750 = vmatpush.bf16.msra.mxu0 %v2420
    %2751 = vmatpush.bf16.msra.mxu0 %v2416
    %2752 = vmatpush.bf16.msra.mxu0 %v2412
    %2753 = vmatpush.bf16.msra.mxu0 %v2408
    %2754 = vmatpush.bf16.msra.mxu0 %v2404
    %2755 = vmatpush.bf16.msra.mxu0 %v2400
    %2756 = vmatmul.bf16.gmra.mxu0 %v1841
    %v2757 = vpop.f32.mrf.mxu0
    %v2758 = vadd.f32 %v2744, %v2757
    %v2759 = vpop.f32.mrf.mxu0
    %v2760 = vadd.f32 %v2746, %v2759
    %2761 = vdwg.mxu0
    %2762 = vmatpush.bf16.msra.mxu0 %v2460
    %2763 = vmatpush.bf16.msra.mxu0 %v2456
    %2764 = vmatpush.bf16.msra.mxu0 %v2452
    %2765 = vmatpush.bf16.msra.mxu0 %v2448
    %2766 = vmatpush.bf16.msra.mxu0 %v2444
    %2767 = vmatpush.bf16.msra.mxu0 %v2440
    %2768 = vmatpush.bf16.msra.mxu0 %v2436
    %2769 = vmatpush.bf16.msra.mxu0 %v2432
    %2770 = vmatmul.bf16.gmra.mxu0 %v1842
    %v2771 = vpop.f32.mrf.mxu0
    %v2772 = vadd.f32 %v2758, %v2771
    %v2773 = vpop.f32.mrf.mxu0
    %v2774 = vadd.f32 %v2760, %v2773
    %2775 = vdwg.mxu0
    %2776 = vmatpush.bf16.msra.mxu0 %v2492
    %2777 = vmatpush.bf16.msra.mxu0 %v2488
    %2778 = vmatpush.bf16.msra.mxu0 %v2484
    %2779 = vmatpush.bf16.msra.mxu0 %v2480
    %2780 = vmatpush.bf16.msra.mxu0 %v2476
    %2781 = vmatpush.bf16.msra.mxu0 %v2472
    %2782 = vmatpush.bf16.msra.mxu0 %v2468
    %2783 = vmatpush.bf16.msra.mxu0 %v2464
    %2784 = vmatmul.bf16.gmra.mxu0 %v1843
    %v2785 = vpop.f32.mrf.mxu0
    %v2786 = vadd.f32 %v2772, %v2785
    %v2787 = vpop.f32.mrf.mxu0
    %v2788 = vadd.f32 %v2774, %v2787
    %2789 = vdwg.mxu0
    %2790 = vmatpush.bf16.msra.mxu0 %v2397
    %2791 = vmatpush.bf16.msra.mxu0 %v2393
    %2792 = vmatpush.bf16.msra.mxu0 %v2389
    %2793 = vmatpush.bf16.msra.mxu0 %v2385
    %2794 = vmatpush.bf16.msra.mxu0 %v2381
    %2795 = vmatpush.bf16.msra.mxu0 %v2377
    %2796 = vmatpush.bf16.msra.mxu0 %v2373
    %2797 = vmatpush.bf16.msra.mxu0 %v2369
    %2798 = vmatmul.bf16.gmra.mxu0 %v1840
    %v2799 = vpop.f32.mrf.mxu0
    %v2800 = vadd.f32 %v1977, %v2799
    %v2801 = vpop.f32.mrf.mxu0
    %v2802 = vadd.f32 %v1977, %v2801
    %2803 = vdwg.mxu0
    %2804 = vmatpush.bf16.msra.mxu0 %v2429
    %2805 = vmatpush.bf16.msra.mxu0 %v2425
    %2806 = vmatpush.bf16.msra.mxu0 %v2421
    %2807 = vmatpush.bf16.msra.mxu0 %v2417
    %2808 = vmatpush.bf16.msra.mxu0 %v2413
    %2809 = vmatpush.bf16.msra.mxu0 %v2409
    %2810 = vmatpush.bf16.msra.mxu0 %v2405
    %2811 = vmatpush.bf16.msra.mxu0 %v2401
    %2812 = vmatmul.bf16.gmra.mxu0 %v1841
    %v2813 = vpop.f32.mrf.mxu0
    %v2814 = vadd.f32 %v2800, %v2813
    %v2815 = vpop.f32.mrf.mxu0
    %v2816 = vadd.f32 %v2802, %v2815
    %2817 = vdwg.mxu0
    %2818 = vmatpush.bf16.msra.mxu0 %v2461
    %2819 = vmatpush.bf16.msra.mxu0 %v2457
    %2820 = vmatpush.bf16.msra.mxu0 %v2453
    %2821 = vmatpush.bf16.msra.mxu0 %v2449
    %2822 = vmatpush.bf16.msra.mxu0 %v2445
    %2823 = vmatpush.bf16.msra.mxu0 %v2441
    %2824 = vmatpush.bf16.msra.mxu0 %v2437
    %2825 = vmatpush.bf16.msra.mxu0 %v2433
    %2826 = vmatmul.bf16.gmra.mxu0 %v1842
    %v2827 = vpop.f32.mrf.mxu0
    %v2828 = vadd.f32 %v2814, %v2827
    %v2829 = vpop.f32.mrf.mxu0
    %v2830 = vadd.f32 %v2816, %v2829
    %2831 = vdwg.mxu0
    %2832 = vmatpush.bf16.msra.mxu0 %v2493
    %2833 = vmatpush.bf16.msra.mxu0 %v2489
    %2834 = vmatpush.bf16.msra.mxu0 %v2485
    %2835 = vmatpush.bf16.msra.mxu0 %v2481
    %2836 = vmatpush.bf16.msra.mxu0 %v2477
    %2837 = vmatpush.bf16.msra.mxu0 %v2473
    %2838 = vmatpush.bf16.msra.mxu0 %v2469
    %2839 = vmatpush.bf16.msra.mxu0 %v2465
    %2840 = vmatmul.bf16.gmra.mxu0 %v1843
    %v2841 = vpop.f32.mrf.mxu0
    %v2842 = vadd.f32 %v2828, %v2841
    %v2843 = vpop.f32.mrf.mxu0
    %v2844 = vadd.f32 %v2830, %v2843
    %2845 = vdwg.mxu0
    %v2846 = vmax.f32 %v2674, 0.0
    %v2847 = vmax.f32 %v2730, 0.0
    %v2848 = vmax.f32 %v2786, 0.0
    %v2849 = vmax.f32 %v2842, 0.0
    %v2850 = vmax.f32 %v2676, 0.0
    %v2851 = vmax.f32 %v2732, 0.0
    %v2852 = vmax.f32 %v2788, 0.0
    %v2853 = vmax.f32 %v2844, 0.0
    %v2854 = vpack.c.bf16 %v2850, %v2846
    %v2855 = vpack.c.bf16 %v2851, %v2847
    %v2856 = vpack.c.bf16 %v2852, %v2848
    %v2857 = vpack.c.bf16 %v2853, %v2849
    %v2858 = vld [vmem:[%s5] sm:$0xf]
    %v2859 = vld [vmem:[%s5 + $0x4] sm:$0xf]
    %v2860 = vld [vmem:[%s5 + $0x8] sm:$0xf]
    %v2861 = vld [vmem:[%s5 + $0xc] sm:$0xf]
    %v2862 = vld [vmem:[%s5 + $0x10] sm:$0xf]
    %v2863 = vld [vmem:[%s5 + $0x14] sm:$0xf]
    %v2864 = vld [vmem:[%s5 + $0x18] sm:$0xf]
    %v2865 = vld [vmem:[%s5 + $0x1c] sm:$0xf]
    %v2866 = vld [vmem:[%s5 + $0x20] sm:$0xf]
    %v2867 = vld [vmem:[%s5 + $0x24] sm:$0xf]
    %v2868 = vld [vmem:[%s5 + $0x28] sm:$0xf]
    %v2869 = vld [vmem:[%s5 + $0x2c] sm:$0xf]
    %v2870 = vld [vmem:[%s5 + $0x30] sm:$0xf]
    %v2871 = vld [vmem:[%s5 + $0x34] sm:$0xf]
    %v2872 = vld [vmem:[%s5 + $0x38] sm:$0xf]
    %v2873 = vld [vmem:[%s5 + $0x3c] sm:$0xf]
    %v2874 = vld [vmem:[%s5 + $0x40] sm:$0xf]
    %v2875 = vld [vmem:[%s5 + $0x44] sm:$0xf]
    %v2876 = vld [vmem:[%s5 + $0x48] sm:$0xf]
    %v2877 = vld [vmem:[%s5 + $0x4c] sm:$0xf]
    %v2878 = vld [vmem:[%s5 + $0x50] sm:$0xf]
    %v2879 = vld [vmem:[%s5 + $0x54] sm:$0xf]
    %v2880 = vld [vmem:[%s5 + $0x58] sm:$0xf]
    %v2881 = vld [vmem:[%s5 + $0x5c] sm:$0xf]
    %v2882 = vld [vmem:[%s5 + $0x60] sm:$0xf]
    %v2883 = vld [vmem:[%s5 + $0x64] sm:$0xf]
    %v2884 = vld [vmem:[%s5 + $0x68] sm:$0xf]
    %v2885 = vld [vmem:[%s5 + $0x6c] sm:$0xf]
    %v2886 = vld [vmem:[%s5 + $0x70] sm:$0xf]
    %v2887 = vld [vmem:[%s5 + $0x74] sm:$0xf]
    %v2888 = vld [vmem:[%s5 + $0x78] sm:$0xf]
    %v2889 = vld [vmem:[%s5 + $0x7c] sm:$0xf]
    %v2890 = vld [vmem:[%s5 + $0x80] sm:$0xf]
    %v2891 = vld [vmem:[%s5 + $0x84] sm:$0xf]
    %v2892 = vld [vmem:[%s5 + $0x88] sm:$0xf]
    %v2893 = vld [vmem:[%s5 + $0x8c] sm:$0xf]
    %v2894 = vld [vmem:[%s5 + $0x90] sm:$0xf]
    %v2895 = vld [vmem:[%s5 + $0x94] sm:$0xf]
    %v2896 = vld [vmem:[%s5 + $0x98] sm:$0xf]
    %v2897 = vld [vmem:[%s5 + $0x9c] sm:$0xf]
    %v2898 = vld [vmem:[%s5 + $0xa0] sm:$0xf]
    %v2899 = vld [vmem:[%s5 + $0xa4] sm:$0xf]
    %v2900 = vld [vmem:[%s5 + $0xa8] sm:$0xf]
    %v2901 = vld [vmem:[%s5 + $0xac] sm:$0xf]
    %v2902 = vld [vmem:[%s5 + $0xb0] sm:$0xf]
    %v2903 = vld [vmem:[%s5 + $0xb4] sm:$0xf]
    %v2904 = vld [vmem:[%s5 + $0xb8] sm:$0xf]
    %v2905 = vld [vmem:[%s5 + $0xbc] sm:$0xf]
    %v2906 = vld [vmem:[%s5 + $0xc0] sm:$0xf]
    %v2907 = vld [vmem:[%s5 + $0xc4] sm:$0xf]
    %v2908 = vld [vmem:[%s5 + $0xc8] sm:$0xf]
    %v2909 = vld [vmem:[%s5 + $0xcc] sm:$0xf]
    %v2910 = vld [vmem:[%s5 + $0xd0] sm:$0xf]
    %v2911 = vld [vmem:[%s5 + $0xd4] sm:$0xf]
    %v2912 = vld [vmem:[%s5 + $0xd8] sm:$0xf]
    %v2913 = vld [vmem:[%s5 + $0xdc] sm:$0xf]
    %v2914 = vld [vmem:[%s5 + $0xe0] sm:$0xf]
    %v2915 = vld [vmem:[%s5 + $0xe4] sm:$0xf]
    %v2916 = vld [vmem:[%s5 + $0xe8] sm:$0xf]
    %v2917 = vld [vmem:[%s5 + $0xec] sm:$0xf]
    %v2918 = vld [vmem:[%s5 + $0xf0] sm:$0xf]
    %v2919 = vld [vmem:[%s5 + $0xf4] sm:$0xf]
    %v2920 = vld [vmem:[%s5 + $0xf8] sm:$0xf]
    %v2921 = vld [vmem:[%s5 + $0xfc] sm:$0xf]
    %v2922 = vld [vmem:[%s6] sm:$0x1]
    %v2924 = vperm.slane %v2922, 0
    %v2990 = vunpack.c.l.b16 %v2858
    %v2991 = vunpack.c.l.b16 %v2859
    %v2992 = vunpack.c.l.b16 %v2860
    %v2993 = vunpack.c.l.b16 %v2861
    %v2994 = vunpack.c.l.b16 %v2862
    %v2995 = vunpack.c.l.b16 %v2863
    %v2996 = vunpack.c.l.b16 %v2864
    %v2997 = vunpack.c.l.b16 %v2865
    %v2998 = vunpack.c.l.b16 %v2866
    %v2999 = vunpack.c.l.b16 %v2867
    %v3000 = vunpack.c.l.b16 %v2868
    %v3001 = vunpack.c.l.b16 %v2869
    %v3002 = vunpack.c.l.b16 %v2870
    %v3003 = vunpack.c.l.b16 %v2871
    %v3004 = vunpack.c.l.b16 %v2872
    %v3005 = vunpack.c.l.b16 %v2873
    %v3006 = vunpack.c.l.b16 %v2874
    %v3007 = vunpack.c.l.b16 %v2875
    %v3008 = vunpack.c.l.b16 %v2876
    %v3009 = vunpack.c.l.b16 %v2877
    %v3010 = vunpack.c.l.b16 %v2878
    %v3011 = vunpack.c.l.b16 %v2879
    %v3012 = vunpack.c.l.b16 %v2880
    %v3013 = vunpack.c.l.b16 %v2881
    %v3014 = vunpack.c.l.b16 %v2882
    %v3015 = vunpack.c.l.b16 %v2883
    %v3016 = vunpack.c.l.b16 %v2884
    %v3017 = vunpack.c.l.b16 %v2885
    %v3018 = vunpack.c.l.b16 %v2886
    %v3019 = vunpack.c.l.b16 %v2887
    %v3020 = vunpack.c.l.b16 %v2888
    %v3021 = vunpack.c.l.b16 %v2889
    %v3022 = vunpack.c.l.b16 %v2890
    %v3023 = vunpack.c.l.b16 %v2891
    %v3024 = vunpack.c.l.b16 %v2892
    %v3025 = vunpack.c.l.b16 %v2893
    %v3026 = vunpack.c.l.b16 %v2894
    %v3027 = vunpack.c.l.b16 %v2895
    %v3028 = vunpack.c.l.b16 %v2896
    %v3029 = vunpack.c.l.b16 %v2897
    %v3030 = vunpack.c.l.b16 %v2898
    %v3031 = vunpack.c.l.b16 %v2899
    %v3032 = vunpack.c.l.b16 %v2900
    %v3033 = vunpack.c.l.b16 %v2901
    %v3034 = vunpack.c.l.b16 %v2902
    %v3035 = vunpack.c.l.b16 %v2903
    %v3036 = vunpack.c.l.b16 %v2904
    %v3037 = vunpack.c.l.b16 %v2905
    %v3038 = vunpack.c.l.b16 %v2906
    %v3039 = vunpack.c.l.b16 %v2907
    %v3040 = vunpack.c.l.b16 %v2908
    %v3041 = vunpack.c.l.b16 %v2909
    %v3042 = vunpack.c.l.b16 %v2910
    %v3043 = vunpack.c.l.b16 %v2911
    %v3044 = vunpack.c.l.b16 %v2912
    %v3045 = vunpack.c.l.b16 %v2913
    %v3046 = vunpack.c.l.b16 %v2914
    %v3047 = vunpack.c.l.b16 %v2915
    %v3048 = vunpack.c.l.b16 %v2916
    %v3049 = vunpack.c.l.b16 %v2917
    %v3050 = vunpack.c.l.b16 %v2918
    %v3051 = vunpack.c.l.b16 %v2919
    %v3052 = vunpack.c.l.b16 %v2920
    %v3053 = vunpack.c.l.b16 %v2921
    %v3054 = vpack.c.b16 %v2991, %v2990
    %v3055 = vpack.c.b16 %v2993, %v2992
    %v3056 = vpack.c.b16 %v2995, %v2994
    %v3057 = vpack.c.b16 %v2997, %v2996
    %v3058 = vpack.c.b16 %v2999, %v2998
    %v3059 = vpack.c.b16 %v3001, %v3000
    %v3060 = vpack.c.b16 %v3003, %v3002
    %v3061 = vpack.c.b16 %v3005, %v3004
    %v3062 = vpack.c.b16 %v3007, %v3006
    %v3063 = vpack.c.b16 %v3009, %v3008
    %v3064 = vpack.c.b16 %v3011, %v3010
    %v3065 = vpack.c.b16 %v3013, %v3012
    %v3066 = vpack.c.b16 %v3015, %v3014
    %v3067 = vpack.c.b16 %v3017, %v3016
    %v3068 = vpack.c.b16 %v3019, %v3018
    %v3069 = vpack.c.b16 %v3021, %v3020
    %v3070 = vpack.c.b16 %v3023, %v3022
    %v3071 = vpack.c.b16 %v3025, %v3024
    %v3072 = vpack.c.b16 %v3027, %v3026
    %v3073 = vpack.c.b16 %v3029, %v3028
    %v3074 = vpack.c.b16 %v3031, %v3030
    %v3075 = vpack.c.b16 %v3033, %v3032
    %v3076 = vpack.c.b16 %v3035, %v3034
    %v3077 = vpack.c.b16 %v3037, %v3036
    %v3078 = vpack.c.b16 %v3039, %v3038
    %v3079 = vpack.c.b16 %v3041, %v3040
    %v3080 = vpack.c.b16 %v3043, %v3042
    %v3081 = vpack.c.b16 %v3045, %v3044
    %v3082 = vpack.c.b16 %v3047, %v3046
    %v3083 = vpack.c.b16 %v3049, %v3048
    %v3084 = vpack.c.b16 %v3051, %v3050
    %v3085 = vpack.c.b16 %v3053, %v3052
    %3118 = vmatpush.bf16.msra.mxu0 %v3061
    %3119 = vmatpush.bf16.msra.mxu0 %v3060
    %3120 = vmatpush.bf16.msra.mxu0 %v3059
    %3121 = vmatpush.bf16.msra.mxu0 %v3058
    %3122 = vmatpush.bf16.msra.mxu0 %v3057
    %3123 = vmatpush.bf16.msra.mxu0 %v3056
    %3124 = vmatpush.bf16.msra.mxu0 %v3055
    %3125 = vmatpush.bf16.msra.mxu0 %v3054
    %3126 = vmatmul.bf16.gmra.mxu0 %v2854
    %v3127 = vpop.f32.mrf.mxu0
    %v3128 = vadd.f32 %v2924, %v3127
    %v3129 = vpop.f32.mrf.mxu0
    %v3130 = vadd.f32 %v2924, %v3129
    %3131 = vdwg.mxu0
    %3132 = vmatpush.bf16.msra.mxu0 %v3069
    %3133 = vmatpush.bf16.msra.mxu0 %v3068
    %3134 = vmatpush.bf16.msra.mxu0 %v3067
    %3135 = vmatpush.bf16.msra.mxu0 %v3066
    %3136 = vmatpush.bf16.msra.mxu0 %v3065
    %3137 = vmatpush.bf16.msra.mxu0 %v3064
    %3138 = vmatpush.bf16.msra.mxu0 %v3063
    %3139 = vmatpush.bf16.msra.mxu0 %v3062
    %3140 = vmatmul.bf16.gmra.mxu0 %v2855
    %v3141 = vpop.f32.mrf.mxu0
    %v3142 = vadd.f32 %v3128, %v3141
    %v3143 = vpop.f32.mrf.mxu0
    %v3144 = vadd.f32 %v3130, %v3143
    %3145 = vdwg.mxu0
    %3146 = vmatpush.bf16.msra.mxu0 %v3077
    %3147 = vmatpush.bf16.msra.mxu0 %v3076
    %3148 = vmatpush.bf16.msra.mxu0 %v3075
    %3149 = vmatpush.bf16.msra.mxu0 %v3074
    %3150 = vmatpush.bf16.msra.mxu0 %v3073
    %3151 = vmatpush.bf16.msra.mxu0 %v3072
    %3152 = vmatpush.bf16.msra.mxu0 %v3071
    %3153 = vmatpush.bf16.msra.mxu0 %v3070
    %3154 = vmatmul.bf16.gmra.mxu0 %v2856
    %v3155 = vpop.f32.mrf.mxu0
    %v3156 = vadd.f32 %v3142, %v3155
    %v3157 = vpop.f32.mrf.mxu0
    %v3158 = vadd.f32 %v3144, %v3157
    %3159 = vdwg.mxu0
    %3160 = vmatpush.bf16.msra.mxu0 %v3085
    %3161 = vmatpush.bf16.msra.mxu0 %v3084
    %3162 = vmatpush.bf16.msra.mxu0 %v3083
    %3163 = vmatpush.bf16.msra.mxu0 %v3082
    %3164 = vmatpush.bf16.msra.mxu0 %v3081
    %3165 = vmatpush.bf16.msra.mxu0 %v3080
    %3166 = vmatpush.bf16.msra.mxu0 %v3079
    %3167 = vmatpush.bf16.msra.mxu0 %v3078
    %3168 = vmatmul.bf16.gmra.mxu0 %v2857
    %v3169 = vpop.f32.mrf.mxu0
    %v3170 = vadd.f32 %v3156, %v3169
    %v3171 = vpop.f32.mrf.mxu0
    %v3172 = vadd.f32 %v3158, %v3171
    %3173 = vdwg.mxu0
    %3174 = vst [vmem:[%s7] sm:$0xff] %v3170
    %3175 = vst [vmem:[%s7 + $0x8] sm:$0xff] %v3172
    // Predicated region
    $region34: #{_lambda_.1} parent=1 // pred_check
      _
    $region35: #{_lambda_.1} parent=1 // pred_check_branch
      %3177 = sbr.rel (0) target = $region37
    $region36: #{_lambda_.1} parent=1 // pred_region
      _
    $region37: #{_lambda_.1} parent=1 // pred_fallthru
      _
    // Predicated region
    $region38: #{_lambda_.1} parent=1 // pred_check
      _
    $region39: #{_lambda_.1} parent=1 // pred_check_branch
      %3179 = sbr.rel (0) target = $region41
    $region40: #{_lambda_.1} parent=1 // pred_region
      _
    $region41: #{_lambda_.1} parent=1 // pred_fallthru
      _
    %3180 = vsyncpa [#allocation3], 1

</llo_original>
